<compile_context>
chip_gen: v7x
topology: tpu7x:2x2x1
jax: 0.10.0
libtpu: 0.0.40
codegen_flags: <defaults>
</compile_context>

<pallas_src>
import functools

import jax
import jax.numpy as jnp
from jax import lax
from jax.experimental import pallas as pl
from jax.experimental.pallas import tpu as pltpu


def _cdiv(a, b):
    return -(-a // b)


def _default_vmem_limit_bytes():
    """~75% of physical VMEM (leaves pipeline headroom), capped at 100 MiB."""
    try:
        cap = int(pltpu.get_tpu_info().vmem_capacity_bytes)
    except Exception:
        cap = 128 << 20
    return min((cap * 3) // 4, 100 << 20)


def input_proj_kernel(x_ref, wih_ref, b_ref, xw_ref, *, matmul_dtype):
    """xw = x @ W_ih^T + (b_ih + b_hh): one (rows, I) @ (I, H) MXU pass."""
    x = x_ref[...].astype(matmul_dtype)
    xw = jnp.dot(x, wih_ref[...], preferred_element_type=jnp.float32)
    xw_ref[...] = (xw + b_ref[...]).astype(xw_ref.dtype)


def irnn_recurrence_kernel(h0_ref, xw_ref, whh_ref, out_ref, h_scratch,
                           *, t_chunk, matmul_dtype, unroll):
    """One grid step == t_chunk RNN time steps; hidden state lives in VMEM."""
    @pl.when(pl.program_id(0) == 0)
    def _():
        h_scratch[...] = h0_ref[...].astype(jnp.float32)

    def step(t, h):
        # NOTE: on the bf16 path h is re-cast to bf16 every step; rounding
        # drift compounds over very long S -- use matmul_dtype=f32 if that
        # matters for the workload.
        hidden_part = jnp.dot(h.astype(matmul_dtype), whh_ref[...],
                              preferred_element_type=jnp.float32)
        h_new = jnp.maximum(hidden_part + xw_ref[t].astype(jnp.float32), 0.0)
        out_ref[t] = h_new.astype(out_ref.dtype)
        return h_new

    h_scratch[...] = lax.fori_loop(0, t_chunk, step, h_scratch[...],
                                   unroll=unroll)


@functools.partial(
    jax.jit,
    static_argnames=("t_chunk", "s1_rows_target", "matmul_dtype",
                     "single_buffer_consts", "vmem_limit_bytes"))
def irnn_forward(inputs, hidden, w_ih, b_ih, w_hh, b_hh, *,
                 t_chunk=32, s1_rows_target=512,
                 matmul_dtype=jnp.bfloat16,
                 single_buffer_consts=True,
                 vmem_limit_bytes=None):
    """inputs: (S, B, I); hidden: (1, B, H); w_ih: (H, I); w_hh: (H, H)."""
    S, B, I = inputs.shape
    H = w_ih.shape[0]
    out_dtype = inputs.dtype

    if vmem_limit_bytes is None:
        vmem_limit_bytes = _default_vmem_limit_bytes()

    # xw intermediate stored in the MXU operand dtype: halves the HBM traffic
    # the sequential stage re-reads on the bf16 path, full precision on f32.
    xw_dtype = matmul_dtype

    # ---- chunking -----------------------------------------------------------
    t_chunk = max(1, min(int(t_chunk), S))
    S_rec = _cdiv(S, t_chunk) * t_chunk            # recurrence padding

    # Stage-1 tile decoupled from t_chunk: target >= s1_rows_target rows/tile,
    # kept a multiple of t_chunk so both stages share one padded length.
    s1_chunk = _cdiv(_cdiv(s1_rows_target, B), t_chunk) * t_chunk
    s1_chunk = max(t_chunk, min(s1_chunk, S_rec))
    S_pad = _cdiv(S_rec, s1_chunk) * s1_chunk      # multiple of both chunks
    n1 = S_pad // s1_chunk
    n2 = S_pad // t_chunk

    # vreg-pressure-aware unroll of the serial inner loop.
    if H >= 2048:
        unroll = 2
    elif H >= 1024:
        unroll = 4
    else:
        unroll = True                               # fully unroll small-H chunks

    def const_spec(shape, index_map):
        # Constant-index operands: single-buffer (double-buffering a block whose
        # index never changes only doubles resident VMEM).
        if single_buffer_consts:
            return pl.BlockSpec(shape, index_map, pipeline_mode=pl.Buffered(1))
        return pl.BlockSpec(shape, index_map)

    # ---- operand prep -------------------------------------------------------
    h0 = hidden[0]                                           # (B, H)
    wih_t = w_ih.T.astype(matmul_dtype)                      # (I, H)
    whh_t = w_hh.T.astype(matmul_dtype)                      # (H, H)
    bias = (b_ih.astype(jnp.float32)
            + b_hh.astype(jnp.float32)).reshape(1, H)        # fused bias, f32

    x = inputs
    if S_pad != S:
        # Padded timesteps compute garbage h after step S-1; they never feed
        # back into outputs[:S] and the final hidden is taken from outputs[S-1].
        x = jnp.pad(x, ((0, S_pad - S), (0, 0), (0, 0)))
    x2 = x.reshape(S_pad * B, I)

    # ---- Stage 1: time-parallel input projection ----------------------------
    rows1 = s1_chunk * B
    xw2 = pl.pallas_call(
        functools.partial(input_proj_kernel, matmul_dtype=matmul_dtype),
        out_shape=jax.ShapeDtypeStruct((S_pad * B, H), xw_dtype),
        grid_spec=pltpu.PrefetchScalarGridSpec(
            num_scalar_prefetch=0,
            grid=(n1,),
            in_specs=[
                pl.BlockSpec((rows1, I), lambda c: (c, 0)),   # x row-tile
                const_spec((I, H), lambda c: (0, 0)),         # W_ih^T (resident)
                const_spec((1, H), lambda c: (0, 0)),         # fused bias
            ],
            out_specs=pl.BlockSpec((rows1, H), lambda c: (c, 0)),
        ),
        compiler_params=pltpu.CompilerParams(
            dimension_semantics=("parallel",),   # shards across TCs on v7x
            vmem_limit_bytes=vmem_limit_bytes,
        ),
    )(x2, wih_t, bias)
    xw = xw2.reshape(S_pad, B, H)                # metadata-only reshape

    # ---- Stage 2: sequential recurrence, t_chunk timesteps per grid step ----
    outputs = pl.pallas_call(
        functools.partial(irnn_recurrence_kernel, t_chunk=t_chunk,
                          matmul_dtype=matmul_dtype, unroll=unroll),
        out_shape=jax.ShapeDtypeStruct((S_pad, B, H), out_dtype),
        grid_spec=pltpu.PrefetchScalarGridSpec(
            num_scalar_prefetch=0,
            grid=(n2,),
            in_specs=[
                const_spec((B, H), lambda c: (0, 0)),                # h0
                pl.BlockSpec((t_chunk, B, H), lambda c: (c, 0, 0)),  # xw chunk
                const_spec((H, H), lambda c: (0, 0)),                # W_hh^T
            ],
            out_specs=pl.BlockSpec((t_chunk, B, H), lambda c: (c, 0, 0)),
            scratch_shapes=[pltpu.VMEM((B, H), jnp.float32)],
        ),
        compiler_params=pltpu.CompilerParams(
            dimension_semantics=("arbitrary",),  # true sequential recurrence
            vmem_limit_bytes=vmem_limit_bytes,
        ),
    )(h0, xw, whh_t)

    outputs = outputs[:S]
    h_last = outputs[S - 1:S]                    # (1, B, H) == final hidden
    return outputs, h_last


_SINGLE_BUFFER_CONSTS = True


def run_irnn(*args, **kwargs):
    """Prefer single-buffered constant operands; fall back if unsupported."""
    global _SINGLE_BUFFER_CONSTS
    if _SINGLE_BUFFER_CONSTS:
        try:
            out = irnn_forward(*args, single_buffer_consts=True, **kwargs)
            jax.block_until_ready(out)
            return out
        except Exception:
            # pl.Buffered(1) on the top-level pipeline rejected by this
            # jax/libtpu build -> fall back to default double-buffering.
            _SINGLE_BUFFER_CONSTS = False
    out = irnn_forward(*args, single_buffer_consts=False, **kwargs)
    jax.block_until_ready(out)
    return out


def irnn_reference(inputs, hidden, w_ih, b_ih, w_hh, b_hh):
    h = hidden[0]
    outs = []
    for t in range(inputs.shape[0]):
        h = jnp.maximum(h @ w_hh.T + b_hh + inputs[t] @ w_ih.T + b_ih, 0.0)
        outs.append(h)
    return jnp.stack(outs), h[None]


if __name__ == "__main__":
    S, B, I, H = 12, 8, 128, 128  # seq, batch, input_size, hidden_size

    key = jax.random.PRNGKey(0)
    k_x, k_h, k_w, k_b = jax.random.split(key, 4)

    inputs = jax.random.normal(k_x, (S, B, I), dtype=jnp.float32)
    hidden = jax.random.normal(k_h, (1, B, H), dtype=jnp.float32)

    # i2h: nn.Linear default init (uniform +/- 1/sqrt(in_features)).
    bound = 1.0 / (I ** 0.5)
    w_ih = jax.random.uniform(k_w, (H, I), minval=-bound, maxval=bound,
                              dtype=jnp.float32)
    b_ih = jax.random.uniform(k_b, (H,), minval=-bound, maxval=bound,
                              dtype=jnp.float32)
    # h2h: IRNN initializer -> identity weight, zero bias.
    w_hh = jnp.eye(H, dtype=jnp.float32)
    b_hh = jnp.zeros((H,), dtype=jnp.float32)

    ref_out, ref_h = irnn_reference(inputs, hidden, w_ih, b_ih, w_hh, b_hh)

    # f32 MXU-operand / f32 xw path: strict tolerance.
    outputs, h_last = run_irnn(inputs, hidden, w_ih, b_ih, w_hh, b_hh,
                               matmul_dtype=jnp.float32)
    jax.block_until_ready((outputs, h_last))
    assert outputs.shape == (S, B, H) and h_last.shape == (1, B, H)
    assert jnp.allclose(outputs, ref_out, atol=1e-4, rtol=1e-4)
    assert jnp.allclose(h_last, ref_h, atol=1e-4, rtol=1e-4)

    # bf16 MXU-operand / bf16 xw path (default, v5e/v6e/v7x-friendly): loose tol.
    out_bf, h_bf = run_irnn(inputs, hidden, w_ih, b_ih, w_hh, b_hh,
                            matmul_dtype=jnp.bfloat16)
    jax.block_until_ready((out_bf, h_bf))
    assert jnp.allclose(out_bf, ref_out, atol=0.5, rtol=0.1)
    assert jnp.allclose(h_bf, ref_h, atol=0.5, rtol=0.1)

    print("KERNEL_OK")
</pallas_src>

<mosaic_0001>
module attributes {stable_mosaic.version = 11 : i64} {
  func.func @irnn_recurrence_kernel(%arg0: i32, %arg1: memref<8x128xf32, #tpu.memory_space<vmem>>, %arg2: memref<12x8x128xf32, #tpu.memory_space<vmem>>, %arg3: memref<128x128xf32, #tpu.memory_space<vmem>>, %arg4: memref<12x8x128xf32, #tpu.memory_space<vmem>>, %arg5: memref<8x128xf32, #tpu.memory_space<vmem>>) attributes {dimension_semantics = [#tpu.dimension_semantics<arbitrary>], iteration_bounds = array<i64: 1>, scalar_prefetch = 0 : i64, scratch_operands = 1 : i64, tpu.core_type = #tpu.core_type<tc>, window_params = [{pipeline_mode = #tpu.pipeline_mode<synchronous>, transform_indices = @transform_0, window_bounds = array<i64: 8, 128>}, {transform_indices = @transform_1, window_bounds = array<i64: 12, 8, 128>}, {pipeline_mode = #tpu.pipeline_mode<synchronous>, transform_indices = @transform_2, window_bounds = array<i64: 128, 128>}, {transform_indices = @transform_3, window_bounds = array<i64: 12, 8, 128>}]} {
    %c0_i32 = arith.constant 0 : i32
    %0 = arith.cmpi eq, %arg0, %c0_i32 : i32
    %1 = arith.extui %0 : i1 to i32
    %c0_i32_0 = arith.constant 0 : i32
    %2 = arith.cmpi ne, %1, %c0_i32_0 : i32
    scf.if %2 {
      %c0_100 = arith.constant 0 : index
      %c0_101 = arith.constant 0 : index
      %149 = vector.load %arg1[%c0_100, %c0_101] : memref<8x128xf32, #tpu.memory_space<vmem>>, vector<8x128xf32>
      %c0_102 = arith.constant 0 : index
      %c0_103 = arith.constant 0 : index
      %150 = vector.load %arg5[%c0_102, %c0_103] : memref<8x128xf32, #tpu.memory_space<vmem>>, vector<8x128xf32>
      tpu.vector_store %arg5[%c0_102, %c0_103], %149 {strides = array<i32>} : memref<8x128xf32, #tpu.memory_space<vmem>>, vector<8x128xf32>,
    } else {
    }
    %c0 = arith.constant 0 : index
    %c0_1 = arith.constant 0 : index
    %3 = vector.load %arg5[%c0, %c0_1] : memref<8x128xf32, #tpu.memory_space<vmem>>, vector<8x128xf32>
    %c0_i32_2 = arith.constant 0 : i32
    %c0_3 = arith.constant 0 : index
    %c0_4 = arith.constant 0 : index
    %4 = vector.load %arg3[%c0_3, %c0_4] : memref<128x128xf32, #tpu.memory_space<vmem>>, vector<128x128xf32>
    %cst = arith.constant dense<0.000000e+00> : vector<8x128xf32>
    %5 = tpu.matmul %3, %4, %cst {dimension_numbers = #tpu.dot_dimension_numbers<[1], [0], [0], [1], [0, 0, 1, 1], [], []>} : vector<8x128xf32>, vector<128x128xf32>, vector<8x128xf32> -> vector<8x128xf32>
    %6 = arith.index_cast %c0_i32_2 : i32 to index
    %c0_5 = arith.constant 0 : index
    %c0_6 = arith.constant 0 : index
    %7 = vector.load %arg2[%6, %c0_5, %c0_6] : memref<12x8x128xf32, #tpu.memory_space<vmem>>, vector<1x8x128xf32>
    %8 = vector.shape_cast %7 : vector<1x8x128xf32> to vector<8x128xf32>
    %9 = arith.addf %5, %8 : vector<8x128xf32>
    %cst_7 = arith.constant 0.000000e+00 : f32
    %10 = vector.broadcast %cst_7 : f32 to vector<8x128xf32>
    %11 = arith.maximumf %9, %10 : vector<8x128xf32>
    %12 = arith.index_cast %c0_i32_2 : i32 to index
    %c0_8 = arith.constant 0 : index
    %c0_9 = arith.constant 0 : index
    %13 = vector.load %arg4[%12, %c0_8, %c0_9] : memref<12x8x128xf32, #tpu.memory_space<vmem>>, vector<1x8x128xf32>
    %14 = vector.shape_cast %13 : vector<1x8x128xf32> to vector<8x128xf32>
    %15 = vector.shape_cast %11 : vector<8x128xf32> to vector<1x8x128xf32>
    tpu.vector_store %arg4[%12, %c0_8, %c0_9], %15 {strides = array<i32>} : memref<12x8x128xf32, #tpu.memory_space<vmem>>, vector<1x8x128xf32>,
    %c1_i32 = arith.constant 1 : i32
    %c0_10 = arith.constant 0 : index
    %c0_11 = arith.constant 0 : index
    %16 = vector.load %arg3[%c0_10, %c0_11] : memref<128x128xf32, #tpu.memory_space<vmem>>, vector<128x128xf32>
    %cst_12 = arith.constant dense<0.000000e+00> : vector<8x128xf32>
    %17 = tpu.matmul %11, %16, %cst_12 {dimension_numbers = #tpu.dot_dimension_numbers<[1], [0], [0], [1], [0, 0, 1, 1], [], []>} : vector<8x128xf32>, vector<128x128xf32>, vector<8x128xf32> -> vector<8x128xf32>
    %18 = arith.index_cast %c1_i32 : i32 to index
    %c0_13 = arith.constant 0 : index
    %c0_14 = arith.constant 0 : index
    %19 = vector.load %arg2[%18, %c0_13, %c0_14] : memref<12x8x128xf32, #tpu.memory_space<vmem>>, vector<1x8x128xf32>
    %20 = vector.shape_cast %19 : vector<1x8x128xf32> to vector<8x128xf32>
    %21 = arith.addf %17, %20 : vector<8x128xf32>
    %cst_15 = arith.constant 0.000000e+00 : f32
    %22 = vector.broadcast %cst_15 : f32 to vector<8x128xf32>
    %23 = arith.maximumf %21, %22 : vector<8x128xf32>
    %24 = arith.index_cast %c1_i32 : i32 to index
    %c0_16 = arith.constant 0 : index
    %c0_17 = arith.constant 0 : index
    %25 = vector.load %arg4[%24, %c0_16, %c0_17] : memref<12x8x128xf32, #tpu.memory_space<vmem>>, vector<1x8x128xf32>
    %26 = vector.shape_cast %25 : vector<1x8x128xf32> to vector<8x128xf32>
    %27 = vector.shape_cast %23 : vector<8x128xf32> to vector<1x8x128xf32>
    tpu.vector_store %arg4[%24, %c0_16, %c0_17], %27 {strides = array<i32>} : memref<12x8x128xf32, #tpu.memory_space<vmem>>, vector<1x8x128xf32>,
    %c2_i32 = arith.constant 2 : i32
    %c0_18 = arith.constant 0 : index
    %c0_19 = arith.constant 0 : index
    %28 = vector.load %arg3[%c0_18, %c0_19] : memref<128x128xf32, #tpu.memory_space<vmem>>, vector<128x128xf32>
    %cst_20 = arith.constant dense<0.000000e+00> : vector<8x128xf32>
    %29 = tpu.matmul %23, %28, %cst_20 {dimension_numbers = #tpu.dot_dimension_numbers<[1], [0], [0], [1], [0, 0, 1, 1], [], []>} : vector<8x128xf32>, vector<128x128xf32>, vector<8x128xf32> -> vector<8x128xf32>
    %30 = arith.index_cast %c2_i32 : i32 to index
    %c0_21 = arith.constant 0 : index
    %c0_22 = arith.constant 0 : index
    %31 = vector.load %arg2[%30, %c0_21, %c0_22] : memref<12x8x128xf32, #tpu.memory_space<vmem>>, vector<1x8x128xf32>
    %32 = vector.shape_cast %31 : vector<1x8x128xf32> to vector<8x128xf32>
    %33 = arith.addf %29, %32 : vector<8x128xf32>
    %cst_23 = arith.constant 0.000000e+00 : f32
    %34 = vector.broadcast %cst_23 : f32 to vector<8x128xf32>
    %35 = arith.maximumf %33, %34 : vector<8x128xf32>
    %36 = arith.index_cast %c2_i32 : i32 to index
    %c0_24 = arith.constant 0 : index
    %c0_25 = arith.constant 0 : index
    %37 = vector.load %arg4[%36, %c0_24, %c0_25] : memref<12x8x128xf32, #tpu.memory_space<vmem>>, vector<1x8x128xf32>
    %38 = vector.shape_cast %37 : vector<1x8x128xf32> to vector<8x128xf32>
    %39 = vector.shape_cast %35 : vector<8x128xf32> to vector<1x8x128xf32>
    tpu.vector_store %arg4[%36, %c0_24, %c0_25], %39 {strides = array<i32>} : memref<12x8x128xf32, #tpu.memory_space<vmem>>, vector<1x8x128xf32>,
    %c3_i32 = arith.constant 3 : i32
    %c0_26 = arith.constant 0 : index
    %c0_27 = arith.constant 0 : index
    %40 = vector.load %arg3[%c0_26, %c0_27] : memref<128x128xf32, #tpu.memory_space<vmem>>, vector<128x128xf32>
    %cst_28 = arith.constant dense<0.000000e+00> : vector<8x128xf32>
    %41 = tpu.matmul %35, %40, %cst_28 {dimension_numbers = #tpu.dot_dimension_numbers<[1], [0], [0], [1], [0, 0, 1, 1], [], []>} : vector<8x128xf32>, vector<128x128xf32>, vector<8x128xf32> -> vector<8x128xf32>
    %42 = arith.index_cast %c3_i32 : i32 to index
    %c0_29 = arith.constant 0 : index
    %c0_30 = arith.constant 0 : index
    %43 = vector.load %arg2[%42, %c0_29, %c0_30] : memref<12x8x128xf32, #tpu.memory_space<vmem>>, vector<1x8x128xf32>
    %44 = vector.shape_cast %43 : vector<1x8x128xf32> to vector<8x128xf32>
    %45 = arith.addf %41, %44 : vector<8x128xf32>
    %cst_31 = arith.constant 0.000000e+00 : f32
    %46 = vector.broadcast %cst_31 : f32 to vector<8x128xf32>
    %47 = arith.maximumf %45, %46 : vector<8x128xf32>
    %48 = arith.index_cast %c3_i32 : i32 to index
    %c0_32 = arith.constant 0 : index
    %c0_33 = arith.constant 0 : index
    %49 = vector.load %arg4[%48, %c0_32, %c0_33] : memref<12x8x128xf32, #tpu.memory_space<vmem>>, vector<1x8x128xf32>
    %50 = vector.shape_cast %49 : vector<1x8x128xf32> to vector<8x128xf32>
    %51 = vector.shape_cast %47 : vector<8x128xf32> to vector<1x8x128xf32>
    tpu.vector_store %arg4[%48, %c0_32, %c0_33], %51 {strides = array<i32>} : memref<12x8x128xf32, #tpu.memory_space<vmem>>, vector<1x8x128xf32>,
    %c4_i32 = arith.constant 4 : i32
    %c0_34 = arith.constant 0 : index
    %c0_35 = arith.constant 0 : index
    %52 = vector.load %arg3[%c0_34, %c0_35] : memref<128x128xf32, #tpu.memory_space<vmem>>, vector<128x128xf32>
    %cst_36 = arith.constant dense<0.000000e+00> : vector<8x128xf32>
    %53 = tpu.matmul %47, %52, %cst_36 {dimension_numbers = #tpu.dot_dimension_numbers<[1], [0], [0], [1], [0, 0, 1, 1], [], []>} : vector<8x128xf32>, vector<128x128xf32>, vector<8x128xf32> -> vector<8x128xf32>
    %54 = arith.index_cast %c4_i32 : i32 to index
    %c0_37 = arith.constant 0 : index
    %c0_38 = arith.constant 0 : index
    %55 = vector.load %arg2[%54, %c0_37, %c0_38] : memref<12x8x128xf32, #tpu.memory_space<vmem>>, vector<1x8x128xf32>
    %56 = vector.shape_cast %55 : vector<1x8x128xf32> to vector<8x128xf32>
    %57 = arith.addf %53, %56 : vector<8x128xf32>
    %cst_39 = arith.constant 0.000000e+00 : f32
    %58 = vector.broadcast %cst_39 : f32 to vector<8x128xf32>
    %59 = arith.maximumf %57, %58 : vector<8x128xf32>
    %60 = arith.index_cast %c4_i32 : i32 to index
    %c0_40 = arith.constant 0 : index
    %c0_41 = arith.constant 0 : index
    %61 = vector.load %arg4[%60, %c0_40, %c0_41] : memref<12x8x128xf32, #tpu.memory_space<vmem>>, vector<1x8x128xf32>
    %62 = vector.shape_cast %61 : vector<1x8x128xf32> to vector<8x128xf32>
    %63 = vector.shape_cast %59 : vector<8x128xf32> to vector<1x8x128xf32>
    tpu.vector_store %arg4[%60, %c0_40, %c0_41], %63 {strides = array<i32>} : memref<12x8x128xf32, #tpu.memory_space<vmem>>, vector<1x8x128xf32>,
    %c5_i32 = arith.constant 5 : i32
    %c0_42 = arith.constant 0 : index
    %c0_43 = arith.constant 0 : index
    %64 = vector.load %arg3[%c0_42, %c0_43] : memref<128x128xf32, #tpu.memory_space<vmem>>, vector<128x128xf32>
    %cst_44 = arith.constant dense<0.000000e+00> : vector<8x128xf32>
    %65 = tpu.matmul %59, %64, %cst_44 {dimension_numbers = #tpu.dot_dimension_numbers<[1], [0], [0], [1], [0, 0, 1, 1], [], []>} : vector<8x128xf32>, vector<128x128xf32>, vector<8x128xf32> -> vector<8x128xf32>
    %66 = arith.index_cast %c5_i32 : i32 to index
    %c0_45 = arith.constant 0 : index
    %c0_46 = arith.constant 0 : index
    %67 = vector.load %arg2[%66, %c0_45, %c0_46] : memref<12x8x128xf32, #tpu.memory_space<vmem>>, vector<1x8x128xf32>
    %68 = vector.shape_cast %67 : vector<1x8x128xf32> to vector<8x128xf32>
    %69 = arith.addf %65, %68 : vector<8x128xf32>
    %cst_47 = arith.constant 0.000000e+00 : f32
    %70 = vector.broadcast %cst_47 : f32 to vector<8x128xf32>
    %71 = arith.maximumf %69, %70 : vector<8x128xf32>
    %72 = arith.index_cast %c5_i32 : i32 to index
    %c0_48 = arith.constant 0 : index
    %c0_49 = arith.constant 0 : index
    %73 = vector.load %arg4[%72, %c0_48, %c0_49] : memref<12x8x128xf32, #tpu.memory_space<vmem>>, vector<1x8x128xf32>
    %74 = vector.shape_cast %73 : vector<1x8x128xf32> to vector<8x128xf32>
    %75 = vector.shape_cast %71 : vector<8x128xf32> to vector<1x8x128xf32>
    tpu.vector_store %arg4[%72, %c0_48, %c0_49], %75 {strides = array<i32>} : memref<12x8x128xf32, #tpu.memory_space<vmem>>, vector<1x8x128xf32>,
    %c6_i32 = arith.constant 6 : i32
    %c0_50 = arith.constant 0 : index
    %c0_51 = arith.constant 0 : index
    %76 = vector.load %arg3[%c0_50, %c0_51] : memref<128x128xf32, #tpu.memory_space<vmem>>, vector<128x128xf32>
    %cst_52 = arith.constant dense<0.000000e+00> : vector<8x128xf32>
    %77 = tpu.matmul %71, %76, %cst_52 {dimension_numbers = #tpu.dot_dimension_numbers<[1], [0], [0], [1], [0, 0, 1, 1], [], []>} : vector<8x128xf32>, vector<128x128xf32>, vector<8x128xf32> -> vector<8x128xf32>
    %78 = arith.index_cast %c6_i32 : i32 to index
    %c0_53 = arith.constant 0 : index
    %c0_54 = arith.constant 0 : index
    %79 = vector.load %arg2[%78, %c0_53, %c0_54] : memref<12x8x128xf32, #tpu.memory_space<vmem>>, vector<1x8x128xf32>
    %80 = vector.shape_cast %79 : vector<1x8x128xf32> to vector<8x128xf32>
    %81 = arith.addf %77, %80 : vector<8x128xf32>
    %cst_55 = arith.constant 0.000000e+00 : f32
    %82 = vector.broadcast %cst_55 : f32 to vector<8x128xf32>
    %83 = arith.maximumf %81, %82 : vector<8x128xf32>
    %84 = arith.index_cast %c6_i32 : i32 to index
    %c0_56 = arith.constant 0 : index
    %c0_57 = arith.constant 0 : index
    %85 = vector.load %arg4[%84, %c0_56, %c0_57] : memref<12x8x128xf32, #tpu.memory_space<vmem>>, vector<1x8x128xf32>
    %86 = vector.shape_cast %85 : vector<1x8x128xf32> to vector<8x128xf32>
    %87 = vector.shape_cast %83 : vector<8x128xf32> to vector<1x8x128xf32>
    tpu.vector_store %arg4[%84, %c0_56, %c0_57], %87 {strides = array<i32>} : memref<12x8x128xf32, #tpu.memory_space<vmem>>, vector<1x8x128xf32>,
    %c7_i32 = arith.constant 7 : i32
    %c0_58 = arith.constant 0 : index
    %c0_59 = arith.constant 0 : index
    %88 = vector.load %arg3[%c0_58, %c0_59] : memref<128x128xf32, #tpu.memory_space<vmem>>, vector<128x128xf32>
    %cst_60 = arith.constant dense<0.000000e+00> : vector<8x128xf32>
    %89 = tpu.matmul %83, %88, %cst_60 {dimension_numbers = #tpu.dot_dimension_numbers<[1], [0], [0], [1], [0, 0, 1, 1], [], []>} : vector<8x128xf32>, vector<128x128xf32>, vector<8x128xf32> -> vector<8x128xf32>
    %90 = arith.index_cast %c7_i32 : i32 to index
    %c0_61 = arith.constant 0 : index
    %c0_62 = arith.constant 0 : index
    %91 = vector.load %arg2[%90, %c0_61, %c0_62] : memref<12x8x128xf32, #tpu.memory_space<vmem>>, vector<1x8x128xf32>
    %92 = vector.shape_cast %91 : vector<1x8x128xf32> to vector<8x128xf32>
    %93 = arith.addf %89, %92 : vector<8x128xf32>
    %cst_63 = arith.constant 0.000000e+00 : f32
    %94 = vector.broadcast %cst_63 : f32 to vector<8x128xf32>
    %95 = arith.maximumf %93, %94 : vector<8x128xf32>
    %96 = arith.index_cast %c7_i32 : i32 to index
    %c0_64 = arith.constant 0 : index
    %c0_65 = arith.constant 0 : index
    %97 = vector.load %arg4[%96, %c0_64, %c0_65] : memref<12x8x128xf32, #tpu.memory_space<vmem>>, vector<1x8x128xf32>
    %98 = vector.shape_cast %97 : vector<1x8x128xf32> to vector<8x128xf32>
    %99 = vector.shape_cast %95 : vector<8x128xf32> to vector<1x8x128xf32>
    tpu.vector_store %arg4[%96, %c0_64, %c0_65], %99 {strides = array<i32>} : memref<12x8x128xf32, #tpu.memory_space<vmem>>, vector<1x8x128xf32>,
    %c8_i32 = arith.constant 8 : i32
    %c0_66 = arith.constant 0 : index
    %c0_67 = arith.constant 0 : index
    %100 = vector.load %arg3[%c0_66, %c0_67] : memref<128x128xf32, #tpu.memory_space<vmem>>, vector<128x128xf32>
    %cst_68 = arith.constant dense<0.000000e+00> : vector<8x128xf32>
    %101 = tpu.matmul %95, %100, %cst_68 {dimension_numbers = #tpu.dot_dimension_numbers<[1], [0], [0], [1], [0, 0, 1, 1], [], []>} : vector<8x128xf32>, vector<128x128xf32>, vector<8x128xf32> -> vector<8x128xf32>
    %102 = arith.index_cast %c8_i32 : i32 to index
    %c0_69 = arith.constant 0 : index
    %c0_70 = arith.constant 0 : index
    %103 = vector.load %arg2[%102, %c0_69, %c0_70] : memref<12x8x128xf32, #tpu.memory_space<vmem>>, vector<1x8x128xf32>
    %104 = vector.shape_cast %103 : vector<1x8x128xf32> to vector<8x128xf32>
    %105 = arith.addf %101, %104 : vector<8x128xf32>
    %cst_71 = arith.constant 0.000000e+00 : f32
    %106 = vector.broadcast %cst_71 : f32 to vector<8x128xf32>
    %107 = arith.maximumf %105, %106 : vector<8x128xf32>
    %108 = arith.index_cast %c8_i32 : i32 to index
    %c0_72 = arith.constant 0 : index
    %c0_73 = arith.constant 0 : index
    %109 = vector.load %arg4[%108, %c0_72, %c0_73] : memref<12x8x128xf32, #tpu.memory_space<vmem>>, vector<1x8x128xf32>
    %110 = vector.shape_cast %109 : vector<1x8x128xf32> to vector<8x128xf32>
    %111 = vector.shape_cast %107 : vector<8x128xf32> to vector<1x8x128xf32>
    tpu.vector_store %arg4[%108, %c0_72, %c0_73], %111 {strides = array<i32>} : memref<12x8x128xf32, #tpu.memory_space<vmem>>, vector<1x8x128xf32>,
    %c9_i32 = arith.constant 9 : i32
    %c0_74 = arith.constant 0 : index
    %c0_75 = arith.constant 0 : index
    %112 = vector.load %arg3[%c0_74, %c0_75] : memref<128x128xf32, #tpu.memory_space<vmem>>, vector<128x128xf32>
    %cst_76 = arith.constant dense<0.000000e+00> : vector<8x128xf32>
    %113 = tpu.matmul %107, %112, %cst_76 {dimension_numbers = #tpu.dot_dimension_numbers<[1], [0], [0], [1], [0, 0, 1, 1], [], []>} : vector<8x128xf32>, vector<128x128xf32>, vector<8x128xf32> -> vector<8x128xf32>
    %114 = arith.index_cast %c9_i32 : i32 to index
    %c0_77 = arith.constant 0 : index
    %c0_78 = arith.constant 0 : index
    %115 = vector.load %arg2[%114, %c0_77, %c0_78] : memref<12x8x128xf32, #tpu.memory_space<vmem>>, vector<1x8x128xf32>
    %116 = vector.shape_cast %115 : vector<1x8x128xf32> to vector<8x128xf32>
    %117 = arith.addf %113, %116 : vector<8x128xf32>
    %cst_79 = arith.constant 0.000000e+00 : f32
    %118 = vector.broadcast %cst_79 : f32 to vector<8x128xf32>
    %119 = arith.maximumf %117, %118 : vector<8x128xf32>
    %120 = arith.index_cast %c9_i32 : i32 to index
    %c0_80 = arith.constant 0 : index
    %c0_81 = arith.constant 0 : index
    %121 = vector.load %arg4[%120, %c0_80, %c0_81] : memref<12x8x128xf32, #tpu.memory_space<vmem>>, vector<1x8x128xf32>
    %122 = vector.shape_cast %121 : vector<1x8x128xf32> to vector<8x128xf32>
    %123 = vector.shape_cast %119 : vector<8x128xf32> to vector<1x8x128xf32>
    tpu.vector_store %arg4[%120, %c0_80, %c0_81], %123 {strides = array<i32>} : memref<12x8x128xf32, #tpu.memory_space<vmem>>, vector<1x8x128xf32>,
    %c10_i32 = arith.constant 10 : i32
    %c0_82 = arith.constant 0 : index
    %c0_83 = arith.constant 0 : index
    %124 = vector.load %arg3[%c0_82, %c0_83] : memref<128x128xf32, #tpu.memory_space<vmem>>, vector<128x128xf32>
    %cst_84 = arith.constant dense<0.000000e+00> : vector<8x128xf32>
    %125 = tpu.matmul %119, %124, %cst_84 {dimension_numbers = #tpu.dot_dimension_numbers<[1], [0], [0], [1], [0, 0, 1, 1], [], []>} : vector<8x128xf32>, vector<128x128xf32>, vector<8x128xf32> -> vector<8x128xf32>
    %126 = arith.index_cast %c10_i32 : i32 to index
    %c0_85 = arith.constant 0 : index
    %c0_86 = arith.constant 0 : index
    %127 = vector.load %arg2[%126, %c0_85, %c0_86] : memref<12x8x128xf32, #tpu.memory_space<vmem>>, vector<1x8x128xf32>
    %128 = vector.shape_cast %127 : vector<1x8x128xf32> to vector<8x128xf32>
    %129 = arith.addf %125, %128 : vector<8x128xf32>
    %cst_87 = arith.constant 0.000000e+00 : f32
    %130 = vector.broadcast %cst_87 : f32 to vector<8x128xf32>
    %131 = arith.maximumf %129, %130 : vector<8x128xf32>
    %132 = arith.index_cast %c10_i32 : i32 to index
    %c0_88 = arith.constant 0 : index
    %c0_89 = arith.constant 0 : index
    %133 = vector.load %arg4[%132, %c0_88, %c0_89] : memref<12x8x128xf32, #tpu.memory_space<vmem>>, vector<1x8x128xf32>
    %134 = vector.shape_cast %133 : vector<1x8x128xf32> to vector<8x128xf32>
    %135 = vector.shape_cast %131 : vector<8x128xf32> to vector<1x8x128xf32>
    tpu.vector_store %arg4[%132, %c0_88, %c0_89], %135 {strides = array<i32>} : memref<12x8x128xf32, #tpu.memory_space<vmem>>, vector<1x8x128xf32>,
    %c11_i32 = arith.constant 11 : i32
    %c0_90 = arith.constant 0 : index
    %c0_91 = arith.constant 0 : index
    %136 = vector.load %arg3[%c0_90, %c0_91] : memref<128x128xf32, #tpu.memory_space<vmem>>, vector<128x128xf32>
    %cst_92 = arith.constant dense<0.000000e+00> : vector<8x128xf32>
    %137 = tpu.matmul %131, %136, %cst_92 {dimension_numbers = #tpu.dot_dimension_numbers<[1], [0], [0], [1], [0, 0, 1, 1], [], []>} : vector<8x128xf32>, vector<128x128xf32>, vector<8x128xf32> -> vector<8x128xf32>
    %138 = arith.index_cast %c11_i32 : i32 to index
    %c0_93 = arith.constant 0 : index
    %c0_94 = arith.constant 0 : index
    %139 = vector.load %arg2[%138, %c0_93, %c0_94] : memref<12x8x128xf32, #tpu.memory_space<vmem>>, vector<1x8x128xf32>
    %140 = vector.shape_cast %139 : vector<1x8x128xf32> to vector<8x128xf32>
    %141 = arith.addf %137, %140 : vector<8x128xf32>
    %cst_95 = arith.constant 0.000000e+00 : f32
    %142 = vector.broadcast %cst_95 : f32 to vector<8x128xf32>
    %143 = arith.maximumf %141, %142 : vector<8x128xf32>
    %144 = arith.index_cast %c11_i32 : i32 to index
    %c0_96 = arith.constant 0 : index
    %c0_97 = arith.constant 0 : index
    %145 = vector.load %arg4[%144, %c0_96, %c0_97] : memref<12x8x128xf32, #tpu.memory_space<vmem>>, vector<1x8x128xf32>
    %146 = vector.shape_cast %145 : vector<1x8x128xf32> to vector<8x128xf32>
    %147 = vector.shape_cast %143 : vector<8x128xf32> to vector<1x8x128xf32>
    tpu.vector_store %arg4[%144, %c0_96, %c0_97], %147 {strides = array<i32>} : memref<12x8x128xf32, #tpu.memory_space<vmem>>, vector<1x8x128xf32>,
    %c12_i32 = arith.constant 12 : i32
    %c0_98 = arith.constant 0 : index
    %c0_99 = arith.constant 0 : index
    %148 = vector.load %arg5[%c0_98, %c0_99] : memref<8x128xf32, #tpu.memory_space<vmem>>, vector<8x128xf32>
    tpu.vector_store %arg5[%c0_98, %c0_99], %143 {strides = array<i32>} : memref<8x128xf32, #tpu.memory_space<vmem>>, vector<8x128xf32>,
    return
  }
  func.func @transform_0(%arg0: i32) -> (i32, i32) {
    %c0_i32 = arith.constant 0 : i32
    %c0_i32_0 = arith.constant 0 : i32
    %c0_i32_1 = arith.constant 0 : i32
    return %c0_i32, %c0_i32_0 : i32, i32
  }
  func.func @transform_1(%arg0: i32) -> (i32, i32, i32) {
    %c0_i32 = arith.constant 0 : i32
    %c0_i32_0 = arith.constant 0 : i32
    %c0_i32_1 = arith.constant 0 : i32
    return %arg0, %c0_i32, %c0_i32_0 : i32, i32, i32
  }
  func.func @transform_2(%arg0: i32) -> (i32, i32) {
    %c0_i32 = arith.constant 0 : i32
    %c0_i32_0 = arith.constant 0 : i32
    %c0_i32_1 = arith.constant 0 : i32
    return %c0_i32, %c0_i32_0 : i32, i32
  }
  func.func @transform_3(%arg0: i32) -> (i32, i32, i32) {
    %c0_i32 = arith.constant 0 : i32
    %c0_i32_0 = arith.constant 0 : i32
    %c0_i32_1 = arith.constant 0 : i32
    return %arg0, %c0_i32, %c0_i32_0 : i32, i32, i32
  }
}

module attributes {stable_mosaic.version = 11 : i64} {
  func.func @input_proj_kernel(%arg0: i32, %arg1: memref<96x128xf32, #tpu.memory_space<vmem>>, %arg2: memref<128x128xf32, #tpu.memory_space<vmem>>, %arg3: memref<1x128xf32, #tpu.memory_space<vmem>>, %arg4: memref<96x128xf32, #tpu.memory_space<vmem>>) attributes {dimension_semantics = [#tpu.dimension_semantics<parallel>], iteration_bounds = array<i64: 1>, scalar_prefetch = 0 : i64, scratch_operands = 0 : i64, tpu.core_type = #tpu.core_type<tc>, window_params = [{transform_indices = @transform_0, window_bounds = array<i64: 96, 128>}, {pipeline_mode = #tpu.pipeline_mode<synchronous>, transform_indices = @transform_1, window_bounds = array<i64: 128, 128>}, {pipeline_mode = #tpu.pipeline_mode<synchronous>, transform_indices = @transform_2, window_bounds = array<i64: 1, 128>}, {transform_indices = @transform_3, window_bounds = array<i64: 96, 128>}]} {
    %c0 = arith.constant 0 : index
    %c0_0 = arith.constant 0 : index
    %0 = vector.load %arg1[%c0, %c0_0] : memref<96x128xf32, #tpu.memory_space<vmem>>, vector<96x128xf32>
    %c0_1 = arith.constant 0 : index
    %c0_2 = arith.constant 0 : index
    %1 = vector.load %arg2[%c0_1, %c0_2] : memref<128x128xf32, #tpu.memory_space<vmem>>, vector<128x128xf32>
    %cst = arith.constant dense<0.000000e+00> : vector<96x128xf32>
    %2 = tpu.matmul %0, %1, %cst {dimension_numbers = #tpu.dot_dimension_numbers<[1], [0], [0], [1], [0, 0, 1, 1], [], []>} : vector<96x128xf32>, vector<128x128xf32>, vector<96x128xf32> -> vector<96x128xf32>
    %c0_3 = arith.constant 0 : index
    %c0_4 = arith.constant 0 : index
    %3 = vector.load %arg3[%c0_3, %c0_4] : memref<1x128xf32, #tpu.memory_space<vmem>>, vector<1x128xf32>
    %4 = vector.broadcast %3 : vector<1x128xf32> to vector<96x128xf32>
    %5 = arith.addf %2, %4 : vector<96x128xf32>
    %c0_5 = arith.constant 0 : index
    %c0_6 = arith.constant 0 : index
    %6 = vector.load %arg4[%c0_5, %c0_6] : memref<96x128xf32, #tpu.memory_space<vmem>>, vector<96x128xf32>
    tpu.vector_store %arg4[%c0_5, %c0_6], %5 {strides = array<i32>} : memref<96x128xf32, #tpu.memory_space<vmem>>, vector<96x128xf32>,
    return
  }
  func.func @transform_0(%arg0: i32) -> (i32, i32) {
    %c0_i32 = arith.constant 0 : i32
    %c0_i32_0 = arith.constant 0 : i32
    return %arg0, %c0_i32 : i32, i32
  }
  func.func @transform_1(%arg0: i32) -> (i32, i32) {
    %c0_i32 = arith.constant 0 : i32
    %c0_i32_0 = arith.constant 0 : i32
    %c0_i32_1 = arith.constant 0 : i32
    return %c0_i32, %c0_i32_0 : i32, i32
  }
  func.func @transform_2(%arg0: i32) -> (i32, i32) {
    %c0_i32 = arith.constant 0 : i32
    %c0_i32_0 = arith.constant 0 : i32
    %c0_i32_1 = arith.constant 0 : i32
    return %c0_i32, %c0_i32_0 : i32, i32
  }
  func.func @transform_3(%arg0: i32) -> (i32, i32) {
    %c0_i32 = arith.constant 0 : i32
    %c0_i32_0 = arith.constant 0 : i32
    return %arg0, %c0_i32 : i32, i32
  }
}

module attributes {stable_mosaic.version = 11 : i64} {
  func.func @input_proj_kernel(%arg0: i32, %arg1: memref<96x128xf32, #tpu.memory_space<vmem>>, %arg2: memref<128x128xf32, #tpu.memory_space<vmem>>, %arg3: memref<1x128xf32, #tpu.memory_space<vmem>>, %arg4: memref<96x128xf32, #tpu.memory_space<vmem>>) attributes {dimension_semantics = [#tpu.dimension_semantics<parallel>], iteration_bounds = array<i64: 1>, scalar_prefetch = 0 : i64, scratch_operands = 0 : i64, tpu.core_type = #tpu.core_type<tc>, window_params = [{transform_indices = @transform_0, window_bounds = array<i64: 96, 128>}, {pipeline_mode = #tpu.pipeline_mode<synchronous>, transform_indices = @transform_1, window_bounds = array<i64: 128, 128>}, {pipeline_mode = #tpu.pipeline_mode<synchronous>, transform_indices = @transform_2, window_bounds = array<i64: 1, 128>}, {transform_indices = @transform_3, window_bounds = array<i64: 96, 128>}]} {
    %c0 = arith.constant 0 : index
    %c0_0 = arith.constant 0 : index
    %0 = vector.load %arg1[%c0, %c0_0] : memref<96x128xf32, #tpu.memory_space<vmem>>, vector<96x128xf32>
    %c0_1 = arith.constant 0 : index
    %c0_2 = arith.constant 0 : index
    %1 = vector.load %arg2[%c0_1, %c0_2] : memref<128x128xf32, #tpu.memory_space<vmem>>, vector<128x128xf32>
    %cst = arith.constant dense<0.000000e+00> : vector<96x128xf32>
    %2 = tpu.matmul %0, %1, %cst {dimension_numbers = #tpu.dot_dimension_numbers<[1], [0], [0], [1], [0, 0, 1, 1], [], []>} : vector<96x128xf32>, vector<128x128xf32>, vector<96x128xf32> -> vector<96x128xf32>
    %c0_3 = arith.constant 0 : index
    %c0_4 = arith.constant 0 : index
    %3 = vector.load %arg3[%c0_3, %c0_4] : memref<1x128xf32, #tpu.memory_space<vmem>>, vector<1x128xf32>
    %4 = vector.broadcast %3 : vector<1x128xf32> to vector<96x128xf32>
    %5 = arith.addf %2, %4 : vector<96x128xf32>
    %c0_5 = arith.constant 0 : index
    %c0_6 = arith.constant 0 : index
    %6 = vector.load %arg4[%c0_5, %c0_6] : memref<96x128xf32, #tpu.memory_space<vmem>>, vector<96x128xf32>
    tpu.vector_store %arg4[%c0_5, %c0_6], %5 {strides = array<i32>} : memref<96x128xf32, #tpu.memory_space<vmem>>, vector<96x128xf32>,
    return
  }
  func.func @transform_0(%arg0: i32) -> (i32, i32) {
    %c0_i32 = arith.constant 0 : i32
    %c0_i32_0 = arith.constant 0 : i32
    return %arg0, %c0_i32 : i32, i32
  }
  func.func @transform_1(%arg0: i32) -> (i32, i32) {
    %c0_i32 = arith.constant 0 : i32
    %c0_i32_0 = arith.constant 0 : i32
    %c0_i32_1 = arith.constant 0 : i32
    return %c0_i32, %c0_i32_0 : i32, i32
  }
  func.func @transform_2(%arg0: i32) -> (i32, i32) {
    %c0_i32 = arith.constant 0 : i32
    %c0_i32_0 = arith.constant 0 : i32
    %c0_i32_1 = arith.constant 0 : i32
    return %c0_i32, %c0_i32_0 : i32, i32
  }
  func.func @transform_3(%arg0: i32) -> (i32, i32) {
    %c0_i32 = arith.constant 0 : i32
    %c0_i32_0 = arith.constant 0 : i32
    return %arg0, %c0_i32 : i32, i32
  }
}

module attributes {stable_mosaic.version = 11 : i64} {
  func.func @irnn_recurrence_kernel(%arg0: i32, %arg1: memref<8x128xf32, #tpu.memory_space<vmem>>, %arg2: memref<12x8x128xf32, #tpu.memory_space<vmem>>, %arg3: memref<128x128xf32, #tpu.memory_space<vmem>>, %arg4: memref<12x8x128xf32, #tpu.memory_space<vmem>>, %arg5: memref<8x128xf32, #tpu.memory_space<vmem>>) attributes {dimension_semantics = [#tpu.dimension_semantics<arbitrary>], iteration_bounds = array<i64: 1>, scalar_prefetch = 0 : i64, scratch_operands = 1 : i64, tpu.core_type = #tpu.core_type<tc>, window_params = [{pipeline_mode = #tpu.pipeline_mode<synchronous>, transform_indices = @transform_0, window_bounds = array<i64: 8, 128>}, {transform_indices = @transform_1, window_bounds = array<i64: 12, 8, 128>}, {pipeline_mode = #tpu.pipeline_mode<synchronous>, transform_indices = @transform_2, window_bounds = array<i64: 128, 128>}, {transform_indices = @transform_3, window_bounds = array<i64: 12, 8, 128>}]} {
    %c0_i32 = arith.constant 0 : i32
    %0 = arith.cmpi eq, %arg0, %c0_i32 : i32
    %1 = arith.extui %0 : i1 to i32
    %c0_i32_0 = arith.constant 0 : i32
    %2 = arith.cmpi ne, %1, %c0_i32_0 : i32
    scf.if %2 {
      %c0_100 = arith.constant 0 : index
      %c0_101 = arith.constant 0 : index
      %149 = vector.load %arg1[%c0_100, %c0_101] : memref<8x128xf32, #tpu.memory_space<vmem>>, vector<8x128xf32>
      %c0_102 = arith.constant 0 : index
      %c0_103 = arith.constant 0 : index
      %150 = vector.load %arg5[%c0_102, %c0_103] : memref<8x128xf32, #tpu.memory_space<vmem>>, vector<8x128xf32>
      tpu.vector_store %arg5[%c0_102, %c0_103], %149 {strides = array<i32>} : memref<8x128xf32, #tpu.memory_space<vmem>>, vector<8x128xf32>,
    } else {
    }
    %c0 = arith.constant 0 : index
    %c0_1 = arith.constant 0 : index
    %3 = vector.load %arg5[%c0, %c0_1] : memref<8x128xf32, #tpu.memory_space<vmem>>, vector<8x128xf32>
    %c0_i32_2 = arith.constant 0 : i32
    %c0_3 = arith.constant 0 : index
    %c0_4 = arith.constant 0 : index
    %4 = vector.load %arg3[%c0_3, %c0_4] : memref<128x128xf32, #tpu.memory_space<vmem>>, vector<128x128xf32>
    %cst = arith.constant dense<0.000000e+00> : vector<8x128xf32>
    %5 = tpu.matmul %3, %4, %cst {dimension_numbers = #tpu.dot_dimension_numbers<[1], [0], [0], [1], [0, 0, 1, 1], [], []>} : vector<8x128xf32>, vector<128x128xf32>, vector<8x128xf32> -> vector<8x128xf32>
    %6 = arith.index_cast %c0_i32_2 : i32 to index
    %c0_5 = arith.constant 0 : index
    %c0_6 = arith.constant 0 : index
    %7 = vector.load %arg2[%6, %c0_5, %c0_6] : memref<12x8x128xf32, #tpu.memory_space<vmem>>, vector<1x8x128xf32>
    %8 = vector.shape_cast %7 : vector<1x8x128xf32> to vector<8x128xf32>
    %9 = arith.addf %5, %8 : vector<8x128xf32>
    %cst_7 = arith.constant 0.000000e+00 : f32
    %10 = vector.broadcast %cst_7 : f32 to vector<8x128xf32>
    %11 = arith.maximumf %9, %10 : vector<8x128xf32>
    %12 = arith.index_cast %c0_i32_2 : i32 to index
    %c0_8 = arith.constant 0 : index
    %c0_9 = arith.constant 0 : index
    %13 = vector.load %arg4[%12, %c0_8, %c0_9] : memref<12x8x128xf32, #tpu.memory_space<vmem>>, vector<1x8x128xf32>
    %14 = vector.shape_cast %13 : vector<1x8x128xf32> to vector<8x128xf32>
    %15 = vector.shape_cast %11 : vector<8x128xf32> to vector<1x8x128xf32>
    tpu.vector_store %arg4[%12, %c0_8, %c0_9], %15 {strides = array<i32>} : memref<12x8x128xf32, #tpu.memory_space<vmem>>, vector<1x8x128xf32>,
    %c1_i32 = arith.constant 1 : i32
    %c0_10 = arith.constant 0 : index
    %c0_11 = arith.constant 0 : index
    %16 = vector.load %arg3[%c0_10, %c0_11] : memref<128x128xf32, #tpu.memory_space<vmem>>, vector<128x128xf32>
    %cst_12 = arith.constant dense<0.000000e+00> : vector<8x128xf32>
    %17 = tpu.matmul %11, %16, %cst_12 {dimension_numbers = #tpu.dot_dimension_numbers<[1], [0], [0], [1], [0, 0, 1, 1], [], []>} : vector<8x128xf32>, vector<128x128xf32>, vector<8x128xf32> -> vector<8x128xf32>
    %18 = arith.index_cast %c1_i32 : i32 to index
    %c0_13 = arith.constant 0 : index
    %c0_14 = arith.constant 0 : index
    %19 = vector.load %arg2[%18, %c0_13, %c0_14] : memref<12x8x128xf32, #tpu.memory_space<vmem>>, vector<1x8x128xf32>
    %20 = vector.shape_cast %19 : vector<1x8x128xf32> to vector<8x128xf32>
    %21 = arith.addf %17, %20 : vector<8x128xf32>
    %cst_15 = arith.constant 0.000000e+00 : f32
    %22 = vector.broadcast %cst_15 : f32 to vector<8x128xf32>
    %23 = arith.maximumf %21, %22 : vector<8x128xf32>
    %24 = arith.index_cast %c1_i32 : i32 to index
    %c0_16 = arith.constant 0 : index
    %c0_17 = arith.constant 0 : index
    %25 = vector.load %arg4[%24, %c0_16, %c0_17] : memref<12x8x128xf32, #tpu.memory_space<vmem>>, vector<1x8x128xf32>
    %26 = vector.shape_cast %25 : vector<1x8x128xf32> to vector<8x128xf32>
    %27 = vector.shape_cast %23 : vector<8x128xf32> to vector<1x8x128xf32>
    tpu.vector_store %arg4[%24, %c0_16, %c0_17], %27 {strides = array<i32>} : memref<12x8x128xf32, #tpu.memory_space<vmem>>, vector<1x8x128xf32>,
    %c2_i32 = arith.constant 2 : i32
    %c0_18 = arith.constant 0 : index
    %c0_19 = arith.constant 0 : index
    %28 = vector.load %arg3[%c0_18, %c0_19] : memref<128x128xf32, #tpu.memory_space<vmem>>, vector<128x128xf32>
    %cst_20 = arith.constant dense<0.000000e+00> : vector<8x128xf32>
    %29 = tpu.matmul %23, %28, %cst_20 {dimension_numbers = #tpu.dot_dimension_numbers<[1], [0], [0], [1], [0, 0, 1, 1], [], []>} : vector<8x128xf32>, vector<128x128xf32>, vector<8x128xf32> -> vector<8x128xf32>
    %30 = arith.index_cast %c2_i32 : i32 to index
    %c0_21 = arith.constant 0 : index
    %c0_22 = arith.constant 0 : index
    %31 = vector.load %arg2[%30, %c0_21, %c0_22] : memref<12x8x128xf32, #tpu.memory_space<vmem>>, vector<1x8x128xf32>
    %32 = vector.shape_cast %31 : vector<1x8x128xf32> to vector<8x128xf32>
    %33 = arith.addf %29, %32 : vector<8x128xf32>
    %cst_23 = arith.constant 0.000000e+00 : f32
    %34 = vector.broadcast %cst_23 : f32 to vector<8x128xf32>
    %35 = arith.maximumf %33, %34 : vector<8x128xf32>
    %36 = arith.index_cast %c2_i32 : i32 to index
    %c0_24 = arith.constant 0 : index
    %c0_25 = arith.constant 0 : index
    %37 = vector.load %arg4[%36, %c0_24, %c0_25] : memref<12x8x128xf32, #tpu.memory_space<vmem>>, vector<1x8x128xf32>
    %38 = vector.shape_cast %37 : vector<1x8x128xf32> to vector<8x128xf32>
    %39 = vector.shape_cast %35 : vector<8x128xf32> to vector<1x8x128xf32>
    tpu.vector_store %arg4[%36, %c0_24, %c0_25], %39 {strides = array<i32>} : memref<12x8x128xf32, #tpu.memory_space<vmem>>, vector<1x8x128xf32>,
    %c3_i32 = arith.constant 3 : i32
    %c0_26 = arith.constant 0 : index
    %c0_27 = arith.constant 0 : index
    %40 = vector.load %arg3[%c0_26, %c0_27] : memref<128x128xf32, #tpu.memory_space<vmem>>, vector<128x128xf32>
    %cst_28 = arith.constant dense<0.000000e+00> : vector<8x128xf32>
    %41 = tpu.matmul %35, %40, %cst_28 {dimension_numbers = #tpu.dot_dimension_numbers<[1], [0], [0], [1], [0, 0, 1, 1], [], []>} : vector<8x128xf32>, vector<128x128xf32>, vector<8x128xf32> -> vector<8x128xf32>
    %42 = arith.index_cast %c3_i32 : i32 to index
    %c0_29 = arith.constant 0 : index
    %c0_30 = arith.constant 0 : index
    %43 = vector.load %arg2[%42, %c0_29, %c0_30] : memref<12x8x128xf32, #tpu.memory_space<vmem>>, vector<1x8x128xf32>
    %44 = vector.shape_cast %43 : vector<1x8x128xf32> to vector<8x128xf32>
    %45 = arith.addf %41, %44 : vector<8x128xf32>
    %cst_31 = arith.constant 0.000000e+00 : f32
    %46 = vector.broadcast %cst_31 : f32 to vector<8x128xf32>
    %47 = arith.maximumf %45, %46 : vector<8x128xf32>
    %48 = arith.index_cast %c3_i32 : i32 to index
    %c0_32 = arith.constant 0 : index
    %c0_33 = arith.constant 0 : index
    %49 = vector.load %arg4[%48, %c0_32, %c0_33] : memref<12x8x128xf32, #tpu.memory_space<vmem>>, vector<1x8x128xf32>
    %50 = vector.shape_cast %49 : vector<1x8x128xf32> to vector<8x128xf32>
    %51 = vector.shape_cast %47 : vector<8x128xf32> to vector<1x8x128xf32>
    tpu.vector_store %arg4[%48, %c0_32, %c0_33], %51 {strides = array<i32>} : memref<12x8x128xf32, #tpu.memory_space<vmem>>, vector<1x8x128xf32>,
    %c4_i32 = arith.constant 4 : i32
    %c0_34 = arith.constant 0 : index
    %c0_35 = arith.constant 0 : index
    %52 = vector.load %arg3[%c0_34, %c0_35] : memref<128x128xf32, #tpu.memory_space<vmem>>, vector<128x128xf32>
    %cst_36 = arith.constant dense<0.000000e+00> : vector<8x128xf32>
    %53 = tpu.matmul %47, %52, %cst_36 {dimension_numbers = #tpu.dot_dimension_numbers<[1], [0], [0], [1], [0, 0, 1, 1], [], []>} : vector<8x128xf32>, vector<128x128xf32>, vector<8x128xf32> -> vector<8x128xf32>
    %54 = arith.index_cast %c4_i32 : i32 to index
    %c0_37 = arith.constant 0 : index
    %c0_38 = arith.constant 0 : index
    %55 = vector.load %arg2[%54, %c0_37, %c0_38] : memref<12x8x128xf32, #tpu.memory_space<vmem>>, vector<1x8x128xf32>
    %56 = vector.shape_cast %55 : vector<1x8x128xf32> to vector<8x128xf32>
    %57 = arith.addf %53, %56 : vector<8x128xf32>
    %cst_39 = arith.constant 0.000000e+00 : f32
    %58 = vector.broadcast %cst_39 : f32 to vector<8x128xf32>
    %59 = arith.maximumf %57, %58 : vector<8x128xf32>
    %60 = arith.index_cast %c4_i32 : i32 to index
    %c0_40 = arith.constant 0 : index
    %c0_41 = arith.constant 0 : index
    %61 = vector.load %arg4[%60, %c0_40, %c0_41] : memref<12x8x128xf32, #tpu.memory_space<vmem>>, vector<1x8x128xf32>
    %62 = vector.shape_cast %61 : vector<1x8x128xf32> to vector<8x128xf32>
    %63 = vector.shape_cast %59 : vector<8x128xf32> to vector<1x8x128xf32>
    tpu.vector_store %arg4[%60, %c0_40, %c0_41], %63 {strides = array<i32>} : memref<12x8x128xf32, #tpu.memory_space<vmem>>, vector<1x8x128xf32>,
    %c5_i32 = arith.constant 5 : i32
    %c0_42 = arith.constant 0 : index
    %c0_43 = arith.constant 0 : index
    %64 = vector.load %arg3[%c0_42, %c0_43] : memref<128x128xf32, #tpu.memory_space<vmem>>, vector<128x128xf32>
    %cst_44 = arith.constant dense<0.000000e+00> : vector<8x128xf32>
    %65 = tpu.matmul %59, %64, %cst_44 {dimension_numbers = #tpu.dot_dimension_numbers<[1], [0], [0], [1], [0, 0, 1, 1], [], []>} : vector<8x128xf32>, vector<128x128xf32>, vector<8x128xf32> -> vector<8x128xf32>
    %66 = arith.index_cast %c5_i32 : i32 to index
    %c0_45 = arith.constant 0 : index
    %c0_46 = arith.constant 0 : index
    %67 = vector.load %arg2[%66, %c0_45, %c0_46] : memref<12x8x128xf32, #tpu.memory_space<vmem>>, vector<1x8x128xf32>
    %68 = vector.shape_cast %67 : vector<1x8x128xf32> to vector<8x128xf32>
    %69 = arith.addf %65, %68 : vector<8x128xf32>
    %cst_47 = arith.constant 0.000000e+00 : f32
    %70 = vector.broadcast %cst_47 : f32 to vector<8x128xf32>
    %71 = arith.maximumf %69, %70 : vector<8x128xf32>
    %72 = arith.index_cast %c5_i32 : i32 to index
    %c0_48 = arith.constant 0 : index
    %c0_49 = arith.constant 0 : index
    %73 = vector.load %arg4[%72, %c0_48, %c0_49] : memref<12x8x128xf32, #tpu.memory_space<vmem>>, vector<1x8x128xf32>
    %74 = vector.shape_cast %73 : vector<1x8x128xf32> to vector<8x128xf32>
    %75 = vector.shape_cast %71 : vector<8x128xf32> to vector<1x8x128xf32>
    tpu.vector_store %arg4[%72, %c0_48, %c0_49], %75 {strides = array<i32>} : memref<12x8x128xf32, #tpu.memory_space<vmem>>, vector<1x8x128xf32>,
    %c6_i32 = arith.constant 6 : i32
    %c0_50 = arith.constant 0 : index
    %c0_51 = arith.constant 0 : index
    %76 = vector.load %arg3[%c0_50, %c0_51] : memref<128x128xf32, #tpu.memory_space<vmem>>, vector<128x128xf32>
    %cst_52 = arith.constant dense<0.000000e+00> : vector<8x128xf32>
    %77 = tpu.matmul %71, %76, %cst_52 {dimension_numbers = #tpu.dot_dimension_numbers<[1], [0], [0], [1], [0, 0, 1, 1], [], []>} : vector<8x128xf32>, vector<128x128xf32>, vector<8x128xf32> -> vector<8x128xf32>
    %78 = arith.index_cast %c6_i32 : i32 to index
    %c0_53 = arith.constant 0 : index
    %c0_54 = arith.constant 0 : index
    %79 = vector.load %arg2[%78, %c0_53, %c0_54] : memref<12x8x128xf32, #tpu.memory_space<vmem>>, vector<1x8x128xf32>
    %80 = vector.shape_cast %79 : vector<1x8x128xf32> to vector<8x128xf32>
    %81 = arith.addf %77, %80 : vector<8x128xf32>
    %cst_55 = arith.constant 0.000000e+00 : f32
    %82 = vector.broadcast %cst_55 : f32 to vector<8x128xf32>
    %83 = arith.maximumf %81, %82 : vector<8x128xf32>
    %84 = arith.index_cast %c6_i32 : i32 to index
    %c0_56 = arith.constant 0 : index
    %c0_57 = arith.constant 0 : index
    %85 = vector.load %arg4[%84, %c0_56, %c0_57] : memref<12x8x128xf32, #tpu.memory_space<vmem>>, vector<1x8x128xf32>
    %86 = vector.shape_cast %85 : vector<1x8x128xf32> to vector<8x128xf32>
    %87 = vector.shape_cast %83 : vector<8x128xf32> to vector<1x8x128xf32>
    tpu.vector_store %arg4[%84, %c0_56, %c0_57], %87 {strides = array<i32>} : memref<12x8x128xf32, #tpu.memory_space<vmem>>, vector<1x8x128xf32>,
    %c7_i32 = arith.constant 7 : i32
    %c0_58 = arith.constant 0 : index
    %c0_59 = arith.constant 0 : index
    %88 = vector.load %arg3[%c0_58, %c0_59] : memref<128x128xf32, #tpu.memory_space<vmem>>, vector<128x128xf32>
    %cst_60 = arith.constant dense<0.000000e+00> : vector<8x128xf32>
    %89 = tpu.matmul %83, %88, %cst_60 {dimension_numbers = #tpu.dot_dimension_numbers<[1], [0], [0], [1], [0, 0, 1, 1], [], []>} : vector<8x128xf32>, vector<128x128xf32>, vector<8x128xf32> -> vector<8x128xf32>
    %90 = arith.index_cast %c7_i32 : i32 to index
    %c0_61 = arith.constant 0 : index
    %c0_62 = arith.constant 0 : index
    %91 = vector.load %arg2[%90, %c0_61, %c0_62] : memref<12x8x128xf32, #tpu.memory_space<vmem>>, vector<1x8x128xf32>
    %92 = vector.shape_cast %91 : vector<1x8x128xf32> to vector<8x128xf32>
    %93 = arith.addf %89, %92 : vector<8x128xf32>
    %cst_63 = arith.constant 0.000000e+00 : f32
    %94 = vector.broadcast %cst_63 : f32 to vector<8x128xf32>
    %95 = arith.maximumf %93, %94 : vector<8x128xf32>
    %96 = arith.index_cast %c7_i32 : i32 to index
    %c0_64 = arith.constant 0 : index
    %c0_65 = arith.constant 0 : index
    %97 = vector.load %arg4[%96, %c0_64, %c0_65] : memref<12x8x128xf32, #tpu.memory_space<vmem>>, vector<1x8x128xf32>
    %98 = vector.shape_cast %97 : vector<1x8x128xf32> to vector<8x128xf32>
    %99 = vector.shape_cast %95 : vector<8x128xf32> to vector<1x8x128xf32>
    tpu.vector_store %arg4[%96, %c0_64, %c0_65], %99 {strides = array<i32>} : memref<12x8x128xf32, #tpu.memory_space<vmem>>, vector<1x8x128xf32>,
    %c8_i32 = arith.constant 8 : i32
    %c0_66 = arith.constant 0 : index
    %c0_67 = arith.constant 0 : index
    %100 = vector.load %arg3[%c0_66, %c0_67] : memref<128x128xf32, #tpu.memory_space<vmem>>, vector<128x128xf32>
    %cst_68 = arith.constant dense<0.000000e+00> : vector<8x128xf32>
    %101 = tpu.matmul %95, %100, %cst_68 {dimension_numbers = #tpu.dot_dimension_numbers<[1], [0], [0], [1], [0, 0, 1, 1], [], []>} : vector<8x128xf32>, vector<128x128xf32>, vector<8x128xf32> -> vector<8x128xf32>
    %102 = arith.index_cast %c8_i32 : i32 to index
    %c0_69 = arith.constant 0 : index
    %c0_70 = arith.constant 0 : index
    %103 = vector.load %arg2[%102, %c0_69, %c0_70] : memref<12x8x128xf32, #tpu.memory_space<vmem>>, vector<1x8x128xf32>
    %104 = vector.shape_cast %103 : vector<1x8x128xf32> to vector<8x128xf32>
    %105 = arith.addf %101, %104 : vector<8x128xf32>
    %cst_71 = arith.constant 0.000000e+00 : f32
    %106 = vector.broadcast %cst_71 : f32 to vector<8x128xf32>
    %107 = arith.maximumf %105, %106 : vector<8x128xf32>
    %108 = arith.index_cast %c8_i32 : i32 to index
    %c0_72 = arith.constant 0 : index
    %c0_73 = arith.constant 0 : index
    %109 = vector.load %arg4[%108, %c0_72, %c0_73] : memref<12x8x128xf32, #tpu.memory_space<vmem>>, vector<1x8x128xf32>
    %110 = vector.shape_cast %109 : vector<1x8x128xf32> to vector<8x128xf32>
    %111 = vector.shape_cast %107 : vector<8x128xf32> to vector<1x8x128xf32>
    tpu.vector_store %arg4[%108, %c0_72, %c0_73], %111 {strides = array<i32>} : memref<12x8x128xf32, #tpu.memory_space<vmem>>, vector<1x8x128xf32>,
    %c9_i32 = arith.constant 9 : i32
    %c0_74 = arith.constant 0 : index
    %c0_75 = arith.constant 0 : index
    %112 = vector.load %arg3[%c0_74, %c0_75] : memref<128x128xf32, #tpu.memory_space<vmem>>, vector<128x128xf32>
    %cst_76 = arith.constant dense<0.000000e+00> : vector<8x128xf32>
    %113 = tpu.matmul %107, %112, %cst_76 {dimension_numbers = #tpu.dot_dimension_numbers<[1], [0], [0], [1], [0, 0, 1, 1], [], []>} : vector<8x128xf32>, vector<128x128xf32>, vector<8x128xf32> -> vector<8x128xf32>
    %114 = arith.index_cast %c9_i32 : i32 to index
    %c0_77 = arith.constant 0 : index
    %c0_78 = arith.constant 0 : index
    %115 = vector.load %arg2[%114, %c0_77, %c0_78] : memref<12x8x128xf32, #tpu.memory_space<vmem>>, vector<1x8x128xf32>
    %116 = vector.shape_cast %115 : vector<1x8x128xf32> to vector<8x128xf32>
    %117 = arith.addf %113, %116 : vector<8x128xf32>
    %cst_79 = arith.constant 0.000000e+00 : f32
    %118 = vector.broadcast %cst_79 : f32 to vector<8x128xf32>
    %119 = arith.maximumf %117, %118 : vector<8x128xf32>
    %120 = arith.index_cast %c9_i32 : i32 to index
    %c0_80 = arith.constant 0 : index
    %c0_81 = arith.constant 0 : index
    %121 = vector.load %arg4[%120, %c0_80, %c0_81] : memref<12x8x128xf32, #tpu.memory_space<vmem>>, vector<1x8x128xf32>
    %122 = vector.shape_cast %121 : vector<1x8x128xf32> to vector<8x128xf32>
    %123 = vector.shape_cast %119 : vector<8x128xf32> to vector<1x8x128xf32>
    tpu.vector_store %arg4[%120, %c0_80, %c0_81], %123 {strides = array<i32>} : memref<12x8x128xf32, #tpu.memory_space<vmem>>, vector<1x8x128xf32>,
    %c10_i32 = arith.constant 10 : i32
    %c0_82 = arith.constant 0 : index
    %c0_83 = arith.constant 0 : index
    %124 = vector.load %arg3[%c0_82, %c0_83] : memref<128x128xf32, #tpu.memory_space<vmem>>, vector<128x128xf32>
    %cst_84 = arith.constant dense<0.000000e+00> : vector<8x128xf32>
    %125 = tpu.matmul %119, %124, %cst_84 {dimension_numbers = #tpu.dot_dimension_numbers<[1], [0], [0], [1], [0, 0, 1, 1], [], []>} : vector<8x128xf32>, vector<128x128xf32>, vector<8x128xf32> -> vector<8x128xf32>
    %126 = arith.index_cast %c10_i32 : i32 to index
    %c0_85 = arith.constant 0 : index
    %c0_86 = arith.constant 0 : index
    %127 = vector.load %arg2[%126, %c0_85, %c0_86] : memref<12x8x128xf32, #tpu.memory_space<vmem>>, vector<1x8x128xf32>
    %128 = vector.shape_cast %127 : vector<1x8x128xf32> to vector<8x128xf32>
    %129 = arith.addf %125, %128 : vector<8x128xf32>
    %cst_87 = arith.constant 0.000000e+00 : f32
    %130 = vector.broadcast %cst_87 : f32 to vector<8x128xf32>
    %131 = arith.maximumf %129, %130 : vector<8x128xf32>
    %132 = arith.index_cast %c10_i32 : i32 to index
    %c0_88 = arith.constant 0 : index
    %c0_89 = arith.constant 0 : index
    %133 = vector.load %arg4[%132, %c0_88, %c0_89] : memref<12x8x128xf32, #tpu.memory_space<vmem>>, vector<1x8x128xf32>
    %134 = vector.shape_cast %133 : vector<1x8x128xf32> to vector<8x128xf32>
    %135 = vector.shape_cast %131 : vector<8x128xf32> to vector<1x8x128xf32>
    tpu.vector_store %arg4[%132, %c0_88, %c0_89], %135 {strides = array<i32>} : memref<12x8x128xf32, #tpu.memory_space<vmem>>, vector<1x8x128xf32>,
    %c11_i32 = arith.constant 11 : i32
    %c0_90 = arith.constant 0 : index
    %c0_91 = arith.constant 0 : index
    %136 = vector.load %arg3[%c0_90, %c0_91] : memref<128x128xf32, #tpu.memory_space<vmem>>, vector<128x128xf32>
    %cst_92 = arith.constant dense<0.000000e+00> : vector<8x128xf32>
    %137 = tpu.matmul %131, %136, %cst_92 {dimension_numbers = #tpu.dot_dimension_numbers<[1], [0], [0], [1], [0, 0, 1, 1], [], []>} : vector<8x128xf32>, vector<128x128xf32>, vector<8x128xf32> -> vector<8x128xf32>
    %138 = arith.index_cast %c11_i32 : i32 to index
    %c0_93 = arith.constant 0 : index
    %c0_94 = arith.constant 0 : index
    %139 = vector.load %arg2[%138, %c0_93, %c0_94] : memref<12x8x128xf32, #tpu.memory_space<vmem>>, vector<1x8x128xf32>
    %140 = vector.shape_cast %139 : vector<1x8x128xf32> to vector<8x128xf32>
    %141 = arith.addf %137, %140 : vector<8x128xf32>
    %cst_95 = arith.constant 0.000000e+00 : f32
    %142 = vector.broadcast %cst_95 : f32 to vector<8x128xf32>
    %143 = arith.maximumf %141, %142 : vector<8x128xf32>
    %144 = arith.index_cast %c11_i32 : i32 to index
    %c0_96 = arith.constant 0 : index
    %c0_97 = arith.constant 0 : index
    %145 = vector.load %arg4[%144, %c0_96, %c0_97] : memref<12x8x128xf32, #tpu.memory_space<vmem>>, vector<1x8x128xf32>
    %146 = vector.shape_cast %145 : vector<1x8x128xf32> to vector<8x128xf32>
    %147 = vector.shape_cast %143 : vector<8x128xf32> to vector<1x8x128xf32>
    tpu.vector_store %arg4[%144, %c0_96, %c0_97], %147 {strides = array<i32>} : memref<12x8x128xf32, #tpu.memory_space<vmem>>, vector<1x8x128xf32>,
    %c12_i32 = arith.constant 12 : i32
    %c0_98 = arith.constant 0 : index
    %c0_99 = arith.constant 0 : index
    %148 = vector.load %arg5[%c0_98, %c0_99] : memref<8x128xf32, #tpu.memory_space<vmem>>, vector<8x128xf32>
    tpu.vector_store %arg5[%c0_98, %c0_99], %143 {strides = array<i32>} : memref<8x128xf32, #tpu.memory_space<vmem>>, vector<8x128xf32>,
    return
  }
  func.func @transform_0(%arg0: i32) -> (i32, i32) {
    %c0_i32 = arith.constant 0 : i32
    %c0_i32_0 = arith.constant 0 : i32
    %c0_i32_1 = arith.constant 0 : i32
    return %c0_i32, %c0_i32_0 : i32, i32
  }
  func.func @transform_1(%arg0: i32) -> (i32, i32, i32) {
    %c0_i32 = arith.constant 0 : i32
    %c0_i32_0 = arith.constant 0 : i32
    %c0_i32_1 = arith.constant 0 : i32
    return %arg0, %c0_i32, %c0_i32_0 : i32, i32, i32
  }
  func.func @transform_2(%arg0: i32) -> (i32, i32) {
    %c0_i32 = arith.constant 0 : i32
    %c0_i32_0 = arith.constant 0 : i32
    %c0_i32_1 = arith.constant 0 : i32
    return %c0_i32, %c0_i32_0 : i32, i32
  }
  func.func @transform_3(%arg0: i32) -> (i32, i32, i32) {
    %c0_i32 = arith.constant 0 : i32
    %c0_i32_0 = arith.constant 0 : i32
    %c0_i32_1 = arith.constant 0 : i32
    return %arg0, %c0_i32, %c0_i32_0 : i32, i32, i32
  }
}

</mosaic_0001>

<llo_original>
// kernel: irnn_forward.2
$region0: #{irnn_forward.2}
  #allocation0 [shape = 'u32[]', space=smem, size = 0x4, offset = 0x4, fixed_abs, tag = 'smem constant byte address 0x4 - core index']
  #allocation1 [shape = 'u32[144,128]{1,0:T(1,128)}', space=vmem, size = 0x12000, scoped, tag = 'internal scratch']
  %s0 = inlined_call_operand.hbm [shape: f32[96,128], index: 0, kind: input, shape index: {}]
  %s1 = inlined_call_operand.hbm [shape: f32[128,128], index: 1, kind: input, shape index: {}]
  %s2 = inlined_call_operand.hbm [shape: f32[1,128], index: 2, kind: input, shape index: {}]
  %s3 = inlined_call_operand.hbm [shape: f32[96,128], index: 3, kind: output, shape index: {}]
  %s4 = sld [smem:[#allocation0]]
  $region34: #{irnn_forward.2} parent=0
    _
  %s6 = ssub.s32 1, %s4
  %s7 = scalar_select 0, %s6, %s4
  $region1: #{irnn_forward.2} parent=0
    #allocation2 [shape = 'u8[49152]{0}', space=vmem, size = 0xc000, scoped, tag = 'input window, operand 0, single buffered']
    #allocation3 [shape = 's32[1]{0}', space=sflag, size = 0x4, scoped, tag = 'scoped memory for irnn_forward.2']
    #allocation4 [shape = 's32[1]{0}', space=sflag, size = 0x4, scoped, tag = 'scoped memory for irnn_forward.2']
    #allocation5 [shape = 'u8[65536]{0}', space=vmem, size = 0x10000, scoped, tag = 'input window, operand 1, single buffered']
    #allocation6 [shape = 's32[1]{0}', space=sflag, size = 0x4, scoped, tag = 'scoped memory for irnn_forward.2']
    #allocation7 [shape = 'u8[512]{0}', space=vmem, size = 0x400, scoped, tag = 'input window, operand 2, single buffered']
    #allocation8 [shape = 'u8[49152]{0}', space=vmem, size = 0xc000, scoped, tag = 'output window, operand 0, single buffered']
    %8 = vsyncpa [#allocation3], 0
    %9 = vsyncpa [#allocation6], 0
    %10 = vsyncpa [#allocation4], 0
    // Predicated region
    $region2: #{irnn_forward.2} parent=1 // pred_check
      _
    $region3: #{irnn_forward.2} parent=1 // pred_check_branch
      %12 = sbr.rel (0) target = $region5
    $region4: #{irnn_forward.2} parent=1 // pred_region
      %s14 = ssub.s32 1536, 1536
      %15 = vsyncadd [#allocation3], %s14
      %s16 = sshll.u32 [#allocation2], 4
      %s17 = int_to_ptr.vmem [resolvable:$true] %s16
      %22 = dma.hbm_to_vmem [thread:$0]  %s0, 1536, %s17, [#allocation3], 128, 128, 8
    $region5: #{irnn_forward.2} parent=1 // pred_fallthru
      _
    // Predicated region
    $region6: #{irnn_forward.2} parent=1 // pred_check
      _
    $region7: #{irnn_forward.2} parent=1 // pred_check_branch
      %24 = sbr.rel (0) target = $region9
    $region8: #{irnn_forward.2} parent=1 // pred_region
      %s26 = ssub.s32 2048, 2048
      %27 = vsyncadd [#allocation6], %s26
      %s28 = sshll.u32 [#allocation5], 4
      %s29 = int_to_ptr.vmem [resolvable:$true] %s28
      %34 = dma.hbm_to_vmem [thread:$0]  %s1, 2048, %s29, [#allocation6], 128, 128, 8
    $region9: #{irnn_forward.2} parent=1 // pred_fallthru
      _
    // Predicated region
    $region10: #{irnn_forward.2} parent=1 // pred_check
      _
    $region11: #{irnn_forward.2} parent=1 // pred_check_branch
      %36 = sbr.rel (0) target = $region13
    $region12: #{irnn_forward.2} parent=1 // pred_region
      %s38 = ssub.s32 16, 16
      %39 = vsyncadd [#allocation6], %s38
      %s41 = sshll.u32 [#allocation7], 4
      %s42 = int_to_ptr.vmem [resolvable:$true] %s41
      %44 = dma.hbm_to_vmem [thread:$0]  %s2, 16, %s42, [#allocation6]
    $region13: #{irnn_forward.2} parent=1 // pred_fallthru
      _
    // Predicated region
    $region14: #{irnn_forward.2} parent=1 // pred_check
      _
    $region15: #{irnn_forward.2} parent=1 // pred_check_branch
      %46 = sbr.rel (0) target = $region17
    $region16: #{irnn_forward.2} parent=1 // pred_region
      %47 = dma.done [#allocation3], 1536
    $region17: #{irnn_forward.2} parent=1 // pred_fallthru
      _
    // Predicated region
    $region18: #{irnn_forward.2} parent=1 // pred_check
      _
    $region19: #{irnn_forward.2} parent=1 // pred_check_branch
      %49 = sbr.rel (0) target = $region21
    $region20: #{irnn_forward.2} parent=1 // pred_region
      %50 = dma.done [#allocation6], 2048
    $region21: #{irnn_forward.2} parent=1 // pred_fallthru
      _
    // Predicated region
    $region22: #{irnn_forward.2} parent=1 // pred_check
      _
    $region23: #{irnn_forward.2} parent=1 // pred_check_branch
      %52 = sbr.rel (0) target = $region25
    $region24: #{irnn_forward.2} parent=1 // pred_region
      %53 = dma.done [#allocation6], 16
    $region25: #{irnn_forward.2} parent=1 // pred_fallthru
      _
    %v54 = vld [vmem:[#allocation2] sm:$0xff]
    %v55 = vld [vmem:[#allocation2 + $0x8] sm:$0xff]
    %v56 = vld [vmem:[#allocation2 + $0x10] sm:$0xff]
    %v57 = vld [vmem:[#allocation2 + $0x18] sm:$0xff]
    %v58 = vld [vmem:[#allocation2 + $0x20] sm:$0xff]
    %v59 = vld [vmem:[#allocation2 + $0x28] sm:$0xff]
    %v60 = vld [vmem:[#allocation2 + $0x30] sm:$0xff]
    %v61 = vld [vmem:[#allocation2 + $0x38] sm:$0xff]
    %v62 = vld [vmem:[#allocation2 + $0x40] sm:$0xff]
    %v63 = vld [vmem:[#allocation2 + $0x48] sm:$0xff]
    %v64 = vld [vmem:[#allocation2 + $0x50] sm:$0xff]
    %v65 = vld [vmem:[#allocation2 + $0x58] sm:$0xff]
    %v66 = vld [vmem:[#allocation5] sm:$0xff]
    %v67 = vld [vmem:[#allocation5 + $0x8] sm:$0xff]
    %v68 = vld [vmem:[#allocation5 + $0x10] sm:$0xff]
    %v69 = vld [vmem:[#allocation5 + $0x18] sm:$0xff]
    %v70 = vld [vmem:[#allocation5 + $0x20] sm:$0xff]
    %v71 = vld [vmem:[#allocation5 + $0x28] sm:$0xff]
    %v72 = vld [vmem:[#allocation5 + $0x30] sm:$0xff]
    %v73 = vld [vmem:[#allocation5 + $0x38] sm:$0xff]
    %v74 = vld [vmem:[#allocation5 + $0x40] sm:$0xff]
    %v75 = vld [vmem:[#allocation5 + $0x48] sm:$0xff]
    %v76 = vld [vmem:[#allocation5 + $0x50] sm:$0xff]
    %v77 = vld [vmem:[#allocation5 + $0x58] sm:$0xff]
    %v78 = vld [vmem:[#allocation5 + $0x60] sm:$0xff]
    %v79 = vld [vmem:[#allocation5 + $0x68] sm:$0xff]
    %v80 = vld [vmem:[#allocation5 + $0x70] sm:$0xff]
    %v81 = vld [vmem:[#allocation5 + $0x78] sm:$0xff]
    %v82 = vld [vmem:[#allocation7] sm:$0x1]
    %v84 = vlaneseq
    %v85 = vshrl.u32 %v84, 7
    %v86 = vsub.s32 0, %v85
    %v87 = vrot.slane %v82, %v86
    %89 = vmatprep.subr.mxu0 0.0
    %90 = vmatpush1.msra.mxu0 %v66
    %91 = vmatprep.subr.mxu0 0.0
    %92 = vmatpush1.msra.mxu0 %v67
    %93 = vmatprep.subr.mxu0 0.0
    %94 = vmatpush1.msra.mxu0 %v68
    %95 = vmatprep.subr.mxu0 0.0
    %96 = vmatpush1.msra.mxu0 %v69
    %97 = vmatprep.subr.mxu0 0.0
    %98 = vmatpush1.msra.mxu0 %v70
    %99 = vmatprep.subr.mxu0 0.0
    %100 = vmatpush1.msra.mxu0 %v71
    %101 = vmatprep.subr.mxu0 0.0
    %102 = vmatpush1.msra.mxu0 %v72
    %103 = vmatprep.subr.mxu0 0.0
    %104 = vmatpush1.msra.mxu0 %v73
    %105 = vmatprep.subr.mxu0 0.0
    %106 = vmatpush1.msra.mxu0 %v74
    %107 = vmatprep.subr.mxu0 0.0
    %108 = vmatpush1.msra.mxu0 %v75
    %109 = vmatprep.subr.mxu0 0.0
    %110 = vmatpush1.msra.mxu0 %v76
    %111 = vmatprep.subr.mxu0 0.0
    %112 = vmatpush1.msra.mxu0 %v77
    %113 = vmatprep.subr.mxu0 0.0
    %114 = vmatpush1.msra.mxu0 %v78
    %115 = vmatprep.subr.mxu0 0.0
    %116 = vmatpush1.msra.mxu0 %v79
    %117 = vmatprep.subr.mxu0 0.0
    %118 = vmatpush1.msra.mxu0 %v80
    %119 = vmatprep.subr.mxu0 0.0
    %120 = vmatpush1.msra.mxu0 %v81
    %121 = vmatprep.subr.mxu0 0.0
    %122 = vmatpush1.msra.mxu0 0.0
    %123 = vmatprep.subr.mxu0 0.0
    %124 = vmatpush1.msra.mxu0 0.0
    %125 = vmatprep.subr.mxu0 0.0
    %126 = vmatpush1.msra.mxu0 0.0
    %127 = vmatprep.subr.mxu0 0.0
    %128 = vmatpush1.msra.mxu0 0.0
    %129 = vmatprep.subr.mxu0 0.0
    %130 = vmatpush1.msra.mxu0 0.0
    %131 = vmatprep.subr.mxu0 0.0
    %132 = vmatpush1.msra.mxu0 0.0
    %133 = vmatprep.subr.mxu0 0.0
    %134 = vmatpush1.msra.mxu0 0.0
    %135 = vmatprep.subr.mxu0 0.0
    %136 = vmatpush1.msra.mxu0 0.0
    %137 = vmatprep.subr.mxu0 0.0
    %138 = vmatpush1.msra.mxu0 0.0
    %139 = vmatprep.subr.mxu0 0.0
    %140 = vmatpush1.msra.mxu0 0.0
    %141 = vmatprep.subr.mxu0 0.0
    %142 = vmatpush1.msra.mxu0 0.0
    %143 = vmatprep.subr.mxu0 0.0
    %144 = vmatpush1.msra.mxu0 0.0
    %145 = vmatprep.subr.mxu0 0.0
    %146 = vmatpush1.msra.mxu0 0.0
    %147 = vmatprep.subr.mxu0 0.0
    %148 = vmatpush1.msra.mxu0 0.0
    %149 = vmatprep.subr.mxu0 0.0
    %150 = vmatpush1.msra.mxu0 0.0
    %151 = vmatprep.subr.mxu0 0.0
    %152 = vmatpush1.msra.mxu0 0.0
    %153 = vmatprep.mubr.f32.mxu0 0.0
    %154 = vmatmul.mubr.f32.gmra.mrb[0].mxu0 %v54
    %v155 = vpop.f32.mrb[0].mxu0
    %v156 = vadd.f32 %v87, %v155
    %v157 = vpop.f32.mrb[0].mxu0
    %158 = vmatprep.mubr.f32.mxu0 0.0
    %159 = vmatmul.mubr.f32.gmra.mrb[0].mxu0 %v55
    %v160 = vpop.f32.mrb[0].mxu0
    %v161 = vadd.f32 %v87, %v160
    %v162 = vpop.f32.mrb[0].mxu0
    %163 = vmatprep.mubr.f32.mxu0 0.0
    %164 = vmatmul.mubr.f32.gmra.mrb[0].mxu0 %v56
    %v165 = vpop.f32.mrb[0].mxu0
    %v166 = vadd.f32 %v87, %v165
    %v167 = vpop.f32.mrb[0].mxu0
    %168 = vmatprep.mubr.f32.mxu0 0.0
    %169 = vmatmul.mubr.f32.gmra.mrb[0].mxu0 %v57
    %v170 = vpop.f32.mrb[0].mxu0
    %v171 = vadd.f32 %v87, %v170
    %v172 = vpop.f32.mrb[0].mxu0
    %173 = vmatprep.mubr.f32.mxu0 0.0
    %174 = vmatmul.mubr.f32.gmra.mrb[0].mxu0 %v58
    %v175 = vpop.f32.mrb[0].mxu0
    %v176 = vadd.f32 %v87, %v175
    %v177 = vpop.f32.mrb[0].mxu0
    %178 = vmatprep.mubr.f32.mxu0 0.0
    %179 = vmatmul.mubr.f32.gmra.mrb[0].mxu0 %v59
    %v180 = vpop.f32.mrb[0].mxu0
    %v181 = vadd.f32 %v87, %v180
    %v182 = vpop.f32.mrb[0].mxu0
    %183 = vmatprep.mubr.f32.mxu0 0.0
    %184 = vmatmul.mubr.f32.gmra.mrb[0].mxu0 %v60
    %v185 = vpop.f32.mrb[0].mxu0
    %v186 = vadd.f32 %v87, %v185
    %v187 = vpop.f32.mrb[0].mxu0
    %188 = vmatprep.mubr.f32.mxu0 0.0
    %189 = vmatmul.mubr.f32.gmra.mrb[0].mxu0 %v61
    %v190 = vpop.f32.mrb[0].mxu0
    %v191 = vadd.f32 %v87, %v190
    %v192 = vpop.f32.mrb[0].mxu0
    %193 = vmatprep.mubr.f32.mxu0 0.0
    %194 = vmatmul.mubr.f32.gmra.mrb[0].mxu0 %v62
    %v195 = vpop.f32.mrb[0].mxu0
    %v196 = vadd.f32 %v87, %v195
    %v197 = vpop.f32.mrb[0].mxu0
    %198 = vmatprep.mubr.f32.mxu0 0.0
    %199 = vmatmul.mubr.f32.gmra.mrb[0].mxu0 %v63
    %v200 = vpop.f32.mrb[0].mxu0
    %v201 = vadd.f32 %v87, %v200
    %v202 = vpop.f32.mrb[0].mxu0
    %203 = vmatprep.mubr.f32.mxu0 0.0
    %204 = vmatmul.mubr.f32.gmra.mrb[0].mxu0 %v64
    %v205 = vpop.f32.mrb[0].mxu0
    %v206 = vadd.f32 %v87, %v205
    %v207 = vpop.f32.mrb[0].mxu0
    %208 = vmatprep.mubr.f32.mxu0 0.0
    %209 = vmatmul.mubr.f32.gmra.mrb[0].mxu0 %v65
    %v210 = vpop.f32.mrb[0].mxu0
    %v211 = vadd.f32 %v87, %v210
    %v212 = vpop.f32.mrb[0].mxu0
    %213 = vdwg.mxu0
    %214 = vst [vmem:[#allocation8] sm:$0xff] %v156
    %215 = vst [vmem:[#allocation8 + $0x8] sm:$0xff] %v161
    %216 = vst [vmem:[#allocation8 + $0x10] sm:$0xff] %v166
    %217 = vst [vmem:[#allocation8 + $0x18] sm:$0xff] %v171
    %218 = vst [vmem:[#allocation8 + $0x20] sm:$0xff] %v176
    %219 = vst [vmem:[#allocation8 + $0x28] sm:$0xff] %v181
    %220 = vst [vmem:[#allocation8 + $0x30] sm:$0xff] %v186
    %221 = vst [vmem:[#allocation8 + $0x38] sm:$0xff] %v191
    %222 = vst [vmem:[#allocation8 + $0x40] sm:$0xff] %v196
    %223 = vst [vmem:[#allocation8 + $0x48] sm:$0xff] %v201
    %224 = vst [vmem:[#allocation8 + $0x50] sm:$0xff] %v206
    %225 = vst [vmem:[#allocation8 + $0x58] sm:$0xff] %v211
    // Predicated region
    $region26: #{irnn_forward.2} parent=1 // pred_check
      _
    $region27: #{irnn_forward.2} parent=1 // pred_check_branch
      %227 = sbr.rel (0) target = $region29
    $region28: #{irnn_forward.2} parent=1 // pred_region
      %s229 = ssub.s32 1536, 1536
      %230 = vsyncadd [#allocation4], %s229
      %s231 = sshll.u32 [#allocation8], 4
      %s232 = int_to_ptr.vmem [resolvable:$true] %s231
      %237 = dma.vmem_to_hbm [thread:$0]  %s232, 1536, %s3, [#allocation4], 128, 128, 8
    $region29: #{irnn_forward.2} parent=1 // pred_fallthru
      _
    // Predicated region
    $region30: #{irnn_forward.2} parent=1 // pred_check
      _
    $region31: #{irnn_forward.2} parent=1 // pred_check_branch
      %239 = sbr.rel (0) target = $region33
    $region32: #{irnn_forward.2} parent=1 // pred_region
      %240 = dma.done [#allocation4], 1536
    $region33: #{irnn_forward.2} parent=1 // pred_fallthru
      _
    %241 = vsyncpa [#allocation3], 1
    %242 = vsyncpa [#allocation6], 1
    %243 = vsyncpa [#allocation4], 1

// kernel: irnn_forward.3
$region0: #{irnn_forward.3}
  #allocation0 [shape = 'u32[]', space=smem, size = 0x4, offset = 0x4, fixed_abs, tag = 'smem constant byte address 0x4 - core index']
  #allocation1 [shape = 'u32[144,128]{1,0:T(1,128)}', space=vmem, size = 0x12000, scoped, tag = 'internal scratch']
  #allocation2 [shape = 'f32[8,128]{1,0:T(8,128)}', space=vmem, size = 0x1000, scoped, tag = 'scratch operand']
  %s0 = inlined_call_operand.hbm [shape: f32[8,128], index: 0, kind: input, shape index: {}]
  %s1 = inlined_call_operand.hbm [shape: f32[12,8,128], index: 1, kind: input, shape index: {}]
  %s2 = inlined_call_operand.hbm [shape: f32[128,128], index: 2, kind: input, shape index: {}]
  %s3 = inlined_call_operand.hbm [shape: f32[12,8,128], index: 3, kind: output, shape index: {}]
  %s4 = sld [smem:[#allocation0]]
  $region38: #{irnn_forward.3} parent=0
    _
  %s6 = ssub.s32 1, %s4
  %s7 = scalar_select 0, %s6, %s4
  $region1: #{irnn_forward.3} parent=0
    #allocation3 [shape = 'u8[4096]{0}', space=vmem, size = 0x1000, scoped, tag = 'input window, operand 0, single buffered']
    #allocation4 [shape = 's32[1]{0}', space=sflag, size = 0x4, scoped, tag = 'scoped memory for irnn_forward.3']
    #allocation5 [shape = 's32[1]{0}', space=sflag, size = 0x4, scoped, tag = 'scoped memory for irnn_forward.3']
    #allocation6 [shape = 'u8[49152]{0}', space=vmem, size = 0xc000, scoped, tag = 'input window, operand 1, single buffered']
    #allocation7 [shape = 's32[1]{0}', space=sflag, size = 0x4, scoped, tag = 'scoped memory for irnn_forward.3']
    #allocation8 [shape = 'u8[65536]{0}', space=vmem, size = 0x10000, scoped, tag = 'input window, operand 2, single buffered']
    #allocation9 [shape = 'u8[49152]{0}', space=vmem, size = 0xc000, scoped, tag = 'output window, operand 0, single buffered']
    %8 = vsyncpa [#allocation4], 0
    %9 = vsyncpa [#allocation7], 0
    %10 = vsyncpa [#allocation5], 0
    // Predicated region
    $region2: #{irnn_forward.3} parent=1 // pred_check
      _
    $region3: #{irnn_forward.3} parent=1 // pred_check_branch
      %12 = sbr.rel (0) target = $region5
    $region4: #{irnn_forward.3} parent=1 // pred_region
      %s14 = ssub.s32 128, 128
      %15 = vsyncadd [#allocation4], %s14
      %s17 = sshll.u32 [#allocation3], 4
      %s18 = int_to_ptr.vmem [resolvable:$true] %s17
      %20 = dma.hbm_to_vmem [thread:$0]  %s0, 128, %s18, [#allocation4]
    $region5: #{irnn_forward.3} parent=1 // pred_fallthru
      _
    // Predicated region
    $region6: #{irnn_forward.3} parent=1 // pred_check
      _
    $region7: #{irnn_forward.3} parent=1 // pred_check_branch
      %22 = sbr.rel (0) target = $region9
    $region8: #{irnn_forward.3} parent=1 // pred_region
      %s24 = ssub.s32 1536, 1536
      %25 = vsyncadd [#allocation7], %s24
      %s26 = sshll.u32 [#allocation6], 4
      %s27 = int_to_ptr.vmem [resolvable:$true] %s26
      %32 = dma.hbm_to_vmem [thread:$0]  %s1, 1536, %s27, [#allocation7], 128, 128, 8
    $region9: #{irnn_forward.3} parent=1 // pred_fallthru
      _
    // Predicated region
    $region10: #{irnn_forward.3} parent=1 // pred_check
      _
    $region11: #{irnn_forward.3} parent=1 // pred_check_branch
      %34 = sbr.rel (0) target = $region13
    $region12: #{irnn_forward.3} parent=1 // pred_region
      %s36 = ssub.s32 2048, 2048
      %37 = vsyncadd [#allocation7], %s36
      %s38 = sshll.u32 [#allocation8], 4
      %s39 = int_to_ptr.vmem [resolvable:$true] %s38
      %44 = dma.hbm_to_vmem [thread:$0]  %s2, 2048, %s39, [#allocation7], 128, 128, 8
    $region13: #{irnn_forward.3} parent=1 // pred_fallthru
      _
    // Predicated region
    $region14: #{irnn_forward.3} parent=1 // pred_check
      _
    $region15: #{irnn_forward.3} parent=1 // pred_check_branch
      %46 = sbr.rel (0) target = $region17
    $region16: #{irnn_forward.3} parent=1 // pred_region
      %47 = dma.done [#allocation4], 128
    $region17: #{irnn_forward.3} parent=1 // pred_fallthru
      _
    // Predicated region
    $region18: #{irnn_forward.3} parent=1 // pred_check
      _
    $region19: #{irnn_forward.3} parent=1 // pred_check_branch
      %49 = sbr.rel (0) target = $region21
    $region20: #{irnn_forward.3} parent=1 // pred_region
      %50 = dma.done [#allocation7], 1536
    $region21: #{irnn_forward.3} parent=1 // pred_fallthru
      _
    // Predicated region
    $region22: #{irnn_forward.3} parent=1 // pred_check
      _
    $region23: #{irnn_forward.3} parent=1 // pred_check_branch
      %52 = sbr.rel (0) target = $region25
    $region24: #{irnn_forward.3} parent=1 // pred_region
      %53 = dma.done [#allocation7], 2048
    $region25: #{irnn_forward.3} parent=1 // pred_fallthru
      _
    %p54 = scmp.eq.s32.totalorder 0, 0
    // Predicated region
    $region26: #{irnn_forward.3} parent=1 // pred_check
      %p55 = pneg %p54
    $region27: #{irnn_forward.3} parent=1 // pred_check_branch
      %57 = sbr.rel (%p55) target = $region29
    $region28: #{irnn_forward.3} parent=1 // pred_region
      %v58 = vld [vmem:[#allocation3] sm:$0xff]
      %59 = vst [vmem:[#allocation2] sm:$0xff] %v58
    $region29: #{irnn_forward.3} parent=1 // pred_fallthru
      _
    %v60 = vld [vmem:[#allocation2] sm:$0xff]
    %v61 = vld [vmem:[#allocation8] sm:$0xff]
    %v62 = vld [vmem:[#allocation8 + $0x8] sm:$0xff]
    %v63 = vld [vmem:[#allocation8 + $0x10] sm:$0xff]
    %v64 = vld [vmem:[#allocation8 + $0x18] sm:$0xff]
    %v65 = vld [vmem:[#allocation8 + $0x20] sm:$0xff]
    %v66 = vld [vmem:[#allocation8 + $0x28] sm:$0xff]
    %v67 = vld [vmem:[#allocation8 + $0x30] sm:$0xff]
    %v68 = vld [vmem:[#allocation8 + $0x38] sm:$0xff]
    %v69 = vld [vmem:[#allocation8 + $0x40] sm:$0xff]
    %v70 = vld [vmem:[#allocation8 + $0x48] sm:$0xff]
    %v71 = vld [vmem:[#allocation8 + $0x50] sm:$0xff]
    %v72 = vld [vmem:[#allocation8 + $0x58] sm:$0xff]
    %v73 = vld [vmem:[#allocation8 + $0x60] sm:$0xff]
    %v74 = vld [vmem:[#allocation8 + $0x68] sm:$0xff]
    %v75 = vld [vmem:[#allocation8 + $0x70] sm:$0xff]
    %v76 = vld [vmem:[#allocation8 + $0x78] sm:$0xff]
    %v77 = vld [vmem:[#allocation6] sm:$0xff]
    %78 = vmatprep.subr.mxu0 0.0
    %79 = vmatpush1.msra.mxu0 %v61
    %80 = vmatprep.subr.mxu0 0.0
    %81 = vmatpush1.msra.mxu0 %v62
    %82 = vmatprep.subr.mxu0 0.0
    %83 = vmatpush1.msra.mxu0 %v63
    %84 = vmatprep.subr.mxu0 0.0
    %85 = vmatpush1.msra.mxu0 %v64
    %86 = vmatprep.subr.mxu0 0.0
    %87 = vmatpush1.msra.mxu0 %v65
    %88 = vmatprep.subr.mxu0 0.0
    %89 = vmatpush1.msra.mxu0 %v66
    %90 = vmatprep.subr.mxu0 0.0
    %91 = vmatpush1.msra.mxu0 %v67
    %92 = vmatprep.subr.mxu0 0.0
    %93 = vmatpush1.msra.mxu0 %v68
    %94 = vmatprep.subr.mxu0 0.0
    %95 = vmatpush1.msra.mxu0 %v69
    %96 = vmatprep.subr.mxu0 0.0
    %97 = vmatpush1.msra.mxu0 %v70
    %98 = vmatprep.subr.mxu0 0.0
    %99 = vmatpush1.msra.mxu0 %v71
    %100 = vmatprep.subr.mxu0 0.0
    %101 = vmatpush1.msra.mxu0 %v72
    %102 = vmatprep.subr.mxu0 0.0
    %103 = vmatpush1.msra.mxu0 %v73
    %104 = vmatprep.subr.mxu0 0.0
    %105 = vmatpush1.msra.mxu0 %v74
    %106 = vmatprep.subr.mxu0 0.0
    %107 = vmatpush1.msra.mxu0 %v75
    %108 = vmatprep.subr.mxu0 0.0
    %109 = vmatpush1.msra.mxu0 %v76
    %110 = vmatprep.subr.mxu0 0.0
    %111 = vmatpush1.msra.mxu0 0.0
    %112 = vmatprep.subr.mxu0 0.0
    %113 = vmatpush1.msra.mxu0 0.0
    %114 = vmatprep.subr.mxu0 0.0
    %115 = vmatpush1.msra.mxu0 0.0
    %116 = vmatprep.subr.mxu0 0.0
    %117 = vmatpush1.msra.mxu0 0.0
    %118 = vmatprep.subr.mxu0 0.0
    %119 = vmatpush1.msra.mxu0 0.0
    %120 = vmatprep.subr.mxu0 0.0
    %121 = vmatpush1.msra.mxu0 0.0
    %122 = vmatprep.subr.mxu0 0.0
    %123 = vmatpush1.msra.mxu0 0.0
    %124 = vmatprep.subr.mxu0 0.0
    %125 = vmatpush1.msra.mxu0 0.0
    %126 = vmatprep.subr.mxu0 0.0
    %127 = vmatpush1.msra.mxu0 0.0
    %128 = vmatprep.subr.mxu0 0.0
    %129 = vmatpush1.msra.mxu0 0.0
    %130 = vmatprep.subr.mxu0 0.0
    %131 = vmatpush1.msra.mxu0 0.0
    %132 = vmatprep.subr.mxu0 0.0
    %133 = vmatpush1.msra.mxu0 0.0
    %134 = vmatprep.subr.mxu0 0.0
    %135 = vmatpush1.msra.mxu0 0.0
    %136 = vmatprep.subr.mxu0 0.0
    %137 = vmatpush1.msra.mxu0 0.0
    %138 = vmatprep.subr.mxu0 0.0
    %139 = vmatpush1.msra.mxu0 0.0
    %140 = vmatprep.subr.mxu0 0.0
    %141 = vmatpush1.msra.mxu0 0.0
    %142 = vmatprep.mubr.f32.mxu0 0.0
    %143 = vmatmul.mubr.f32.gmra.mrb[0].mxu0 %v60
    %v144 = vpop.f32.mrb[0].mxu0
    %v145 = vadd.f32 %v77, %v144
    %v146 = vpop.f32.mrb[0].mxu0
    %147 = vdwg.mxu0
    %v148 = vmax.f32 %v145, 0.0
    %149 = vst [vmem:[#allocation9] sm:$0xff] %v148
    %v150 = vld [vmem:[#allocation8] sm:$0xff]
    %v151 = vld [vmem:[#allocation8 + $0x8] sm:$0xff]
    %v152 = vld [vmem:[#allocation8 + $0x10] sm:$0xff]
    %v153 = vld [vmem:[#allocation8 + $0x18] sm:$0xff]
    %v154 = vld [vmem:[#allocation8 + $0x20] sm:$0xff]
    %v155 = vld [vmem:[#allocation8 + $0x28] sm:$0xff]
    %v156 = vld [vmem:[#allocation8 + $0x30] sm:$0xff]
    %v157 = vld [vmem:[#allocation8 + $0x38] sm:$0xff]
    %v158 = vld [vmem:[#allocation8 + $0x40] sm:$0xff]
    %v159 = vld [vmem:[#allocation8 + $0x48] sm:$0xff]
    %v160 = vld [vmem:[#allocation8 + $0x50] sm:$0xff]
    %v161 = vld [vmem:[#allocation8 + $0x58] sm:$0xff]
    %v162 = vld [vmem:[#allocation8 + $0x60] sm:$0xff]
    %v163 = vld [vmem:[#allocation8 + $0x68] sm:$0xff]
    %v164 = vld [vmem:[#allocation8 + $0x70] sm:$0xff]
    %v165 = vld [vmem:[#allocation8 + $0x78] sm:$0xff]
    %s166 = scalar_lea.vmem [#allocation6], 8
    %v167 = vld [vmem:[%s166] sm:$0xff]
    %168 = vmatprep.subr.mxu0 0.0
    %169 = vmatpush1.msra.mxu0 %v150
    %170 = vmatprep.subr.mxu0 0.0
    %171 = vmatpush1.msra.mxu0 %v151
    %172 = vmatprep.subr.mxu0 0.0
    %173 = vmatpush1.msra.mxu0 %v152
    %174 = vmatprep.subr.mxu0 0.0
    %175 = vmatpush1.msra.mxu0 %v153
    %176 = vmatprep.subr.mxu0 0.0
    %177 = vmatpush1.msra.mxu0 %v154
    %178 = vmatprep.subr.mxu0 0.0
    %179 = vmatpush1.msra.mxu0 %v155
    %180 = vmatprep.subr.mxu0 0.0
    %181 = vmatpush1.msra.mxu0 %v156
    %182 = vmatprep.subr.mxu0 0.0
    %183 = vmatpush1.msra.mxu0 %v157
    %184 = vmatprep.subr.mxu0 0.0
    %185 = vmatpush1.msra.mxu0 %v158
    %186 = vmatprep.subr.mxu0 0.0
    %187 = vmatpush1.msra.mxu0 %v159
    %188 = vmatprep.subr.mxu0 0.0
    %189 = vmatpush1.msra.mxu0 %v160
    %190 = vmatprep.subr.mxu0 0.0
    %191 = vmatpush1.msra.mxu0 %v161
    %192 = vmatprep.subr.mxu0 0.0
    %193 = vmatpush1.msra.mxu0 %v162
    %194 = vmatprep.subr.mxu0 0.0
    %195 = vmatpush1.msra.mxu0 %v163
    %196 = vmatprep.subr.mxu0 0.0
    %197 = vmatpush1.msra.mxu0 %v164
    %198 = vmatprep.subr.mxu0 0.0
    %199 = vmatpush1.msra.mxu0 %v165
    %200 = vmatprep.subr.mxu0 0.0
    %201 = vmatpush1.msra.mxu0 0.0
    %202 = vmatprep.subr.mxu0 0.0
    %203 = vmatpush1.msra.mxu0 0.0
    %204 = vmatprep.subr.mxu0 0.0
    %205 = vmatpush1.msra.mxu0 0.0
    %206 = vmatprep.subr.mxu0 0.0
    %207 = vmatpush1.msra.mxu0 0.0
    %208 = vmatprep.subr.mxu0 0.0
    %209 = vmatpush1.msra.mxu0 0.0
    %210 = vmatprep.subr.mxu0 0.0
    %211 = vmatpush1.msra.mxu0 0.0
    %212 = vmatprep.subr.mxu0 0.0
    %213 = vmatpush1.msra.mxu0 0.0
    %214 = vmatprep.subr.mxu0 0.0
    %215 = vmatpush1.msra.mxu0 0.0
    %216 = vmatprep.subr.mxu0 0.0
    %217 = vmatpush1.msra.mxu0 0.0
    %218 = vmatprep.subr.mxu0 0.0
    %219 = vmatpush1.msra.mxu0 0.0
    %220 = vmatprep.subr.mxu0 0.0
    %221 = vmatpush1.msra.mxu0 0.0
    %222 = vmatprep.subr.mxu0 0.0
    %223 = vmatpush1.msra.mxu0 0.0
    %224 = vmatprep.subr.mxu0 0.0
    %225 = vmatpush1.msra.mxu0 0.0
    %226 = vmatprep.subr.mxu0 0.0
    %227 = vmatpush1.msra.mxu0 0.0
    %228 = vmatprep.subr.mxu0 0.0
    %229 = vmatpush1.msra.mxu0 0.0
    %230 = vmatprep.subr.mxu0 0.0
    %231 = vmatpush1.msra.mxu0 0.0
    %232 = vmatprep.mubr.f32.mxu0 0.0
    %233 = vmatmul.mubr.f32.gmra.mrb[0].mxu0 %v148
    %v234 = vpop.f32.mrb[0].mxu0
    %v235 = vadd.f32 %v167, %v234
    %v236 = vpop.f32.mrb[0].mxu0
    %237 = vdwg.mxu0
    %v238 = vmax.f32 %v235, 0.0
    %s239 = scalar_lea.vmem [#allocation9], 8
    %240 = vst [vmem:[%s239] sm:$0xff] %v238
    %v241 = vld [vmem:[#allocation8] sm:$0xff]
    %v242 = vld [vmem:[#allocation8 + $0x8] sm:$0xff]
    %v243 = vld [vmem:[#allocation8 + $0x10] sm:$0xff]
    %v244 = vld [vmem:[#allocation8 + $0x18] sm:$0xff]
    %v245 = vld [vmem:[#allocation8 + $0x20] sm:$0xff]
    %v246 = vld [vmem:[#allocation8 + $0x28] sm:$0xff]
    %v247 = vld [vmem:[#allocation8 + $0x30] sm:$0xff]
    %v248 = vld [vmem:[#allocation8 + $0x38] sm:$0xff]
    %v249 = vld [vmem:[#allocation8 + $0x40] sm:$0xff]
    %v250 = vld [vmem:[#allocation8 + $0x48] sm:$0xff]
    %v251 = vld [vmem:[#allocation8 + $0x50] sm:$0xff]
    %v252 = vld [vmem:[#allocation8 + $0x58] sm:$0xff]
    %v253 = vld [vmem:[#allocation8 + $0x60] sm:$0xff]
    %v254 = vld [vmem:[#allocation8 + $0x68] sm:$0xff]
    %v255 = vld [vmem:[#allocation8 + $0x70] sm:$0xff]
    %v256 = vld [vmem:[#allocation8 + $0x78] sm:$0xff]
    %s257 = scalar_lea.vmem [#allocation6], 16
    %v258 = vld [vmem:[%s257] sm:$0xff]
    %259 = vmatprep.subr.mxu0 0.0
    %260 = vmatpush1.msra.mxu0 %v241
    %261 = vmatprep.subr.mxu0 0.0
    %262 = vmatpush1.msra.mxu0 %v242
    %263 = vmatprep.subr.mxu0 0.0
    %264 = vmatpush1.msra.mxu0 %v243
    %265 = vmatprep.subr.mxu0 0.0
    %266 = vmatpush1.msra.mxu0 %v244
    %267 = vmatprep.subr.mxu0 0.0
    %268 = vmatpush1.msra.mxu0 %v245
    %269 = vmatprep.subr.mxu0 0.0
    %270 = vmatpush1.msra.mxu0 %v246
    %271 = vmatprep.subr.mxu0 0.0
    %272 = vmatpush1.msra.mxu0 %v247
    %273 = vmatprep.subr.mxu0 0.0
    %274 = vmatpush1.msra.mxu0 %v248
    %275 = vmatprep.subr.mxu0 0.0
    %276 = vmatpush1.msra.mxu0 %v249
    %277 = vmatprep.subr.mxu0 0.0
    %278 = vmatpush1.msra.mxu0 %v250
    %279 = vmatprep.subr.mxu0 0.0
    %280 = vmatpush1.msra.mxu0 %v251
    %281 = vmatprep.subr.mxu0 0.0
    %282 = vmatpush1.msra.mxu0 %v252
    %283 = vmatprep.subr.mxu0 0.0
    %284 = vmatpush1.msra.mxu0 %v253
    %285 = vmatprep.subr.mxu0 0.0
    %286 = vmatpush1.msra.mxu0 %v254
    %287 = vmatprep.subr.mxu0 0.0
    %288 = vmatpush1.msra.mxu0 %v255
    %289 = vmatprep.subr.mxu0 0.0
    %290 = vmatpush1.msra.mxu0 %v256
    %291 = vmatprep.subr.mxu0 0.0
    %292 = vmatpush1.msra.mxu0 0.0
    %293 = vmatprep.subr.mxu0 0.0
    %294 = vmatpush1.msra.mxu0 0.0
    %295 = vmatprep.subr.mxu0 0.0
    %296 = vmatpush1.msra.mxu0 0.0
    %297 = vmatprep.subr.mxu0 0.0
    %298 = vmatpush1.msra.mxu0 0.0
    %299 = vmatprep.subr.mxu0 0.0
    %300 = vmatpush1.msra.mxu0 0.0
    %301 = vmatprep.subr.mxu0 0.0
    %302 = vmatpush1.msra.mxu0 0.0
    %303 = vmatprep.subr.mxu0 0.0
    %304 = vmatpush1.msra.mxu0 0.0
    %305 = vmatprep.subr.mxu0 0.0
    %306 = vmatpush1.msra.mxu0 0.0
    %307 = vmatprep.subr.mxu0 0.0
    %308 = vmatpush1.msra.mxu0 0.0
    %309 = vmatprep.subr.mxu0 0.0
    %310 = vmatpush1.msra.mxu0 0.0
    %311 = vmatprep.subr.mxu0 0.0
    %312 = vmatpush1.msra.mxu0 0.0
    %313 = vmatprep.subr.mxu0 0.0
    %314 = vmatpush1.msra.mxu0 0.0
    %315 = vmatprep.subr.mxu0 0.0
    %316 = vmatpush1.msra.mxu0 0.0
    %317 = vmatprep.subr.mxu0 0.0
    %318 = vmatpush1.msra.mxu0 0.0
    %319 = vmatprep.subr.mxu0 0.0
    %320 = vmatpush1.msra.mxu0 0.0
    %321 = vmatprep.subr.mxu0 0.0
    %322 = vmatpush1.msra.mxu0 0.0
    %323 = vmatprep.mubr.f32.mxu0 0.0
    %324 = vmatmul.mubr.f32.gmra.mrb[0].mxu0 %v238
    %v325 = vpop.f32.mrb[0].mxu0
    %v326 = vadd.f32 %v258, %v325
    %v327 = vpop.f32.mrb[0].mxu0
    %328 = vdwg.mxu0
    %v329 = vmax.f32 %v326, 0.0
    %s330 = scalar_lea.vmem [#allocation9], 16
    %331 = vst [vmem:[%s330] sm:$0xff] %v329
    %v332 = vld [vmem:[#allocation8] sm:$0xff]
    %v333 = vld [vmem:[#allocation8 + $0x8] sm:$0xff]
    %v334 = vld [vmem:[#allocation8 + $0x10] sm:$0xff]
    %v335 = vld [vmem:[#allocation8 + $0x18] sm:$0xff]
    %v336 = vld [vmem:[#allocation8 + $0x20] sm:$0xff]
    %v337 = vld [vmem:[#allocation8 + $0x28] sm:$0xff]
    %v338 = vld [vmem:[#allocation8 + $0x30] sm:$0xff]
    %v339 = vld [vmem:[#allocation8 + $0x38] sm:$0xff]
    %v340 = vld [vmem:[#allocation8 + $0x40] sm:$0xff]
    %v341 = vld [vmem:[#allocation8 + $0x48] sm:$0xff]
    %v342 = vld [vmem:[#allocation8 + $0x50] sm:$0xff]
    %v343 = vld [vmem:[#allocation8 + $0x58] sm:$0xff]
    %v344 = vld [vmem:[#allocation8 + $0x60] sm:$0xff]
    %v345 = vld [vmem:[#allocation8 + $0x68] sm:$0xff]
    %v346 = vld [vmem:[#allocation8 + $0x70] sm:$0xff]
    %v347 = vld [vmem:[#allocation8 + $0x78] sm:$0xff]
    %s348 = scalar_lea.vmem [#allocation6], 24
    %v349 = vld [vmem:[%s348] sm:$0xff]
    %350 = vmatprep.subr.mxu0 0.0
    %351 = vmatpush1.msra.mxu0 %v332
    %352 = vmatprep.subr.mxu0 0.0
    %353 = vmatpush1.msra.mxu0 %v333
    %354 = vmatprep.subr.mxu0 0.0
    %355 = vmatpush1.msra.mxu0 %v334
    %356 = vmatprep.subr.mxu0 0.0
    %357 = vmatpush1.msra.mxu0 %v335
    %358 = vmatprep.subr.mxu0 0.0
    %359 = vmatpush1.msra.mxu0 %v336
    %360 = vmatprep.subr.mxu0 0.0
    %361 = vmatpush1.msra.mxu0 %v337
    %362 = vmatprep.subr.mxu0 0.0
    %363 = vmatpush1.msra.mxu0 %v338
    %364 = vmatprep.subr.mxu0 0.0
    %365 = vmatpush1.msra.mxu0 %v339
    %366 = vmatprep.subr.mxu0 0.0
    %367 = vmatpush1.msra.mxu0 %v340
    %368 = vmatprep.subr.mxu0 0.0
    %369 = vmatpush1.msra.mxu0 %v341
    %370 = vmatprep.subr.mxu0 0.0
    %371 = vmatpush1.msra.mxu0 %v342
    %372 = vmatprep.subr.mxu0 0.0
    %373 = vmatpush1.msra.mxu0 %v343
    %374 = vmatprep.subr.mxu0 0.0
    %375 = vmatpush1.msra.mxu0 %v344
    %376 = vmatprep.subr.mxu0 0.0
    %377 = vmatpush1.msra.mxu0 %v345
    %378 = vmatprep.subr.mxu0 0.0
    %379 = vmatpush1.msra.mxu0 %v346
    %380 = vmatprep.subr.mxu0 0.0
    %381 = vmatpush1.msra.mxu0 %v347
    %382 = vmatprep.subr.mxu0 0.0
    %383 = vmatpush1.msra.mxu0 0.0
    %384 = vmatprep.subr.mxu0 0.0
    %385 = vmatpush1.msra.mxu0 0.0
    %386 = vmatprep.subr.mxu0 0.0
    %387 = vmatpush1.msra.mxu0 0.0
    %388 = vmatprep.subr.mxu0 0.0
    %389 = vmatpush1.msra.mxu0 0.0
    %390 = vmatprep.subr.mxu0 0.0
    %391 = vmatpush1.msra.mxu0 0.0
    %392 = vmatprep.subr.mxu0 0.0
    %393 = vmatpush1.msra.mxu0 0.0
    %394 = vmatprep.subr.mxu0 0.0
    %395 = vmatpush1.msra.mxu0 0.0
    %396 = vmatprep.subr.mxu0 0.0
    %397 = vmatpush1.msra.mxu0 0.0
    %398 = vmatprep.subr.mxu0 0.0
    %399 = vmatpush1.msra.mxu0 0.0
    %400 = vmatprep.subr.mxu0 0.0
    %401 = vmatpush1.msra.mxu0 0.0
    %402 = vmatprep.subr.mxu0 0.0
    %403 = vmatpush1.msra.mxu0 0.0
    %404 = vmatprep.subr.mxu0 0.0
    %405 = vmatpush1.msra.mxu0 0.0
    %406 = vmatprep.subr.mxu0 0.0
    %407 = vmatpush1.msra.mxu0 0.0
    %408 = vmatprep.subr.mxu0 0.0
    %409 = vmatpush1.msra.mxu0 0.0
    %410 = vmatprep.subr.mxu0 0.0
    %411 = vmatpush1.msra.mxu0 0.0
    %412 = vmatprep.subr.mxu0 0.0
    %413 = vmatpush1.msra.mxu0 0.0
    %414 = vmatprep.mubr.f32.mxu0 0.0
    %415 = vmatmul.mubr.f32.gmra.mrb[0].mxu0 %v329
    %v416 = vpop.f32.mrb[0].mxu0
    %v417 = vadd.f32 %v349, %v416
    %v418 = vpop.f32.mrb[0].mxu0
    %419 = vdwg.mxu0
    %v420 = vmax.f32 %v417, 0.0
    %s421 = scalar_lea.vmem [#allocation9], 24
    %422 = vst [vmem:[%s421] sm:$0xff] %v420
    %v423 = vld [vmem:[#allocation8] sm:$0xff]
    %v424 = vld [vmem:[#allocation8 + $0x8] sm:$0xff]
    %v425 = vld [vmem:[#allocation8 + $0x10] sm:$0xff]
    %v426 = vld [vmem:[#allocation8 + $0x18] sm:$0xff]
    %v427 = vld [vmem:[#allocation8 + $0x20] sm:$0xff]
    %v428 = vld [vmem:[#allocation8 + $0x28] sm:$0xff]
    %v429 = vld [vmem:[#allocation8 + $0x30] sm:$0xff]
    %v430 = vld [vmem:[#allocation8 + $0x38] sm:$0xff]
    %v431 = vld [vmem:[#allocation8 + $0x40] sm:$0xff]
    %v432 = vld [vmem:[#allocation8 + $0x48] sm:$0xff]
    %v433 = vld [vmem:[#allocation8 + $0x50] sm:$0xff]
    %v434 = vld [vmem:[#allocation8 + $0x58] sm:$0xff]
    %v435 = vld [vmem:[#allocation8 + $0x60] sm:$0xff]
    %v436 = vld [vmem:[#allocation8 + $0x68] sm:$0xff]
    %v437 = vld [vmem:[#allocation8 + $0x70] sm:$0xff]
    %v438 = vld [vmem:[#allocation8 + $0x78] sm:$0xff]
    %s439 = scalar_lea.vmem [#allocation6], 32
    %v440 = vld [vmem:[%s439] sm:$0xff]
    %441 = vmatprep.subr.mxu0 0.0
    %442 = vmatpush1.msra.mxu0 %v423
    %443 = vmatprep.subr.mxu0 0.0
    %444 = vmatpush1.msra.mxu0 %v424
    %445 = vmatprep.subr.mxu0 0.0
    %446 = vmatpush1.msra.mxu0 %v425
    %447 = vmatprep.subr.mxu0 0.0
    %448 = vmatpush1.msra.mxu0 %v426
    %449 = vmatprep.subr.mxu0 0.0
    %450 = vmatpush1.msra.mxu0 %v427
    %451 = vmatprep.subr.mxu0 0.0
    %452 = vmatpush1.msra.mxu0 %v428
    %453 = vmatprep.subr.mxu0 0.0
    %454 = vmatpush1.msra.mxu0 %v429
    %455 = vmatprep.subr.mxu0 0.0
    %456 = vmatpush1.msra.mxu0 %v430
    %457 = vmatprep.subr.mxu0 0.0
    %458 = vmatpush1.msra.mxu0 %v431
    %459 = vmatprep.subr.mxu0 0.0
    %460 = vmatpush1.msra.mxu0 %v432
    %461 = vmatprep.subr.mxu0 0.0
    %462 = vmatpush1.msra.mxu0 %v433
    %463 = vmatprep.subr.mxu0 0.0
    %464 = vmatpush1.msra.mxu0 %v434
    %465 = vmatprep.subr.mxu0 0.0
    %466 = vmatpush1.msra.mxu0 %v435
    %467 = vmatprep.subr.mxu0 0.0
    %468 = vmatpush1.msra.mxu0 %v436
    %469 = vmatprep.subr.mxu0 0.0
    %470 = vmatpush1.msra.mxu0 %v437
    %471 = vmatprep.subr.mxu0 0.0
    %472 = vmatpush1.msra.mxu0 %v438
    %473 = vmatprep.subr.mxu0 0.0
    %474 = vmatpush1.msra.mxu0 0.0
    %475 = vmatprep.subr.mxu0 0.0
    %476 = vmatpush1.msra.mxu0 0.0
    %477 = vmatprep.subr.mxu0 0.0
    %478 = vmatpush1.msra.mxu0 0.0
    %479 = vmatprep.subr.mxu0 0.0
    %480 = vmatpush1.msra.mxu0 0.0
    %481 = vmatprep.subr.mxu0 0.0
    %482 = vmatpush1.msra.mxu0 0.0
    %483 = vmatprep.subr.mxu0 0.0
    %484 = vmatpush1.msra.mxu0 0.0
    %485 = vmatprep.subr.mxu0 0.0
    %486 = vmatpush1.msra.mxu0 0.0
    %487 = vmatprep.subr.mxu0 0.0
    %488 = vmatpush1.msra.mxu0 0.0
    %489 = vmatprep.subr.mxu0 0.0
    %490 = vmatpush1.msra.mxu0 0.0
    %491 = vmatprep.subr.mxu0 0.0
    %492 = vmatpush1.msra.mxu0 0.0
    %493 = vmatprep.subr.mxu0 0.0
    %494 = vmatpush1.msra.mxu0 0.0
    %495 = vmatprep.subr.mxu0 0.0
    %496 = vmatpush1.msra.mxu0 0.0
    %497 = vmatprep.subr.mxu0 0.0
    %498 = vmatpush1.msra.mxu0 0.0
    %499 = vmatprep.subr.mxu0 0.0
    %500 = vmatpush1.msra.mxu0 0.0
    %501 = vmatprep.subr.mxu0 0.0
    %502 = vmatpush1.msra.mxu0 0.0
    %503 = vmatprep.subr.mxu0 0.0
    %504 = vmatpush1.msra.mxu0 0.0
    %505 = vmatprep.mubr.f32.mxu0 0.0
    %506 = vmatmul.mubr.f32.gmra.mrb[0].mxu0 %v420
    %v507 = vpop.f32.mrb[0].mxu0
    %v508 = vadd.f32 %v440, %v507
    %v509 = vpop.f32.mrb[0].mxu0
    %510 = vdwg.mxu0
    %v511 = vmax.f32 %v508, 0.0
    %s512 = scalar_lea.vmem [#allocation9], 32
    %513 = vst [vmem:[%s512] sm:$0xff] %v511
    %v514 = vld [vmem:[#allocation8] sm:$0xff]
    %v515 = vld [vmem:[#allocation8 + $0x8] sm:$0xff]
    %v516 = vld [vmem:[#allocation8 + $0x10] sm:$0xff]
    %v517 = vld [vmem:[#allocation8 + $0x18] sm:$0xff]
    %v518 = vld [vmem:[#allocation8 + $0x20] sm:$0xff]
    %v519 = vld [vmem:[#allocation8 + $0x28] sm:$0xff]
    %v520 = vld [vmem:[#allocation8 + $0x30] sm:$0xff]
    %v521 = vld [vmem:[#allocation8 + $0x38] sm:$0xff]
    %v522 = vld [vmem:[#allocation8 + $0x40] sm:$0xff]
    %v523 = vld [vmem:[#allocation8 + $0x48] sm:$0xff]
    %v524 = vld [vmem:[#allocation8 + $0x50] sm:$0xff]
    %v525 = vld [vmem:[#allocation8 + $0x58] sm:$0xff]
    %v526 = vld [vmem:[#allocation8 + $0x60] sm:$0xff]
    %v527 = vld [vmem:[#allocation8 + $0x68] sm:$0xff]
    %v528 = vld [vmem:[#allocation8 + $0x70] sm:$0xff]
    %v529 = vld [vmem:[#allocation8 + $0x78] sm:$0xff]
    %s530 = scalar_lea.vmem [#allocation6], 40
    %v531 = vld [vmem:[%s530] sm:$0xff]
    %532 = vmatprep.subr.mxu0 0.0
    %533 = vmatpush1.msra.mxu0 %v514
    %534 = vmatprep.subr.mxu0 0.0
    %535 = vmatpush1.msra.mxu0 %v515
    %536 = vmatprep.subr.mxu0 0.0
    %537 = vmatpush1.msra.mxu0 %v516
    %538 = vmatprep.subr.mxu0 0.0
    %539 = vmatpush1.msra.mxu0 %v517
    %540 = vmatprep.subr.mxu0 0.0
    %541 = vmatpush1.msra.mxu0 %v518
    %542 = vmatprep.subr.mxu0 0.0
    %543 = vmatpush1.msra.mxu0 %v519
    %544 = vmatprep.subr.mxu0 0.0
    %545 = vmatpush1.msra.mxu0 %v520
    %546 = vmatprep.subr.mxu0 0.0
    %547 = vmatpush1.msra.mxu0 %v521
    %548 = vmatprep.subr.mxu0 0.0
    %549 = vmatpush1.msra.mxu0 %v522
    %550 = vmatprep.subr.mxu0 0.0
    %551 = vmatpush1.msra.mxu0 %v523
    %552 = vmatprep.subr.mxu0 0.0
    %553 = vmatpush1.msra.mxu0 %v524
    %554 = vmatprep.subr.mxu0 0.0
    %555 = vmatpush1.msra.mxu0 %v525
    %556 = vmatprep.subr.mxu0 0.0
    %557 = vmatpush1.msra.mxu0 %v526
    %558 = vmatprep.subr.mxu0 0.0
    %559 = vmatpush1.msra.mxu0 %v527
    %560 = vmatprep.subr.mxu0 0.0
    %561 = vmatpush1.msra.mxu0 %v528
    %562 = vmatprep.subr.mxu0 0.0
    %563 = vmatpush1.msra.mxu0 %v529
    %564 = vmatprep.subr.mxu0 0.0
    %565 = vmatpush1.msra.mxu0 0.0
    %566 = vmatprep.subr.mxu0 0.0
    %567 = vmatpush1.msra.mxu0 0.0
    %568 = vmatprep.subr.mxu0 0.0
    %569 = vmatpush1.msra.mxu0 0.0
    %570 = vmatprep.subr.mxu0 0.0
    %571 = vmatpush1.msra.mxu0 0.0
    %572 = vmatprep.subr.mxu0 0.0
    %573 = vmatpush1.msra.mxu0 0.0
    %574 = vmatprep.subr.mxu0 0.0
    %575 = vmatpush1.msra.mxu0 0.0
    %576 = vmatprep.subr.mxu0 0.0
    %577 = vmatpush1.msra.mxu0 0.0
    %578 = vmatprep.subr.mxu0 0.0
    %579 = vmatpush1.msra.mxu0 0.0
    %580 = vmatprep.subr.mxu0 0.0
    %581 = vmatpush1.msra.mxu0 0.0
    %582 = vmatprep.subr.mxu0 0.0
    %583 = vmatpush1.msra.mxu0 0.0
    %584 = vmatprep.subr.mxu0 0.0
    %585 = vmatpush1.msra.mxu0 0.0
    %586 = vmatprep.subr.mxu0 0.0
    %587 = vmatpush1.msra.mxu0 0.0
    %588 = vmatprep.subr.mxu0 0.0
    %589 = vmatpush1.msra.mxu0 0.0
    %590 = vmatprep.subr.mxu0 0.0
    %591 = vmatpush1.msra.mxu0 0.0
    %592 = vmatprep.subr.mxu0 0.0
    %593 = vmatpush1.msra.mxu0 0.0
    %594 = vmatprep.subr.mxu0 0.0
    %595 = vmatpush1.msra.mxu0 0.0
    %596 = vmatprep.mubr.f32.mxu0 0.0
    %597 = vmatmul.mubr.f32.gmra.mrb[0].mxu0 %v511
    %v598 = vpop.f32.mrb[0].mxu0
    %v599 = vadd.f32 %v531, %v598
    %v600 = vpop.f32.mrb[0].mxu0
    %601 = vdwg.mxu0
    %v602 = vmax.f32 %v599, 0.0
    %s603 = scalar_lea.vmem [#allocation9], 40
    %604 = vst [vmem:[%s603] sm:$0xff] %v602
    %v605 = vld [vmem:[#allocation8] sm:$0xff]
    %v606 = vld [vmem:[#allocation8 + $0x8] sm:$0xff]
    %v607 = vld [vmem:[#allocation8 + $0x10] sm:$0xff]
    %v608 = vld [vmem:[#allocation8 + $0x18] sm:$0xff]
    %v609 = vld [vmem:[#allocation8 + $0x20] sm:$0xff]
    %v610 = vld [vmem:[#allocation8 + $0x28] sm:$0xff]
    %v611 = vld [vmem:[#allocation8 + $0x30] sm:$0xff]
    %v612 = vld [vmem:[#allocation8 + $0x38] sm:$0xff]
    %v613 = vld [vmem:[#allocation8 + $0x40] sm:$0xff]
    %v614 = vld [vmem:[#allocation8 + $0x48] sm:$0xff]
    %v615 = vld [vmem:[#allocation8 + $0x50] sm:$0xff]
    %v616 = vld [vmem:[#allocation8 + $0x58] sm:$0xff]
    %v617 = vld [vmem:[#allocation8 + $0x60] sm:$0xff]
    %v618 = vld [vmem:[#allocation8 + $0x68] sm:$0xff]
    %v619 = vld [vmem:[#allocation8 + $0x70] sm:$0xff]
    %v620 = vld [vmem:[#allocation8 + $0x78] sm:$0xff]
    %s621 = scalar_lea.vmem [#allocation6], 48
    %v622 = vld [vmem:[%s621] sm:$0xff]
    %623 = vmatprep.subr.mxu0 0.0
    %624 = vmatpush1.msra.mxu0 %v605
    %625 = vmatprep.subr.mxu0 0.0
    %626 = vmatpush1.msra.mxu0 %v606
    %627 = vmatprep.subr.mxu0 0.0
    %628 = vmatpush1.msra.mxu0 %v607
    %629 = vmatprep.subr.mxu0 0.0
    %630 = vmatpush1.msra.mxu0 %v608
    %631 = vmatprep.subr.mxu0 0.0
    %632 = vmatpush1.msra.mxu0 %v609
    %633 = vmatprep.subr.mxu0 0.0
    %634 = vmatpush1.msra.mxu0 %v610
    %635 = vmatprep.subr.mxu0 0.0
    %636 = vmatpush1.msra.mxu0 %v611
    %637 = vmatprep.subr.mxu0 0.0
    %638 = vmatpush1.msra.mxu0 %v612
    %639 = vmatprep.subr.mxu0 0.0
    %640 = vmatpush1.msra.mxu0 %v613
    %641 = vmatprep.subr.mxu0 0.0
    %642 = vmatpush1.msra.mxu0 %v614
    %643 = vmatprep.subr.mxu0 0.0
    %644 = vmatpush1.msra.mxu0 %v615
    %645 = vmatprep.subr.mxu0 0.0
    %646 = vmatpush1.msra.mxu0 %v616
    %647 = vmatprep.subr.mxu0 0.0
    %648 = vmatpush1.msra.mxu0 %v617
    %649 = vmatprep.subr.mxu0 0.0
    %650 = vmatpush1.msra.mxu0 %v618
    %651 = vmatprep.subr.mxu0 0.0
    %652 = vmatpush1.msra.mxu0 %v619
    %653 = vmatprep.subr.mxu0 0.0
    %654 = vmatpush1.msra.mxu0 %v620
    %655 = vmatprep.subr.mxu0 0.0
    %656 = vmatpush1.msra.mxu0 0.0
    %657 = vmatprep.subr.mxu0 0.0
    %658 = vmatpush1.msra.mxu0 0.0
    %659 = vmatprep.subr.mxu0 0.0
    %660 = vmatpush1.msra.mxu0 0.0
    %661 = vmatprep.subr.mxu0 0.0
    %662 = vmatpush1.msra.mxu0 0.0
    %663 = vmatprep.subr.mxu0 0.0
    %664 = vmatpush1.msra.mxu0 0.0
    %665 = vmatprep.subr.mxu0 0.0
    %666 = vmatpush1.msra.mxu0 0.0
    %667 = vmatprep.subr.mxu0 0.0
    %668 = vmatpush1.msra.mxu0 0.0
    %669 = vmatprep.subr.mxu0 0.0
    %670 = vmatpush1.msra.mxu0 0.0
    %671 = vmatprep.subr.mxu0 0.0
    %672 = vmatpush1.msra.mxu0 0.0
    %673 = vmatprep.subr.mxu0 0.0
    %674 = vmatpush1.msra.mxu0 0.0
    %675 = vmatprep.subr.mxu0 0.0
    %676 = vmatpush1.msra.mxu0 0.0
    %677 = vmatprep.subr.mxu0 0.0
    %678 = vmatpush1.msra.mxu0 0.0
    %679 = vmatprep.subr.mxu0 0.0
    %680 = vmatpush1.msra.mxu0 0.0
    %681 = vmatprep.subr.mxu0 0.0
    %682 = vmatpush1.msra.mxu0 0.0
    %683 = vmatprep.subr.mxu0 0.0
    %684 = vmatpush1.msra.mxu0 0.0
    %685 = vmatprep.subr.mxu0 0.0
    %686 = vmatpush1.msra.mxu0 0.0
    %687 = vmatprep.mubr.f32.mxu0 0.0
    %688 = vmatmul.mubr.f32.gmra.mrb[0].mxu0 %v602
    %v689 = vpop.f32.mrb[0].mxu0
    %v690 = vadd.f32 %v622, %v689
    %v691 = vpop.f32.mrb[0].mxu0
    %692 = vdwg.mxu0
    %v693 = vmax.f32 %v690, 0.0
    %s694 = scalar_lea.vmem [#allocation9], 48
    %695 = vst [vmem:[%s694] sm:$0xff] %v693
    %v696 = vld [vmem:[#allocation8] sm:$0xff]
    %v697 = vld [vmem:[#allocation8 + $0x8] sm:$0xff]
    %v698 = vld [vmem:[#allocation8 + $0x10] sm:$0xff]
    %v699 = vld [vmem:[#allocation8 + $0x18] sm:$0xff]
    %v700 = vld [vmem:[#allocation8 + $0x20] sm:$0xff]
    %v701 = vld [vmem:[#allocation8 + $0x28] sm:$0xff]
    %v702 = vld [vmem:[#allocation8 + $0x30] sm:$0xff]
    %v703 = vld [vmem:[#allocation8 + $0x38] sm:$0xff]
    %v704 = vld [vmem:[#allocation8 + $0x40] sm:$0xff]
    %v705 = vld [vmem:[#allocation8 + $0x48] sm:$0xff]
    %v706 = vld [vmem:[#allocation8 + $0x50] sm:$0xff]
    %v707 = vld [vmem:[#allocation8 + $0x58] sm:$0xff]
    %v708 = vld [vmem:[#allocation8 + $0x60] sm:$0xff]
    %v709 = vld [vmem:[#allocation8 + $0x68] sm:$0xff]
    %v710 = vld [vmem:[#allocation8 + $0x70] sm:$0xff]
    %v711 = vld [vmem:[#allocation8 + $0x78] sm:$0xff]
    %s712 = scalar_lea.vmem [#allocation6], 56
    %v713 = vld [vmem:[%s712] sm:$0xff]
    %714 = vmatprep.subr.mxu0 0.0
    %715 = vmatpush1.msra.mxu0 %v696
    %716 = vmatprep.subr.mxu0 0.0
    %717 = vmatpush1.msra.mxu0 %v697
    %718 = vmatprep.subr.mxu0 0.0
    %719 = vmatpush1.msra.mxu0 %v698
    %720 = vmatprep.subr.mxu0 0.0
    %721 = vmatpush1.msra.mxu0 %v699
    %722 = vmatprep.subr.mxu0 0.0
    %723 = vmatpush1.msra.mxu0 %v700
    %724 = vmatprep.subr.mxu0 0.0
    %725 = vmatpush1.msra.mxu0 %v701
    %726 = vmatprep.subr.mxu0 0.0
    %727 = vmatpush1.msra.mxu0 %v702
    %728 = vmatprep.subr.mxu0 0.0
    %729 = vmatpush1.msra.mxu0 %v703
    %730 = vmatprep.subr.mxu0 0.0
    %731 = vmatpush1.msra.mxu0 %v704
    %732 = vmatprep.subr.mxu0 0.0
    %733 = vmatpush1.msra.mxu0 %v705
    %734 = vmatprep.subr.mxu0 0.0
    %735 = vmatpush1.msra.mxu0 %v706
    %736 = vmatprep.subr.mxu0 0.0
    %737 = vmatpush1.msra.mxu0 %v707
    %738 = vmatprep.subr.mxu0 0.0
    %739 = vmatpush1.msra.mxu0 %v708
    %740 = vmatprep.subr.mxu0 0.0
    %741 = vmatpush1.msra.mxu0 %v709
    %742 = vmatprep.subr.mxu0 0.0
    %743 = vmatpush1.msra.mxu0 %v710
    %744 = vmatprep.subr.mxu0 0.0
    %745 = vmatpush1.msra.mxu0 %v711
    %746 = vmatprep.subr.mxu0 0.0
    %747 = vmatpush1.msra.mxu0 0.0
    %748 = vmatprep.subr.mxu0 0.0
    %749 = vmatpush1.msra.mxu0 0.0
    %750 = vmatprep.subr.mxu0 0.0
    %751 = vmatpush1.msra.mxu0 0.0
    %752 = vmatprep.subr.mxu0 0.0
    %753 = vmatpush1.msra.mxu0 0.0
    %754 = vmatprep.subr.mxu0 0.0
    %755 = vmatpush1.msra.mxu0 0.0
    %756 = vmatprep.subr.mxu0 0.0
    %757 = vmatpush1.msra.mxu0 0.0
    %758 = vmatprep.subr.mxu0 0.0
    %759 = vmatpush1.msra.mxu0 0.0
    %760 = vmatprep.subr.mxu0 0.0
    %761 = vmatpush1.msra.mxu0 0.0
    %762 = vmatprep.subr.mxu0 0.0
    %763 = vmatpush1.msra.mxu0 0.0
    %764 = vmatprep.subr.mxu0 0.0
    %765 = vmatpush1.msra.mxu0 0.0
    %766 = vmatprep.subr.mxu0 0.0
    %767 = vmatpush1.msra.mxu0 0.0
    %768 = vmatprep.subr.mxu0 0.0
    %769 = vmatpush1.msra.mxu0 0.0
    %770 = vmatprep.subr.mxu0 0.0
    %771 = vmatpush1.msra.mxu0 0.0
    %772 = vmatprep.subr.mxu0 0.0
    %773 = vmatpush1.msra.mxu0 0.0
    %774 = vmatprep.subr.mxu0 0.0
    %775 = vmatpush1.msra.mxu0 0.0
    %776 = vmatprep.subr.mxu0 0.0
    %777 = vmatpush1.msra.mxu0 0.0
    %778 = vmatprep.mubr.f32.mxu0 0.0
    %779 = vmatmul.mubr.f32.gmra.mrb[0].mxu0 %v693
    %v780 = vpop.f32.mrb[0].mxu0
    %v781 = vadd.f32 %v713, %v780
    %v782 = vpop.f32.mrb[0].mxu0
    %783 = vdwg.mxu0
    %v784 = vmax.f32 %v781, 0.0
    %s785 = scalar_lea.vmem [#allocation9], 56
    %786 = vst [vmem:[%s785] sm:$0xff] %v784
    %v787 = vld [vmem:[#allocation8] sm:$0xff]
    %v788 = vld [vmem:[#allocation8 + $0x8] sm:$0xff]
    %v789 = vld [vmem:[#allocation8 + $0x10] sm:$0xff]
    %v790 = vld [vmem:[#allocation8 + $0x18] sm:$0xff]
    %v791 = vld [vmem:[#allocation8 + $0x20] sm:$0xff]
    %v792 = vld [vmem:[#allocation8 + $0x28] sm:$0xff]
    %v793 = vld [vmem:[#allocation8 + $0x30] sm:$0xff]
    %v794 = vld [vmem:[#allocation8 + $0x38] sm:$0xff]
    %v795 = vld [vmem:[#allocation8 + $0x40] sm:$0xff]
    %v796 = vld [vmem:[#allocation8 + $0x48] sm:$0xff]
    %v797 = vld [vmem:[#allocation8 + $0x50] sm:$0xff]
    %v798 = vld [vmem:[#allocation8 + $0x58] sm:$0xff]
    %v799 = vld [vmem:[#allocation8 + $0x60] sm:$0xff]
    %v800 = vld [vmem:[#allocation8 + $0x68] sm:$0xff]
    %v801 = vld [vmem:[#allocation8 + $0x70] sm:$0xff]
    %v802 = vld [vmem:[#allocation8 + $0x78] sm:$0xff]
    %s803 = scalar_lea.vmem [#allocation6], 64
    %v804 = vld [vmem:[%s803] sm:$0xff]
    %805 = vmatprep.subr.mxu0 0.0
    %806 = vmatpush1.msra.mxu0 %v787
    %807 = vmatprep.subr.mxu0 0.0
    %808 = vmatpush1.msra.mxu0 %v788
    %809 = vmatprep.subr.mxu0 0.0
    %810 = vmatpush1.msra.mxu0 %v789
    %811 = vmatprep.subr.mxu0 0.0
    %812 = vmatpush1.msra.mxu0 %v790
    %813 = vmatprep.subr.mxu0 0.0
    %814 = vmatpush1.msra.mxu0 %v791
    %815 = vmatprep.subr.mxu0 0.0
    %816 = vmatpush1.msra.mxu0 %v792
    %817 = vmatprep.subr.mxu0 0.0
    %818 = vmatpush1.msra.mxu0 %v793
    %819 = vmatprep.subr.mxu0 0.0
    %820 = vmatpush1.msra.mxu0 %v794
    %821 = vmatprep.subr.mxu0 0.0
    %822 = vmatpush1.msra.mxu0 %v795
    %823 = vmatprep.subr.mxu0 0.0
    %824 = vmatpush1.msra.mxu0 %v796
    %825 = vmatprep.subr.mxu0 0.0
    %826 = vmatpush1.msra.mxu0 %v797
    %827 = vmatprep.subr.mxu0 0.0
    %828 = vmatpush1.msra.mxu0 %v798
    %829 = vmatprep.subr.mxu0 0.0
    %830 = vmatpush1.msra.mxu0 %v799
    %831 = vmatprep.subr.mxu0 0.0
    %832 = vmatpush1.msra.mxu0 %v800
    %833 = vmatprep.subr.mxu0 0.0
    %834 = vmatpush1.msra.mxu0 %v801
    %835 = vmatprep.subr.mxu0 0.0
    %836 = vmatpush1.msra.mxu0 %v802
    %837 = vmatprep.subr.mxu0 0.0
    %838 = vmatpush1.msra.mxu0 0.0
    %839 = vmatprep.subr.mxu0 0.0
    %840 = vmatpush1.msra.mxu0 0.0
    %841 = vmatprep.subr.mxu0 0.0
    %842 = vmatpush1.msra.mxu0 0.0
    %843 = vmatprep.subr.mxu0 0.0
    %844 = vmatpush1.msra.mxu0 0.0
    %845 = vmatprep.subr.mxu0 0.0
    %846 = vmatpush1.msra.mxu0 0.0
    %847 = vmatprep.subr.mxu0 0.0
    %848 = vmatpush1.msra.mxu0 0.0
    %849 = vmatprep.subr.mxu0 0.0
    %850 = vmatpush1.msra.mxu0 0.0
    %851 = vmatprep.subr.mxu0 0.0
    %852 = vmatpush1.msra.mxu0 0.0
    %853 = vmatprep.subr.mxu0 0.0
    %854 = vmatpush1.msra.mxu0 0.0
    %855 = vmatprep.subr.mxu0 0.0
    %856 = vmatpush1.msra.mxu0 0.0
    %857 = vmatprep.subr.mxu0 0.0
    %858 = vmatpush1.msra.mxu0 0.0
    %859 = vmatprep.subr.mxu0 0.0
    %860 = vmatpush1.msra.mxu0 0.0
    %861 = vmatprep.subr.mxu0 0.0
    %862 = vmatpush1.msra.mxu0 0.0
    %863 = vmatprep.subr.mxu0 0.0
    %864 = vmatpush1.msra.mxu0 0.0
    %865 = vmatprep.subr.mxu0 0.0
    %866 = vmatpush1.msra.mxu0 0.0
    %867 = vmatprep.subr.mxu0 0.0
    %868 = vmatpush1.msra.mxu0 0.0
    %869 = vmatprep.mubr.f32.mxu0 0.0
    %870 = vmatmul.mubr.f32.gmra.mrb[0].mxu0 %v784
    %v871 = vpop.f32.mrb[0].mxu0
    %v872 = vadd.f32 %v804, %v871
    %v873 = vpop.f32.mrb[0].mxu0
    %874 = vdwg.mxu0
    %v875 = vmax.f32 %v872, 0.0
    %s876 = scalar_lea.vmem [#allocation9], 64
    %877 = vst [vmem:[%s876] sm:$0xff] %v875
    %v878 = vld [vmem:[#allocation8] sm:$0xff]
    %v879 = vld [vmem:[#allocation8 + $0x8] sm:$0xff]
    %v880 = vld [vmem:[#allocation8 + $0x10] sm:$0xff]
    %v881 = vld [vmem:[#allocation8 + $0x18] sm:$0xff]
    %v882 = vld [vmem:[#allocation8 + $0x20] sm:$0xff]
    %v883 = vld [vmem:[#allocation8 + $0x28] sm:$0xff]
    %v884 = vld [vmem:[#allocation8 + $0x30] sm:$0xff]
    %v885 = vld [vmem:[#allocation8 + $0x38] sm:$0xff]
    %v886 = vld [vmem:[#allocation8 + $0x40] sm:$0xff]
    %v887 = vld [vmem:[#allocation8 + $0x48] sm:$0xff]
    %v888 = vld [vmem:[#allocation8 + $0x50] sm:$0xff]
    %v889 = vld [vmem:[#allocation8 + $0x58] sm:$0xff]
    %v890 = vld [vmem:[#allocation8 + $0x60] sm:$0xff]
    %v891 = vld [vmem:[#allocation8 + $0x68] sm:$0xff]
    %v892 = vld [vmem:[#allocation8 + $0x70] sm:$0xff]
    %v893 = vld [vmem:[#allocation8 + $0x78] sm:$0xff]
    %s894 = scalar_lea.vmem [#allocation6], 72
    %v895 = vld [vmem:[%s894] sm:$0xff]
    %896 = vmatprep.subr.mxu0 0.0
    %897 = vmatpush1.msra.mxu0 %v878
    %898 = vmatprep.subr.mxu0 0.0
    %899 = vmatpush1.msra.mxu0 %v879
    %900 = vmatprep.subr.mxu0 0.0
    %901 = vmatpush1.msra.mxu0 %v880
    %902 = vmatprep.subr.mxu0 0.0
    %903 = vmatpush1.msra.mxu0 %v881
    %904 = vmatprep.subr.mxu0 0.0
    %905 = vmatpush1.msra.mxu0 %v882
    %906 = vmatprep.subr.mxu0 0.0
    %907 = vmatpush1.msra.mxu0 %v883
    %908 = vmatprep.subr.mxu0 0.0
    %909 = vmatpush1.msra.mxu0 %v884
    %910 = vmatprep.subr.mxu0 0.0
    %911 = vmatpush1.msra.mxu0 %v885
    %912 = vmatprep.subr.mxu0 0.0
    %913 = vmatpush1.msra.mxu0 %v886
    %914 = vmatprep.subr.mxu0 0.0
    %915 = vmatpush1.msra.mxu0 %v887
    %916 = vmatprep.subr.mxu0 0.0
    %917 = vmatpush1.msra.mxu0 %v888
    %918 = vmatprep.subr.mxu0 0.0
    %919 = vmatpush1.msra.mxu0 %v889
    %920 = vmatprep.subr.mxu0 0.0
    %921 = vmatpush1.msra.mxu0 %v890
    %922 = vmatprep.subr.mxu0 0.0
    %923 = vmatpush1.msra.mxu0 %v891
    %924 = vmatprep.subr.mxu0 0.0
    %925 = vmatpush1.msra.mxu0 %v892
    %926 = vmatprep.subr.mxu0 0.0
    %927 = vmatpush1.msra.mxu0 %v893
    %928 = vmatprep.subr.mxu0 0.0
    %929 = vmatpush1.msra.mxu0 0.0
    %930 = vmatprep.subr.mxu0 0.0
    %931 = vmatpush1.msra.mxu0 0.0
    %932 = vmatprep.subr.mxu0 0.0
    %933 = vmatpush1.msra.mxu0 0.0
    %934 = vmatprep.subr.mxu0 0.0
    %935 = vmatpush1.msra.mxu0 0.0
    %936 = vmatprep.subr.mxu0 0.0
    %937 = vmatpush1.msra.mxu0 0.0
    %938 = vmatprep.subr.mxu0 0.0
    %939 = vmatpush1.msra.mxu0 0.0
    %940 = vmatprep.subr.mxu0 0.0
    %941 = vmatpush1.msra.mxu0 0.0
    %942 = vmatprep.subr.mxu0 0.0
    %943 = vmatpush1.msra.mxu0 0.0
    %944 = vmatprep.subr.mxu0 0.0
    %945 = vmatpush1.msra.mxu0 0.0
    %946 = vmatprep.subr.mxu0 0.0
    %947 = vmatpush1.msra.mxu0 0.0
    %948 = vmatprep.subr.mxu0 0.0
    %949 = vmatpush1.msra.mxu0 0.0
    %950 = vmatprep.subr.mxu0 0.0
    %951 = vmatpush1.msra.mxu0 0.0
    %952 = vmatprep.subr.mxu0 0.0
    %953 = vmatpush1.msra.mxu0 0.0
    %954 = vmatprep.subr.mxu0 0.0
    %955 = vmatpush1.msra.mxu0 0.0
    %956 = vmatprep.subr.mxu0 0.0
    %957 = vmatpush1.msra.mxu0 0.0
    %958 = vmatprep.subr.mxu0 0.0
    %959 = vmatpush1.msra.mxu0 0.0
    %960 = vmatprep.mubr.f32.mxu0 0.0
    %961 = vmatmul.mubr.f32.gmra.mrb[0].mxu0 %v875
    %v962 = vpop.f32.mrb[0].mxu0
    %v963 = vadd.f32 %v895, %v962
    %v964 = vpop.f32.mrb[0].mxu0
    %965 = vdwg.mxu0
    %v966 = vmax.f32 %v963, 0.0
    %s967 = scalar_lea.vmem [#allocation9], 72
    %968 = vst [vmem:[%s967] sm:$0xff] %v966
    %v969 = vld [vmem:[#allocation8] sm:$0xff]
    %v970 = vld [vmem:[#allocation8 + $0x8] sm:$0xff]
    %v971 = vld [vmem:[#allocation8 + $0x10] sm:$0xff]
    %v972 = vld [vmem:[#allocation8 + $0x18] sm:$0xff]
    %v973 = vld [vmem:[#allocation8 + $0x20] sm:$0xff]
    %v974 = vld [vmem:[#allocation8 + $0x28] sm:$0xff]
    %v975 = vld [vmem:[#allocation8 + $0x30] sm:$0xff]
    %v976 = vld [vmem:[#allocation8 + $0x38] sm:$0xff]
    %v977 = vld [vmem:[#allocation8 + $0x40] sm:$0xff]
    %v978 = vld [vmem:[#allocation8 + $0x48] sm:$0xff]
    %v979 = vld [vmem:[#allocation8 + $0x50] sm:$0xff]
    %v980 = vld [vmem:[#allocation8 + $0x58] sm:$0xff]
    %v981 = vld [vmem:[#allocation8 + $0x60] sm:$0xff]
    %v982 = vld [vmem:[#allocation8 + $0x68] sm:$0xff]
    %v983 = vld [vmem:[#allocation8 + $0x70] sm:$0xff]
    %v984 = vld [vmem:[#allocation8 + $0x78] sm:$0xff]
    %s985 = scalar_lea.vmem [#allocation6], 80
    %v986 = vld [vmem:[%s985] sm:$0xff]
    %987 = vmatprep.subr.mxu0 0.0
    %988 = vmatpush1.msra.mxu0 %v969
    %989 = vmatprep.subr.mxu0 0.0
    %990 = vmatpush1.msra.mxu0 %v970
    %991 = vmatprep.subr.mxu0 0.0
    %992 = vmatpush1.msra.mxu0 %v971
    %993 = vmatprep.subr.mxu0 0.0
    %994 = vmatpush1.msra.mxu0 %v972
    %995 = vmatprep.subr.mxu0 0.0
    %996 = vmatpush1.msra.mxu0 %v973
    %997 = vmatprep.subr.mxu0 0.0
    %998 = vmatpush1.msra.mxu0 %v974
    %999 = vmatprep.subr.mxu0 0.0
    %1000 = vmatpush1.msra.mxu0 %v975
    %1001 = vmatprep.subr.mxu0 0.0
    %1002 = vmatpush1.msra.mxu0 %v976
    %1003 = vmatprep.subr.mxu0 0.0
    %1004 = vmatpush1.msra.mxu0 %v977
    %1005 = vmatprep.subr.mxu0 0.0
    %1006 = vmatpush1.msra.mxu0 %v978
    %1007 = vmatprep.subr.mxu0 0.0
    %1008 = vmatpush1.msra.mxu0 %v979
    %1009 = vmatprep.subr.mxu0 0.0
    %1010 = vmatpush1.msra.mxu0 %v980
    %1011 = vmatprep.subr.mxu0 0.0
    %1012 = vmatpush1.msra.mxu0 %v981
    %1013 = vmatprep.subr.mxu0 0.0
    %1014 = vmatpush1.msra.mxu0 %v982
    %1015 = vmatprep.subr.mxu0 0.0
    %1016 = vmatpush1.msra.mxu0 %v983
    %1017 = vmatprep.subr.mxu0 0.0
    %1018 = vmatpush1.msra.mxu0 %v984
    %1019 = vmatprep.subr.mxu0 0.0
    %1020 = vmatpush1.msra.mxu0 0.0
    %1021 = vmatprep.subr.mxu0 0.0
    %1022 = vmatpush1.msra.mxu0 0.0
    %1023 = vmatprep.subr.mxu0 0.0
    %1024 = vmatpush1.msra.mxu0 0.0
    %1025 = vmatprep.subr.mxu0 0.0
    %1026 = vmatpush1.msra.mxu0 0.0
    %1027 = vmatprep.subr.mxu0 0.0
    %1028 = vmatpush1.msra.mxu0 0.0
    %1029 = vmatprep.subr.mxu0 0.0
    %1030 = vmatpush1.msra.mxu0 0.0
    %1031 = vmatprep.subr.mxu0 0.0
    %1032 = vmatpush1.msra.mxu0 0.0
    %1033 = vmatprep.subr.mxu0 0.0
    %1034 = vmatpush1.msra.mxu0 0.0
    %1035 = vmatprep.subr.mxu0 0.0
    %1036 = vmatpush1.msra.mxu0 0.0
    %1037 = vmatprep.subr.mxu0 0.0
    %1038 = vmatpush1.msra.mxu0 0.0
    %1039 = vmatprep.subr.mxu0 0.0
    %1040 = vmatpush1.msra.mxu0 0.0
    %1041 = vmatprep.subr.mxu0 0.0
    %1042 = vmatpush1.msra.mxu0 0.0
    %1043 = vmatprep.subr.mxu0 0.0
    %1044 = vmatpush1.msra.mxu0 0.0
    %1045 = vmatprep.subr.mxu0 0.0
    %1046 = vmatpush1.msra.mxu0 0.0
    %1047 = vmatprep.subr.mxu0 0.0
    %1048 = vmatpush1.msra.mxu0 0.0
    %1049 = vmatprep.subr.mxu0 0.0
    %1050 = vmatpush1.msra.mxu0 0.0
    %1051 = vmatprep.mubr.f32.mxu0 0.0
    %1052 = vmatmul.mubr.f32.gmra.mrb[0].mxu0 %v966
    %v1053 = vpop.f32.mrb[0].mxu0
    %v1054 = vadd.f32 %v986, %v1053
    %v1055 = vpop.f32.mrb[0].mxu0
    %1056 = vdwg.mxu0
    %v1057 = vmax.f32 %v1054, 0.0
    %s1058 = scalar_lea.vmem [#allocation9], 80
    %1059 = vst [vmem:[%s1058] sm:$0xff] %v1057
    %v1060 = vld [vmem:[#allocation8] sm:$0xff]
    %v1061 = vld [vmem:[#allocation8 + $0x8] sm:$0xff]
    %v1062 = vld [vmem:[#allocation8 + $0x10] sm:$0xff]
    %v1063 = vld [vmem:[#allocation8 + $0x18] sm:$0xff]
    %v1064 = vld [vmem:[#allocation8 + $0x20] sm:$0xff]
    %v1065 = vld [vmem:[#allocation8 + $0x28] sm:$0xff]
    %v1066 = vld [vmem:[#allocation8 + $0x30] sm:$0xff]
    %v1067 = vld [vmem:[#allocation8 + $0x38] sm:$0xff]
    %v1068 = vld [vmem:[#allocation8 + $0x40] sm:$0xff]
    %v1069 = vld [vmem:[#allocation8 + $0x48] sm:$0xff]
    %v1070 = vld [vmem:[#allocation8 + $0x50] sm:$0xff]
    %v1071 = vld [vmem:[#allocation8 + $0x58] sm:$0xff]
    %v1072 = vld [vmem:[#allocation8 + $0x60] sm:$0xff]
    %v1073 = vld [vmem:[#allocation8 + $0x68] sm:$0xff]
    %v1074 = vld [vmem:[#allocation8 + $0x70] sm:$0xff]
    %v1075 = vld [vmem:[#allocation8 + $0x78] sm:$0xff]
    %s1076 = scalar_lea.vmem [#allocation6], 88
    %v1077 = vld [vmem:[%s1076] sm:$0xff]
    %1078 = vmatprep.subr.mxu0 0.0
    %1079 = vmatpush1.msra.mxu0 %v1060
    %1080 = vmatprep.subr.mxu0 0.0
    %1081 = vmatpush1.msra.mxu0 %v1061
    %1082 = vmatprep.subr.mxu0 0.0
    %1083 = vmatpush1.msra.mxu0 %v1062
    %1084 = vmatprep.subr.mxu0 0.0
    %1085 = vmatpush1.msra.mxu0 %v1063
    %1086 = vmatprep.subr.mxu0 0.0
    %1087 = vmatpush1.msra.mxu0 %v1064
    %1088 = vmatprep.subr.mxu0 0.0
    %1089 = vmatpush1.msra.mxu0 %v1065
    %1090 = vmatprep.subr.mxu0 0.0
    %1091 = vmatpush1.msra.mxu0 %v1066
    %1092 = vmatprep.subr.mxu0 0.0
    %1093 = vmatpush1.msra.mxu0 %v1067
    %1094 = vmatprep.subr.mxu0 0.0
    %1095 = vmatpush1.msra.mxu0 %v1068
    %1096 = vmatprep.subr.mxu0 0.0
    %1097 = vmatpush1.msra.mxu0 %v1069
    %1098 = vmatprep.subr.mxu0 0.0
    %1099 = vmatpush1.msra.mxu0 %v1070
    %1100 = vmatprep.subr.mxu0 0.0
    %1101 = vmatpush1.msra.mxu0 %v1071
    %1102 = vmatprep.subr.mxu0 0.0
    %1103 = vmatpush1.msra.mxu0 %v1072
    %1104 = vmatprep.subr.mxu0 0.0
    %1105 = vmatpush1.msra.mxu0 %v1073
    %1106 = vmatprep.subr.mxu0 0.0
    %1107 = vmatpush1.msra.mxu0 %v1074
    %1108 = vmatprep.subr.mxu0 0.0
    %1109 = vmatpush1.msra.mxu0 %v1075
    %1110 = vmatprep.subr.mxu0 0.0
    %1111 = vmatpush1.msra.mxu0 0.0
    %1112 = vmatprep.subr.mxu0 0.0
    %1113 = vmatpush1.msra.mxu0 0.0
    %1114 = vmatprep.subr.mxu0 0.0
    %1115 = vmatpush1.msra.mxu0 0.0
    %1116 = vmatprep.subr.mxu0 0.0
    %1117 = vmatpush1.msra.mxu0 0.0
    %1118 = vmatprep.subr.mxu0 0.0
    %1119 = vmatpush1.msra.mxu0 0.0
    %1120 = vmatprep.subr.mxu0 0.0
    %1121 = vmatpush1.msra.mxu0 0.0
    %1122 = vmatprep.subr.mxu0 0.0
    %1123 = vmatpush1.msra.mxu0 0.0
    %1124 = vmatprep.subr.mxu0 0.0
    %1125 = vmatpush1.msra.mxu0 0.0
    %1126 = vmatprep.subr.mxu0 0.0
    %1127 = vmatpush1.msra.mxu0 0.0
    %1128 = vmatprep.subr.mxu0 0.0
    %1129 = vmatpush1.msra.mxu0 0.0
    %1130 = vmatprep.subr.mxu0 0.0
    %1131 = vmatpush1.msra.mxu0 0.0
    %1132 = vmatprep.subr.mxu0 0.0
    %1133 = vmatpush1.msra.mxu0 0.0
    %1134 = vmatprep.subr.mxu0 0.0
    %1135 = vmatpush1.msra.mxu0 0.0
    %1136 = vmatprep.subr.mxu0 0.0
    %1137 = vmatpush1.msra.mxu0 0.0
    %1138 = vmatprep.subr.mxu0 0.0
    %1139 = vmatpush1.msra.mxu0 0.0
    %1140 = vmatprep.subr.mxu0 0.0
    %1141 = vmatpush1.msra.mxu0 0.0
    %1142 = vmatprep.mubr.f32.mxu0 0.0
    %1143 = vmatmul.mubr.f32.gmra.mrb[0].mxu0 %v1057
    %v1144 = vpop.f32.mrb[0].mxu0
    %v1145 = vadd.f32 %v1077, %v1144
    %v1146 = vpop.f32.mrb[0].mxu0
    %1147 = vdwg.mxu0
    %v1148 = vmax.f32 %v1145, 0.0
    %s1149 = scalar_lea.vmem [#allocation9], 88
    %1150 = vst [vmem:[%s1149] sm:$0xff] %v1148
    %1151 = vst [vmem:[#allocation2] sm:$0xff] %v1148
    // Predicated region
    $region30: #{irnn_forward.3} parent=1 // pred_check
      _
    $region31: #{irnn_forward.3} parent=1 // pred_check_branch
      %1153 = sbr.rel (0) target = $region33
    $region32: #{irnn_forward.3} parent=1 // pred_region
      %s1155 = ssub.s32 1536, 1536
      %1156 = vsyncadd [#allocation5], %s1155
      %s1157 = sshll.u32 [#allocation9], 4
      %s1158 = int_to_ptr.vmem [resolvable:$true] %s1157
      %1163 = dma.vmem_to_hbm [thread:$0]  %s1158, 1536, %s3, [#allocation5], 128, 128, 8
    $region33: #{irnn_forward.3} parent=1 // pred_fallthru
      _
    // Predicated region
    $region34: #{irnn_forward.3} parent=1 // pred_check
      _
    $region35: #{irnn_forward.3} parent=1 // pred_check_branch
      %1165 = sbr.rel (0) target = $region37
    $region36: #{irnn_forward.3} parent=1 // pred_region
      %1166 = dma.done [#allocation5], 1536
    $region37: #{irnn_forward.3} parent=1 // pred_fallthru
      _
    %1167 = vsyncpa [#allocation4], 1
    %1168 = vsyncpa [#allocation7], 1
    %1169 = vsyncpa [#allocation5], 1

// kernel: irnn_forward.2
$region0: #{irnn_forward.2}
  #allocation0 [shape = 'u32[]', space=smem, size = 0x4, offset = 0x4, fixed_abs, tag = 'smem constant byte address 0x4 - core index']
  #allocation1 [shape = 'u32[144,128]{1,0:T(1,128)}', space=vmem, size = 0x12000, scoped, tag = 'internal scratch']
  %s0 = inlined_call_operand.hbm [shape: f32[96,128], index: 0, kind: input, shape index: {}]
  %s1 = inlined_call_operand.hbm [shape: f32[128,128], index: 1, kind: input, shape index: {}]
  %s2 = inlined_call_operand.hbm [shape: f32[1,128], index: 2, kind: input, shape index: {}]
  %s3 = inlined_call_operand.hbm [shape: f32[96,128], index: 3, kind: output, shape index: {}]
  %s4 = sld [smem:[#allocation0]]
  $region34: #{irnn_forward.2} parent=0
    _
  %s6 = ssub.s32 1, %s4
  %s7 = scalar_select 0, %s6, %s4
  $region1: #{irnn_forward.2} parent=0
    #allocation2 [shape = 'u8[49152]{0}', space=vmem, size = 0xc000, scoped, tag = 'input window, operand 0, single buffered']
    #allocation3 [shape = 's32[1]{0}', space=sflag, size = 0x4, scoped, tag = 'scoped memory for irnn_forward.2']
    #allocation4 [shape = 's32[1]{0}', space=sflag, size = 0x4, scoped, tag = 'scoped memory for irnn_forward.2']
    #allocation5 [shape = 'u8[65536]{0}', space=vmem, size = 0x10000, scoped, tag = 'input window, operand 1, single buffered']
    #allocation6 [shape = 's32[1]{0}', space=sflag, size = 0x4, scoped, tag = 'scoped memory for irnn_forward.2']
    #allocation7 [shape = 'u8[512]{0}', space=vmem, size = 0x400, scoped, tag = 'input window, operand 2, single buffered']
    #allocation8 [shape = 'u8[49152]{0}', space=vmem, size = 0xc000, scoped, tag = 'output window, operand 0, single buffered']
    %8 = vsyncpa [#allocation3], 0
    %9 = vsyncpa [#allocation6], 0
    %10 = vsyncpa [#allocation4], 0
    // Predicated region
    $region2: #{irnn_forward.2} parent=1 // pred_check
      _
    $region3: #{irnn_forward.2} parent=1 // pred_check_branch
      %12 = sbr.rel (0) target = $region5
    $region4: #{irnn_forward.2} parent=1 // pred_region
      %s14 = ssub.s32 1536, 1536
      %15 = vsyncadd [#allocation3], %s14
      %s16 = sshll.u32 [#allocation2], 4
      %s17 = int_to_ptr.vmem [resolvable:$true] %s16
      %22 = dma.hbm_to_vmem [thread:$0]  %s0, 1536, %s17, [#allocation3], 128, 128, 8
    $region5: #{irnn_forward.2} parent=1 // pred_fallthru
      _
    // Predicated region
    $region6: #{irnn_forward.2} parent=1 // pred_check
      _
    $region7: #{irnn_forward.2} parent=1 // pred_check_branch
      %24 = sbr.rel (0) target = $region9
    $region8: #{irnn_forward.2} parent=1 // pred_region
      %s26 = ssub.s32 2048, 2048
      %27 = vsyncadd [#allocation6], %s26
      %s28 = sshll.u32 [#allocation5], 4
      %s29 = int_to_ptr.vmem [resolvable:$true] %s28
      %34 = dma.hbm_to_vmem [thread:$0]  %s1, 2048, %s29, [#allocation6], 128, 128, 8
    $region9: #{irnn_forward.2} parent=1 // pred_fallthru
      _
    // Predicated region
    $region10: #{irnn_forward.2} parent=1 // pred_check
      _
    $region11: #{irnn_forward.2} parent=1 // pred_check_branch
      %36 = sbr.rel (0) target = $region13
    $region12: #{irnn_forward.2} parent=1 // pred_region
      %s38 = ssub.s32 16, 16
      %39 = vsyncadd [#allocation6], %s38
      %s41 = sshll.u32 [#allocation7], 4
      %s42 = int_to_ptr.vmem [resolvable:$true] %s41
      %44 = dma.hbm_to_vmem [thread:$0]  %s2, 16, %s42, [#allocation6]
    $region13: #{irnn_forward.2} parent=1 // pred_fallthru
      _
    // Predicated region
    $region14: #{irnn_forward.2} parent=1 // pred_check
      _
    $region15: #{irnn_forward.2} parent=1 // pred_check_branch
      %46 = sbr.rel (0) target = $region17
    $region16: #{irnn_forward.2} parent=1 // pred_region
      %47 = dma.done [#allocation3], 1536
    $region17: #{irnn_forward.2} parent=1 // pred_fallthru
      _
    // Predicated region
    $region18: #{irnn_forward.2} parent=1 // pred_check
      _
    $region19: #{irnn_forward.2} parent=1 // pred_check_branch
      %49 = sbr.rel (0) target = $region21
    $region20: #{irnn_forward.2} parent=1 // pred_region
      %50 = dma.done [#allocation6], 2048
    $region21: #{irnn_forward.2} parent=1 // pred_fallthru
      _
    // Predicated region
    $region22: #{irnn_forward.2} parent=1 // pred_check
      _
    $region23: #{irnn_forward.2} parent=1 // pred_check_branch
      %52 = sbr.rel (0) target = $region25
    $region24: #{irnn_forward.2} parent=1 // pred_region
      %53 = dma.done [#allocation6], 16
    $region25: #{irnn_forward.2} parent=1 // pred_fallthru
      _
    %v54 = vld [vmem:[#allocation2] sm:$0xff]
    %v55 = vld [vmem:[#allocation2 + $0x8] sm:$0xff]
    %v56 = vld [vmem:[#allocation2 + $0x10] sm:$0xff]
    %v57 = vld [vmem:[#allocation2 + $0x18] sm:$0xff]
    %v58 = vld [vmem:[#allocation2 + $0x20] sm:$0xff]
    %v59 = vld [vmem:[#allocation2 + $0x28] sm:$0xff]
    %v60 = vld [vmem:[#allocation2 + $0x30] sm:$0xff]
    %v61 = vld [vmem:[#allocation2 + $0x38] sm:$0xff]
    %v62 = vld [vmem:[#allocation2 + $0x40] sm:$0xff]
    %v63 = vld [vmem:[#allocation2 + $0x48] sm:$0xff]
    %v64 = vld [vmem:[#allocation2 + $0x50] sm:$0xff]
    %v65 = vld [vmem:[#allocation2 + $0x58] sm:$0xff]
    %v66 = vld [vmem:[#allocation5] sm:$0xff]
    %v67 = vld [vmem:[#allocation5 + $0x8] sm:$0xff]
    %v68 = vld [vmem:[#allocation5 + $0x10] sm:$0xff]
    %v69 = vld [vmem:[#allocation5 + $0x18] sm:$0xff]
    %v70 = vld [vmem:[#allocation5 + $0x20] sm:$0xff]
    %v71 = vld [vmem:[#allocation5 + $0x28] sm:$0xff]
    %v72 = vld [vmem:[#allocation5 + $0x30] sm:$0xff]
    %v73 = vld [vmem:[#allocation5 + $0x38] sm:$0xff]
    %v74 = vld [vmem:[#allocation5 + $0x40] sm:$0xff]
    %v75 = vld [vmem:[#allocation5 + $0x48] sm:$0xff]
    %v76 = vld [vmem:[#allocation5 + $0x50] sm:$0xff]
    %v77 = vld [vmem:[#allocation5 + $0x58] sm:$0xff]
    %v78 = vld [vmem:[#allocation5 + $0x60] sm:$0xff]
    %v79 = vld [vmem:[#allocation5 + $0x68] sm:$0xff]
    %v80 = vld [vmem:[#allocation5 + $0x70] sm:$0xff]
    %v81 = vld [vmem:[#allocation5 + $0x78] sm:$0xff]
    %v82 = vld [vmem:[#allocation7] sm:$0x1]
    %v84 = vlaneseq
    %v85 = vshrl.u32 %v84, 7
    %v86 = vsub.s32 0, %v85
    %v87 = vrot.slane %v82, %v86
    %89 = vmatprep.subr.mxu0 0.0
    %90 = vmatpush1.msra.mxu0 %v66
    %91 = vmatprep.subr.mxu0 0.0
    %92 = vmatpush1.msra.mxu0 %v67
    %93 = vmatprep.subr.mxu0 0.0
    %94 = vmatpush1.msra.mxu0 %v68
    %95 = vmatprep.subr.mxu0 0.0
    %96 = vmatpush1.msra.mxu0 %v69
    %97 = vmatprep.subr.mxu0 0.0
    %98 = vmatpush1.msra.mxu0 %v70
    %99 = vmatprep.subr.mxu0 0.0
    %100 = vmatpush1.msra.mxu0 %v71
    %101 = vmatprep.subr.mxu0 0.0
    %102 = vmatpush1.msra.mxu0 %v72
    %103 = vmatprep.subr.mxu0 0.0
    %104 = vmatpush1.msra.mxu0 %v73
    %105 = vmatprep.subr.mxu0 0.0
    %106 = vmatpush1.msra.mxu0 %v74
    %107 = vmatprep.subr.mxu0 0.0
    %108 = vmatpush1.msra.mxu0 %v75
    %109 = vmatprep.subr.mxu0 0.0
    %110 = vmatpush1.msra.mxu0 %v76
    %111 = vmatprep.subr.mxu0 0.0
    %112 = vmatpush1.msra.mxu0 %v77
    %113 = vmatprep.subr.mxu0 0.0
    %114 = vmatpush1.msra.mxu0 %v78
    %115 = vmatprep.subr.mxu0 0.0
    %116 = vmatpush1.msra.mxu0 %v79
    %117 = vmatprep.subr.mxu0 0.0
    %118 = vmatpush1.msra.mxu0 %v80
    %119 = vmatprep.subr.mxu0 0.0
    %120 = vmatpush1.msra.mxu0 %v81
    %121 = vmatprep.subr.mxu0 0.0
    %122 = vmatpush1.msra.mxu0 0.0
    %123 = vmatprep.subr.mxu0 0.0
    %124 = vmatpush1.msra.mxu0 0.0
    %125 = vmatprep.subr.mxu0 0.0
    %126 = vmatpush1.msra.mxu0 0.0
    %127 = vmatprep.subr.mxu0 0.0
    %128 = vmatpush1.msra.mxu0 0.0
    %129 = vmatprep.subr.mxu0 0.0
    %130 = vmatpush1.msra.mxu0 0.0
    %131 = vmatprep.subr.mxu0 0.0
    %132 = vmatpush1.msra.mxu0 0.0
    %133 = vmatprep.subr.mxu0 0.0
    %134 = vmatpush1.msra.mxu0 0.0
    %135 = vmatprep.subr.mxu0 0.0
    %136 = vmatpush1.msra.mxu0 0.0
    %137 = vmatprep.subr.mxu0 0.0
    %138 = vmatpush1.msra.mxu0 0.0
    %139 = vmatprep.subr.mxu0 0.0
    %140 = vmatpush1.msra.mxu0 0.0
    %141 = vmatprep.subr.mxu0 0.0
    %142 = vmatpush1.msra.mxu0 0.0
    %143 = vmatprep.subr.mxu0 0.0
    %144 = vmatpush1.msra.mxu0 0.0
    %145 = vmatprep.subr.mxu0 0.0
    %146 = vmatpush1.msra.mxu0 0.0
    %147 = vmatprep.subr.mxu0 0.0
    %148 = vmatpush1.msra.mxu0 0.0
    %149 = vmatprep.subr.mxu0 0.0
    %150 = vmatpush1.msra.mxu0 0.0
    %151 = vmatprep.subr.mxu0 0.0
    %152 = vmatpush1.msra.mxu0 0.0
    %153 = vmatprep.mubr.f32.mxu0 0.0
    %154 = vmatmul.mubr.f32.gmra.mrb[0].mxu0 %v54
    %v155 = vpop.f32.mrb[0].mxu0
    %v156 = vadd.f32 %v87, %v155
    %v157 = vpop.f32.mrb[0].mxu0
    %158 = vmatprep.mubr.f32.mxu0 0.0
    %159 = vmatmul.mubr.f32.gmra.mrb[0].mxu0 %v55
    %v160 = vpop.f32.mrb[0].mxu0
    %v161 = vadd.f32 %v87, %v160
    %v162 = vpop.f32.mrb[0].mxu0
    %163 = vmatprep.mubr.f32.mxu0 0.0
    %164 = vmatmul.mubr.f32.gmra.mrb[0].mxu0 %v56
    %v165 = vpop.f32.mrb[0].mxu0
    %v166 = vadd.f32 %v87, %v165
    %v167 = vpop.f32.mrb[0].mxu0
    %168 = vmatprep.mubr.f32.mxu0 0.0
    %169 = vmatmul.mubr.f32.gmra.mrb[0].mxu0 %v57
    %v170 = vpop.f32.mrb[0].mxu0
    %v171 = vadd.f32 %v87, %v170
    %v172 = vpop.f32.mrb[0].mxu0
    %173 = vmatprep.mubr.f32.mxu0 0.0
    %174 = vmatmul.mubr.f32.gmra.mrb[0].mxu0 %v58
    %v175 = vpop.f32.mrb[0].mxu0
    %v176 = vadd.f32 %v87, %v175
    %v177 = vpop.f32.mrb[0].mxu0
    %178 = vmatprep.mubr.f32.mxu0 0.0
    %179 = vmatmul.mubr.f32.gmra.mrb[0].mxu0 %v59
    %v180 = vpop.f32.mrb[0].mxu0
    %v181 = vadd.f32 %v87, %v180
    %v182 = vpop.f32.mrb[0].mxu0
    %183 = vmatprep.mubr.f32.mxu0 0.0
    %184 = vmatmul.mubr.f32.gmra.mrb[0].mxu0 %v60
    %v185 = vpop.f32.mrb[0].mxu0
    %v186 = vadd.f32 %v87, %v185
    %v187 = vpop.f32.mrb[0].mxu0
    %188 = vmatprep.mubr.f32.mxu0 0.0
    %189 = vmatmul.mubr.f32.gmra.mrb[0].mxu0 %v61
    %v190 = vpop.f32.mrb[0].mxu0
    %v191 = vadd.f32 %v87, %v190
    %v192 = vpop.f32.mrb[0].mxu0
    %193 = vmatprep.mubr.f32.mxu0 0.0
    %194 = vmatmul.mubr.f32.gmra.mrb[0].mxu0 %v62
    %v195 = vpop.f32.mrb[0].mxu0
    %v196 = vadd.f32 %v87, %v195
    %v197 = vpop.f32.mrb[0].mxu0
    %198 = vmatprep.mubr.f32.mxu0 0.0
    %199 = vmatmul.mubr.f32.gmra.mrb[0].mxu0 %v63
    %v200 = vpop.f32.mrb[0].mxu0
    %v201 = vadd.f32 %v87, %v200
    %v202 = vpop.f32.mrb[0].mxu0
    %203 = vmatprep.mubr.f32.mxu0 0.0
    %204 = vmatmul.mubr.f32.gmra.mrb[0].mxu0 %v64
    %v205 = vpop.f32.mrb[0].mxu0
    %v206 = vadd.f32 %v87, %v205
    %v207 = vpop.f32.mrb[0].mxu0
    %208 = vmatprep.mubr.f32.mxu0 0.0
    %209 = vmatmul.mubr.f32.gmra.mrb[0].mxu0 %v65
    %v210 = vpop.f32.mrb[0].mxu0
    %v211 = vadd.f32 %v87, %v210
    %v212 = vpop.f32.mrb[0].mxu0
    %213 = vdwg.mxu0
    %214 = vst [vmem:[#allocation8] sm:$0xff] %v156
    %215 = vst [vmem:[#allocation8 + $0x8] sm:$0xff] %v161
    %216 = vst [vmem:[#allocation8 + $0x10] sm:$0xff] %v166
    %217 = vst [vmem:[#allocation8 + $0x18] sm:$0xff] %v171
    %218 = vst [vmem:[#allocation8 + $0x20] sm:$0xff] %v176
    %219 = vst [vmem:[#allocation8 + $0x28] sm:$0xff] %v181
    %220 = vst [vmem:[#allocation8 + $0x30] sm:$0xff] %v186
    %221 = vst [vmem:[#allocation8 + $0x38] sm:$0xff] %v191
    %222 = vst [vmem:[#allocation8 + $0x40] sm:$0xff] %v196
    %223 = vst [vmem:[#allocation8 + $0x48] sm:$0xff] %v201
    %224 = vst [vmem:[#allocation8 + $0x50] sm:$0xff] %v206
    %225 = vst [vmem:[#allocation8 + $0x58] sm:$0xff] %v211
    // Predicated region
    $region26: #{irnn_forward.2} parent=1 // pred_check
      _
    $region27: #{irnn_forward.2} parent=1 // pred_check_branch
      %227 = sbr.rel (0) target = $region29
    $region28: #{irnn_forward.2} parent=1 // pred_region
      %s229 = ssub.s32 1536, 1536
      %230 = vsyncadd [#allocation4], %s229
      %s231 = sshll.u32 [#allocation8], 4
      %s232 = int_to_ptr.vmem [resolvable:$true] %s231
      %237 = dma.vmem_to_hbm [thread:$0]  %s232, 1536, %s3, [#allocation4], 128, 128, 8
    $region29: #{irnn_forward.2} parent=1 // pred_fallthru
      _
    // Predicated region
    $region30: #{irnn_forward.2} parent=1 // pred_check
      _
    $region31: #{irnn_forward.2} parent=1 // pred_check_branch
      %239 = sbr.rel (0) target = $region33
    $region32: #{irnn_forward.2} parent=1 // pred_region
      %240 = dma.done [#allocation4], 1536
    $region33: #{irnn_forward.2} parent=1 // pred_fallthru
      _
    %241 = vsyncpa [#allocation3], 1
    %242 = vsyncpa [#allocation6], 1
    %243 = vsyncpa [#allocation4], 1

// kernel: irnn_forward.3
$region0: #{irnn_forward.3}
  #allocation0 [shape = 'u32[]', space=smem, size = 0x4, offset = 0x4, fixed_abs, tag = 'smem constant byte address 0x4 - core index']
  #allocation1 [shape = 'u32[144,128]{1,0:T(1,128)}', space=vmem, size = 0x12000, scoped, tag = 'internal scratch']
  #allocation2 [shape = 'f32[8,128]{1,0:T(8,128)}', space=vmem, size = 0x1000, scoped, tag = 'scratch operand']
  %s0 = inlined_call_operand.hbm [shape: f32[8,128], index: 0, kind: input, shape index: {}]
  %s1 = inlined_call_operand.hbm [shape: f32[12,8,128], index: 1, kind: input, shape index: {}]
  %s2 = inlined_call_operand.hbm [shape: f32[128,128], index: 2, kind: input, shape index: {}]
  %s3 = inlined_call_operand.hbm [shape: f32[12,8,128], index: 3, kind: output, shape index: {}]
  %s4 = sld [smem:[#allocation0]]
  $region38: #{irnn_forward.3} parent=0
    _
  %s6 = ssub.s32 1, %s4
  %s7 = scalar_select 0, %s6, %s4
  $region1: #{irnn_forward.3} parent=0
    #allocation3 [shape = 'u8[4096]{0}', space=vmem, size = 0x1000, scoped, tag = 'input window, operand 0, single buffered']
    #allocation4 [shape = 's32[1]{0}', space=sflag, size = 0x4, scoped, tag = 'scoped memory for irnn_forward.3']
    #allocation5 [shape = 's32[1]{0}', space=sflag, size = 0x4, scoped, tag = 'scoped memory for irnn_forward.3']
    #allocation6 [shape = 'u8[49152]{0}', space=vmem, size = 0xc000, scoped, tag = 'input window, operand 1, single buffered']
    #allocation7 [shape = 's32[1]{0}', space=sflag, size = 0x4, scoped, tag = 'scoped memory for irnn_forward.3']
    #allocation8 [shape = 'u8[65536]{0}', space=vmem, size = 0x10000, scoped, tag = 'input window, operand 2, single buffered']
    #allocation9 [shape = 'u8[49152]{0}', space=vmem, size = 0xc000, scoped, tag = 'output window, operand 0, single buffered']
    %8 = vsyncpa [#allocation4], 0
    %9 = vsyncpa [#allocation7], 0
    %10 = vsyncpa [#allocation5], 0
    // Predicated region
    $region2: #{irnn_forward.3} parent=1 // pred_check
      _
    $region3: #{irnn_forward.3} parent=1 // pred_check_branch
      %12 = sbr.rel (0) target = $region5
    $region4: #{irnn_forward.3} parent=1 // pred_region
      %s14 = ssub.s32 128, 128
      %15 = vsyncadd [#allocation4], %s14
      %s17 = sshll.u32 [#allocation3], 4
      %s18 = int_to_ptr.vmem [resolvable:$true] %s17
      %20 = dma.hbm_to_vmem [thread:$0]  %s0, 128, %s18, [#allocation4]
    $region5: #{irnn_forward.3} parent=1 // pred_fallthru
      _
    // Predicated region
    $region6: #{irnn_forward.3} parent=1 // pred_check
      _
    $region7: #{irnn_forward.3} parent=1 // pred_check_branch
      %22 = sbr.rel (0) target = $region9
    $region8: #{irnn_forward.3} parent=1 // pred_region
      %s24 = ssub.s32 1536, 1536
      %25 = vsyncadd [#allocation7], %s24
      %s26 = sshll.u32 [#allocation6], 4
      %s27 = int_to_ptr.vmem [resolvable:$true] %s26
      %32 = dma.hbm_to_vmem [thread:$0]  %s1, 1536, %s27, [#allocation7], 128, 128, 8
    $region9: #{irnn_forward.3} parent=1 // pred_fallthru
      _
    // Predicated region
    $region10: #{irnn_forward.3} parent=1 // pred_check
      _
    $region11: #{irnn_forward.3} parent=1 // pred_check_branch
      %34 = sbr.rel (0) target = $region13
    $region12: #{irnn_forward.3} parent=1 // pred_region
      %s36 = ssub.s32 2048, 2048
      %37 = vsyncadd [#allocation7], %s36
      %s38 = sshll.u32 [#allocation8], 4
      %s39 = int_to_ptr.vmem [resolvable:$true] %s38
      %44 = dma.hbm_to_vmem [thread:$0]  %s2, 2048, %s39, [#allocation7], 128, 128, 8
    $region13: #{irnn_forward.3} parent=1 // pred_fallthru
      _
    // Predicated region
    $region14: #{irnn_forward.3} parent=1 // pred_check
      _
    $region15: #{irnn_forward.3} parent=1 // pred_check_branch
      %46 = sbr.rel (0) target = $region17
    $region16: #{irnn_forward.3} parent=1 // pred_region
      %47 = dma.done [#allocation4], 128
    $region17: #{irnn_forward.3} parent=1 // pred_fallthru
      _
    // Predicated region
    $region18: #{irnn_forward.3} parent=1 // pred_check
      _
    $region19: #{irnn_forward.3} parent=1 // pred_check_branch
      %49 = sbr.rel (0) target = $region21
    $region20: #{irnn_forward.3} parent=1 // pred_region
      %50 = dma.done [#allocation7], 1536
    $region21: #{irnn_forward.3} parent=1 // pred_fallthru
      _
    // Predicated region
    $region22: #{irnn_forward.3} parent=1 // pred_check
      _
    $region23: #{irnn_forward.3} parent=1 // pred_check_branch
      %52 = sbr.rel (0) target = $region25
    $region24: #{irnn_forward.3} parent=1 // pred_region
      %53 = dma.done [#allocation7], 2048
    $region25: #{irnn_forward.3} parent=1 // pred_fallthru
      _
    %p54 = scmp.eq.s32.totalorder 0, 0
    // Predicated region
    $region26: #{irnn_forward.3} parent=1 // pred_check
      %p55 = pneg %p54
    $region27: #{irnn_forward.3} parent=1 // pred_check_branch
      %57 = sbr.rel (%p55) target = $region29
    $region28: #{irnn_forward.3} parent=1 // pred_region
      %v58 = vld [vmem:[#allocation3] sm:$0xff]
      %59 = vst [vmem:[#allocation2] sm:$0xff] %v58
    $region29: #{irnn_forward.3} parent=1 // pred_fallthru
      _
    %v60 = vld [vmem:[#allocation2] sm:$0xff]
    %v61 = vld [vmem:[#allocation8] sm:$0xff]
    %v62 = vld [vmem:[#allocation8 + $0x8] sm:$0xff]
    %v63 = vld [vmem:[#allocation8 + $0x10] sm:$0xff]
    %v64 = vld [vmem:[#allocation8 + $0x18] sm:$0xff]
    %v65 = vld [vmem:[#allocation8 + $0x20] sm:$0xff]
    %v66 = vld [vmem:[#allocation8 + $0x28] sm:$0xff]
    %v67 = vld [vmem:[#allocation8 + $0x30] sm:$0xff]
    %v68 = vld [vmem:[#allocation8 + $0x38] sm:$0xff]
    %v69 = vld [vmem:[#allocation8 + $0x40] sm:$0xff]
    %v70 = vld [vmem:[#allocation8 + $0x48] sm:$0xff]
    %v71 = vld [vmem:[#allocation8 + $0x50] sm:$0xff]
    %v72 = vld [vmem:[#allocation8 + $0x58] sm:$0xff]
    %v73 = vld [vmem:[#allocation8 + $0x60] sm:$0xff]
    %v74 = vld [vmem:[#allocation8 + $0x68] sm:$0xff]
    %v75 = vld [vmem:[#allocation8 + $0x70] sm:$0xff]
    %v76 = vld [vmem:[#allocation8 + $0x78] sm:$0xff]
    %v77 = vld [vmem:[#allocation6] sm:$0xff]
    %78 = vmatprep.subr.mxu0 0.0
    %79 = vmatpush1.msra.mxu0 %v61
    %80 = vmatprep.subr.mxu0 0.0
    %81 = vmatpush1.msra.mxu0 %v62
    %82 = vmatprep.subr.mxu0 0.0
    %83 = vmatpush1.msra.mxu0 %v63
    %84 = vmatprep.subr.mxu0 0.0
    %85 = vmatpush1.msra.mxu0 %v64
    %86 = vmatprep.subr.mxu0 0.0
    %87 = vmatpush1.msra.mxu0 %v65
    %88 = vmatprep.subr.mxu0 0.0
    %89 = vmatpush1.msra.mxu0 %v66
    %90 = vmatprep.subr.mxu0 0.0
    %91 = vmatpush1.msra.mxu0 %v67
    %92 = vmatprep.subr.mxu0 0.0
    %93 = vmatpush1.msra.mxu0 %v68
    %94 = vmatprep.subr.mxu0 0.0
    %95 = vmatpush1.msra.mxu0 %v69
    %96 = vmatprep.subr.mxu0 0.0
    %97 = vmatpush1.msra.mxu0 %v70
    %98 = vmatprep.subr.mxu0 0.0
    %99 = vmatpush1.msra.mxu0 %v71
    %100 = vmatprep.subr.mxu0 0.0
    %101 = vmatpush1.msra.mxu0 %v72
    %102 = vmatprep.subr.mxu0 0.0
    %103 = vmatpush1.msra.mxu0 %v73
    %104 = vmatprep.subr.mxu0 0.0
    %105 = vmatpush1.msra.mxu0 %v74
    %106 = vmatprep.subr.mxu0 0.0
    %107 = vmatpush1.msra.mxu0 %v75
    %108 = vmatprep.subr.mxu0 0.0
    %109 = vmatpush1.msra.mxu0 %v76
    %110 = vmatprep.subr.mxu0 0.0
    %111 = vmatpush1.msra.mxu0 0.0
    %112 = vmatprep.subr.mxu0 0.0
    %113 = vmatpush1.msra.mxu0 0.0
    %114 = vmatprep.subr.mxu0 0.0
    %115 = vmatpush1.msra.mxu0 0.0
    %116 = vmatprep.subr.mxu0 0.0
    %117 = vmatpush1.msra.mxu0 0.0
    %118 = vmatprep.subr.mxu0 0.0
    %119 = vmatpush1.msra.mxu0 0.0
    %120 = vmatprep.subr.mxu0 0.0
    %121 = vmatpush1.msra.mxu0 0.0
    %122 = vmatprep.subr.mxu0 0.0
    %123 = vmatpush1.msra.mxu0 0.0
    %124 = vmatprep.subr.mxu0 0.0
    %125 = vmatpush1.msra.mxu0 0.0
    %126 = vmatprep.subr.mxu0 0.0
    %127 = vmatpush1.msra.mxu0 0.0
    %128 = vmatprep.subr.mxu0 0.0
    %129 = vmatpush1.msra.mxu0 0.0
    %130 = vmatprep.subr.mxu0 0.0
    %131 = vmatpush1.msra.mxu0 0.0
    %132 = vmatprep.subr.mxu0 0.0
    %133 = vmatpush1.msra.mxu0 0.0
    %134 = vmatprep.subr.mxu0 0.0
    %135 = vmatpush1.msra.mxu0 0.0
    %136 = vmatprep.subr.mxu0 0.0
    %137 = vmatpush1.msra.mxu0 0.0
    %138 = vmatprep.subr.mxu0 0.0
    %139 = vmatpush1.msra.mxu0 0.0
    %140 = vmatprep.subr.mxu0 0.0
    %141 = vmatpush1.msra.mxu0 0.0
    %142 = vmatprep.mubr.f32.mxu0 0.0
    %143 = vmatmul.mubr.f32.gmra.mrb[0].mxu0 %v60
    %v144 = vpop.f32.mrb[0].mxu0
    %v145 = vadd.f32 %v77, %v144
    %v146 = vpop.f32.mrb[0].mxu0
    %147 = vdwg.mxu0
    %v148 = vmax.f32 %v145, 0.0
    %149 = vst [vmem:[#allocation9] sm:$0xff] %v148
    %v150 = vld [vmem:[#allocation8] sm:$0xff]
    %v151 = vld [vmem:[#allocation8 + $0x8] sm:$0xff]
    %v152 = vld [vmem:[#allocation8 + $0x10] sm:$0xff]
    %v153 = vld [vmem:[#allocation8 + $0x18] sm:$0xff]
    %v154 = vld [vmem:[#allocation8 + $0x20] sm:$0xff]
    %v155 = vld [vmem:[#allocation8 + $0x28] sm:$0xff]
    %v156 = vld [vmem:[#allocation8 + $0x30] sm:$0xff]
    %v157 = vld [vmem:[#allocation8 + $0x38] sm:$0xff]
    %v158 = vld [vmem:[#allocation8 + $0x40] sm:$0xff]
    %v159 = vld [vmem:[#allocation8 + $0x48] sm:$0xff]
    %v160 = vld [vmem:[#allocation8 + $0x50] sm:$0xff]
    %v161 = vld [vmem:[#allocation8 + $0x58] sm:$0xff]
    %v162 = vld [vmem:[#allocation8 + $0x60] sm:$0xff]
    %v163 = vld [vmem:[#allocation8 + $0x68] sm:$0xff]
    %v164 = vld [vmem:[#allocation8 + $0x70] sm:$0xff]
    %v165 = vld [vmem:[#allocation8 + $0x78] sm:$0xff]
    %s166 = scalar_lea.vmem [#allocation6], 8
    %v167 = vld [vmem:[%s166] sm:$0xff]
    %168 = vmatprep.subr.mxu0 0.0
    %169 = vmatpush1.msra.mxu0 %v150
    %170 = vmatprep.subr.mxu0 0.0
    %171 = vmatpush1.msra.mxu0 %v151
    %172 = vmatprep.subr.mxu0 0.0
    %173 = vmatpush1.msra.mxu0 %v152
    %174 = vmatprep.subr.mxu0 0.0
    %175 = vmatpush1.msra.mxu0 %v153
    %176 = vmatprep.subr.mxu0 0.0
    %177 = vmatpush1.msra.mxu0 %v154
    %178 = vmatprep.subr.mxu0 0.0
    %179 = vmatpush1.msra.mxu0 %v155
    %180 = vmatprep.subr.mxu0 0.0
    %181 = vmatpush1.msra.mxu0 %v156
    %182 = vmatprep.subr.mxu0 0.0
    %183 = vmatpush1.msra.mxu0 %v157
    %184 = vmatprep.subr.mxu0 0.0
    %185 = vmatpush1.msra.mxu0 %v158
    %186 = vmatprep.subr.mxu0 0.0
    %187 = vmatpush1.msra.mxu0 %v159
    %188 = vmatprep.subr.mxu0 0.0
    %189 = vmatpush1.msra.mxu0 %v160
    %190 = vmatprep.subr.mxu0 0.0
    %191 = vmatpush1.msra.mxu0 %v161
    %192 = vmatprep.subr.mxu0 0.0
    %193 = vmatpush1.msra.mxu0 %v162
    %194 = vmatprep.subr.mxu0 0.0
    %195 = vmatpush1.msra.mxu0 %v163
    %196 = vmatprep.subr.mxu0 0.0
    %197 = vmatpush1.msra.mxu0 %v164
    %198 = vmatprep.subr.mxu0 0.0
    %199 = vmatpush1.msra.mxu0 %v165
    %200 = vmatprep.subr.mxu0 0.0
    %201 = vmatpush1.msra.mxu0 0.0
    %202 = vmatprep.subr.mxu0 0.0
    %203 = vmatpush1.msra.mxu0 0.0
    %204 = vmatprep.subr.mxu0 0.0
    %205 = vmatpush1.msra.mxu0 0.0
    %206 = vmatprep.subr.mxu0 0.0
    %207 = vmatpush1.msra.mxu0 0.0
    %208 = vmatprep.subr.mxu0 0.0
    %209 = vmatpush1.msra.mxu0 0.0
    %210 = vmatprep.subr.mxu0 0.0
    %211 = vmatpush1.msra.mxu0 0.0
    %212 = vmatprep.subr.mxu0 0.0
    %213 = vmatpush1.msra.mxu0 0.0
    %214 = vmatprep.subr.mxu0 0.0
    %215 = vmatpush1.msra.mxu0 0.0
    %216 = vmatprep.subr.mxu0 0.0
    %217 = vmatpush1.msra.mxu0 0.0
    %218 = vmatprep.subr.mxu0 0.0
    %219 = vmatpush1.msra.mxu0 0.0
    %220 = vmatprep.subr.mxu0 0.0
    %221 = vmatpush1.msra.mxu0 0.0
    %222 = vmatprep.subr.mxu0 0.0
    %223 = vmatpush1.msra.mxu0 0.0
    %224 = vmatprep.subr.mxu0 0.0
    %225 = vmatpush1.msra.mxu0 0.0
    %226 = vmatprep.subr.mxu0 0.0
    %227 = vmatpush1.msra.mxu0 0.0
    %228 = vmatprep.subr.mxu0 0.0
    %229 = vmatpush1.msra.mxu0 0.0
    %230 = vmatprep.subr.mxu0 0.0
    %231 = vmatpush1.msra.mxu0 0.0
    %232 = vmatprep.mubr.f32.mxu0 0.0
    %233 = vmatmul.mubr.f32.gmra.mrb[0].mxu0 %v148
    %v234 = vpop.f32.mrb[0].mxu0
    %v235 = vadd.f32 %v167, %v234
    %v236 = vpop.f32.mrb[0].mxu0
    %237 = vdwg.mxu0
    %v238 = vmax.f32 %v235, 0.0
    %s239 = scalar_lea.vmem [#allocation9], 8
    %240 = vst [vmem:[%s239] sm:$0xff] %v238
    %v241 = vld [vmem:[#allocation8] sm:$0xff]
    %v242 = vld [vmem:[#allocation8 + $0x8] sm:$0xff]
    %v243 = vld [vmem:[#allocation8 + $0x10] sm:$0xff]
    %v244 = vld [vmem:[#allocation8 + $0x18] sm:$0xff]
    %v245 = vld [vmem:[#allocation8 + $0x20] sm:$0xff]
    %v246 = vld [vmem:[#allocation8 + $0x28] sm:$0xff]
    %v247 = vld [vmem:[#allocation8 + $0x30] sm:$0xff]
    %v248 = vld [vmem:[#allocation8 + $0x38] sm:$0xff]
    %v249 = vld [vmem:[#allocation8 + $0x40] sm:$0xff]
    %v250 = vld [vmem:[#allocation8 + $0x48] sm:$0xff]
    %v251 = vld [vmem:[#allocation8 + $0x50] sm:$0xff]
    %v252 = vld [vmem:[#allocation8 + $0x58] sm:$0xff]
    %v253 = vld [vmem:[#allocation8 + $0x60] sm:$0xff]
    %v254 = vld [vmem:[#allocation8 + $0x68] sm:$0xff]
    %v255 = vld [vmem:[#allocation8 + $0x70] sm:$0xff]
    %v256 = vld [vmem:[#allocation8 + $0x78] sm:$0xff]
    %s257 = scalar_lea.vmem [#allocation6], 16
    %v258 = vld [vmem:[%s257] sm:$0xff]
    %259 = vmatprep.subr.mxu0 0.0
    %260 = vmatpush1.msra.mxu0 %v241
    %261 = vmatprep.subr.mxu0 0.0
    %262 = vmatpush1.msra.mxu0 %v242
    %263 = vmatprep.subr.mxu0 0.0
    %264 = vmatpush1.msra.mxu0 %v243
    %265 = vmatprep.subr.mxu0 0.0
    %266 = vmatpush1.msra.mxu0 %v244
    %267 = vmatprep.subr.mxu0 0.0
    %268 = vmatpush1.msra.mxu0 %v245
    %269 = vmatprep.subr.mxu0 0.0
    %270 = vmatpush1.msra.mxu0 %v246
    %271 = vmatprep.subr.mxu0 0.0
    %272 = vmatpush1.msra.mxu0 %v247
    %273 = vmatprep.subr.mxu0 0.0
    %274 = vmatpush1.msra.mxu0 %v248
    %275 = vmatprep.subr.mxu0 0.0
    %276 = vmatpush1.msra.mxu0 %v249
    %277 = vmatprep.subr.mxu0 0.0
    %278 = vmatpush1.msra.mxu0 %v250
    %279 = vmatprep.subr.mxu0 0.0
    %280 = vmatpush1.msra.mxu0 %v251
    %281 = vmatprep.subr.mxu0 0.0
    %282 = vmatpush1.msra.mxu0 %v252
    %283 = vmatprep.subr.mxu0 0.0
    %284 = vmatpush1.msra.mxu0 %v253
    %285 = vmatprep.subr.mxu0 0.0
    %286 = vmatpush1.msra.mxu0 %v254
    %287 = vmatprep.subr.mxu0 0.0
    %288 = vmatpush1.msra.mxu0 %v255
    %289 = vmatprep.subr.mxu0 0.0
    %290 = vmatpush1.msra.mxu0 %v256
    %291 = vmatprep.subr.mxu0 0.0
    %292 = vmatpush1.msra.mxu0 0.0
    %293 = vmatprep.subr.mxu0 0.0
    %294 = vmatpush1.msra.mxu0 0.0
    %295 = vmatprep.subr.mxu0 0.0
    %296 = vmatpush1.msra.mxu0 0.0
    %297 = vmatprep.subr.mxu0 0.0
    %298 = vmatpush1.msra.mxu0 0.0
    %299 = vmatprep.subr.mxu0 0.0
    %300 = vmatpush1.msra.mxu0 0.0
    %301 = vmatprep.subr.mxu0 0.0
    %302 = vmatpush1.msra.mxu0 0.0
    %303 = vmatprep.subr.mxu0 0.0
    %304 = vmatpush1.msra.mxu0 0.0
    %305 = vmatprep.subr.mxu0 0.0
    %306 = vmatpush1.msra.mxu0 0.0
    %307 = vmatprep.subr.mxu0 0.0
    %308 = vmatpush1.msra.mxu0 0.0
    %309 = vmatprep.subr.mxu0 0.0
    %310 = vmatpush1.msra.mxu0 0.0
    %311 = vmatprep.subr.mxu0 0.0
    %312 = vmatpush1.msra.mxu0 0.0
    %313 = vmatprep.subr.mxu0 0.0
    %314 = vmatpush1.msra.mxu0 0.0
    %315 = vmatprep.subr.mxu0 0.0
    %316 = vmatpush1.msra.mxu0 0.0
    %317 = vmatprep.subr.mxu0 0.0
    %318 = vmatpush1.msra.mxu0 0.0
    %319 = vmatprep.subr.mxu0 0.0
    %320 = vmatpush1.msra.mxu0 0.0
    %321 = vmatprep.subr.mxu0 0.0
    %322 = vmatpush1.msra.mxu0 0.0
    %323 = vmatprep.mubr.f32.mxu0 0.0
    %324 = vmatmul.mubr.f32.gmra.mrb[0].mxu0 %v238
    %v325 = vpop.f32.mrb[0].mxu0
    %v326 = vadd.f32 %v258, %v325
    %v327 = vpop.f32.mrb[0].mxu0
    %328 = vdwg.mxu0
    %v329 = vmax.f32 %v326, 0.0
    %s330 = scalar_lea.vmem [#allocation9], 16
    %331 = vst [vmem:[%s330] sm:$0xff] %v329
    %v332 = vld [vmem:[#allocation8] sm:$0xff]
    %v333 = vld [vmem:[#allocation8 + $0x8] sm:$0xff]
    %v334 = vld [vmem:[#allocation8 + $0x10] sm:$0xff]
    %v335 = vld [vmem:[#allocation8 + $0x18] sm:$0xff]
    %v336 = vld [vmem:[#allocation8 + $0x20] sm:$0xff]
    %v337 = vld [vmem:[#allocation8 + $0x28] sm:$0xff]
    %v338 = vld [vmem:[#allocation8 + $0x30] sm:$0xff]
    %v339 = vld [vmem:[#allocation8 + $0x38] sm:$0xff]
    %v340 = vld [vmem:[#allocation8 + $0x40] sm:$0xff]
    %v341 = vld [vmem:[#allocation8 + $0x48] sm:$0xff]
    %v342 = vld [vmem:[#allocation8 + $0x50] sm:$0xff]
    %v343 = vld [vmem:[#allocation8 + $0x58] sm:$0xff]
    %v344 = vld [vmem:[#allocation8 + $0x60] sm:$0xff]
    %v345 = vld [vmem:[#allocation8 + $0x68] sm:$0xff]
    %v346 = vld [vmem:[#allocation8 + $0x70] sm:$0xff]
    %v347 = vld [vmem:[#allocation8 + $0x78] sm:$0xff]
    %s348 = scalar_lea.vmem [#allocation6], 24
    %v349 = vld [vmem:[%s348] sm:$0xff]
    %350 = vmatprep.subr.mxu0 0.0
    %351 = vmatpush1.msra.mxu0 %v332
    %352 = vmatprep.subr.mxu0 0.0
    %353 = vmatpush1.msra.mxu0 %v333
    %354 = vmatprep.subr.mxu0 0.0
    %355 = vmatpush1.msra.mxu0 %v334
    %356 = vmatprep.subr.mxu0 0.0
    %357 = vmatpush1.msra.mxu0 %v335
    %358 = vmatprep.subr.mxu0 0.0
    %359 = vmatpush1.msra.mxu0 %v336
    %360 = vmatprep.subr.mxu0 0.0
    %361 = vmatpush1.msra.mxu0 %v337
    %362 = vmatprep.subr.mxu0 0.0
    %363 = vmatpush1.msra.mxu0 %v338
    %364 = vmatprep.subr.mxu0 0.0
    %365 = vmatpush1.msra.mxu0 %v339
    %366 = vmatprep.subr.mxu0 0.0
    %367 = vmatpush1.msra.mxu0 %v340
    %368 = vmatprep.subr.mxu0 0.0
    %369 = vmatpush1.msra.mxu0 %v341
    %370 = vmatprep.subr.mxu0 0.0
    %371 = vmatpush1.msra.mxu0 %v342
    %372 = vmatprep.subr.mxu0 0.0
    %373 = vmatpush1.msra.mxu0 %v343
    %374 = vmatprep.subr.mxu0 0.0
    %375 = vmatpush1.msra.mxu0 %v344
    %376 = vmatprep.subr.mxu0 0.0
    %377 = vmatpush1.msra.mxu0 %v345
    %378 = vmatprep.subr.mxu0 0.0
    %379 = vmatpush1.msra.mxu0 %v346
    %380 = vmatprep.subr.mxu0 0.0
    %381 = vmatpush1.msra.mxu0 %v347
    %382 = vmatprep.subr.mxu0 0.0
    %383 = vmatpush1.msra.mxu0 0.0
    %384 = vmatprep.subr.mxu0 0.0
    %385 = vmatpush1.msra.mxu0 0.0
    %386 = vmatprep.subr.mxu0 0.0
    %387 = vmatpush1.msra.mxu0 0.0
    %388 = vmatprep.subr.mxu0 0.0
    %389 = vmatpush1.msra.mxu0 0.0
    %390 = vmatprep.subr.mxu0 0.0
    %391 = vmatpush1.msra.mxu0 0.0
    %392 = vmatprep.subr.mxu0 0.0
    %393 = vmatpush1.msra.mxu0 0.0
    %394 = vmatprep.subr.mxu0 0.0
    %395 = vmatpush1.msra.mxu0 0.0
    %396 = vmatprep.subr.mxu0 0.0
    %397 = vmatpush1.msra.mxu0 0.0
    %398 = vmatprep.subr.mxu0 0.0
    %399 = vmatpush1.msra.mxu0 0.0
    %400 = vmatprep.subr.mxu0 0.0
    %401 = vmatpush1.msra.mxu0 0.0
    %402 = vmatprep.subr.mxu0 0.0
    %403 = vmatpush1.msra.mxu0 0.0
    %404 = vmatprep.subr.mxu0 0.0
    %405 = vmatpush1.msra.mxu0 0.0
    %406 = vmatprep.subr.mxu0 0.0
    %407 = vmatpush1.msra.mxu0 0.0
    %408 = vmatprep.subr.mxu0 0.0
    %409 = vmatpush1.msra.mxu0 0.0
    %410 = vmatprep.subr.mxu0 0.0
    %411 = vmatpush1.msra.mxu0 0.0
    %412 = vmatprep.subr.mxu0 0.0
    %413 = vmatpush1.msra.mxu0 0.0
    %414 = vmatprep.mubr.f32.mxu0 0.0
    %415 = vmatmul.mubr.f32.gmra.mrb[0].mxu0 %v329
    %v416 = vpop.f32.mrb[0].mxu0
    %v417 = vadd.f32 %v349, %v416
    %v418 = vpop.f32.mrb[0].mxu0
    %419 = vdwg.mxu0
    %v420 = vmax.f32 %v417, 0.0
    %s421 = scalar_lea.vmem [#allocation9], 24
    %422 = vst [vmem:[%s421] sm:$0xff] %v420
    %v423 = vld [vmem:[#allocation8] sm:$0xff]
    %v424 = vld [vmem:[#allocation8 + $0x8] sm:$0xff]
    %v425 = vld [vmem:[#allocation8 + $0x10] sm:$0xff]
    %v426 = vld [vmem:[#allocation8 + $0x18] sm:$0xff]
    %v427 = vld [vmem:[#allocation8 + $0x20] sm:$0xff]
    %v428 = vld [vmem:[#allocation8 + $0x28] sm:$0xff]
    %v429 = vld [vmem:[#allocation8 + $0x30] sm:$0xff]
    %v430 = vld [vmem:[#allocation8 + $0x38] sm:$0xff]
    %v431 = vld [vmem:[#allocation8 + $0x40] sm:$0xff]
    %v432 = vld [vmem:[#allocation8 + $0x48] sm:$0xff]
    %v433 = vld [vmem:[#allocation8 + $0x50] sm:$0xff]
    %v434 = vld [vmem:[#allocation8 + $0x58] sm:$0xff]
    %v435 = vld [vmem:[#allocation8 + $0x60] sm:$0xff]
    %v436 = vld [vmem:[#allocation8 + $0x68] sm:$0xff]
    %v437 = vld [vmem:[#allocation8 + $0x70] sm:$0xff]
    %v438 = vld [vmem:[#allocation8 + $0x78] sm:$0xff]
    %s439 = scalar_lea.vmem [#allocation6], 32
    %v440 = vld [vmem:[%s439] sm:$0xff]
    %441 = vmatprep.subr.mxu0 0.0
    %442 = vmatpush1.msra.mxu0 %v423
    %443 = vmatprep.subr.mxu0 0.0
    %444 = vmatpush1.msra.mxu0 %v424
    %445 = vmatprep.subr.mxu0 0.0
    %446 = vmatpush1.msra.mxu0 %v425
    %447 = vmatprep.subr.mxu0 0.0
    %448 = vmatpush1.msra.mxu0 %v426
    %449 = vmatprep.subr.mxu0 0.0
    %450 = vmatpush1.msra.mxu0 %v427
    %451 = vmatprep.subr.mxu0 0.0
    %452 = vmatpush1.msra.mxu0 %v428
    %453 = vmatprep.subr.mxu0 0.0
    %454 = vmatpush1.msra.mxu0 %v429
    %455 = vmatprep.subr.mxu0 0.0
    %456 = vmatpush1.msra.mxu0 %v430
    %457 = vmatprep.subr.mxu0 0.0
    %458 = vmatpush1.msra.mxu0 %v431
    %459 = vmatprep.subr.mxu0 0.0
    %460 = vmatpush1.msra.mxu0 %v432
    %461 = vmatprep.subr.mxu0 0.0
    %462 = vmatpush1.msra.mxu0 %v433
    %463 = vmatprep.subr.mxu0 0.0
    %464 = vmatpush1.msra.mxu0 %v434
    %465 = vmatprep.subr.mxu0 0.0
    %466 = vmatpush1.msra.mxu0 %v435
    %467 = vmatprep.subr.mxu0 0.0
    %468 = vmatpush1.msra.mxu0 %v436
    %469 = vmatprep.subr.mxu0 0.0
    %470 = vmatpush1.msra.mxu0 %v437
    %471 = vmatprep.subr.mxu0 0.0
    %472 = vmatpush1.msra.mxu0 %v438
    %473 = vmatprep.subr.mxu0 0.0
    %474 = vmatpush1.msra.mxu0 0.0
    %475 = vmatprep.subr.mxu0 0.0
    %476 = vmatpush1.msra.mxu0 0.0
    %477 = vmatprep.subr.mxu0 0.0
    %478 = vmatpush1.msra.mxu0 0.0
    %479 = vmatprep.subr.mxu0 0.0
    %480 = vmatpush1.msra.mxu0 0.0
    %481 = vmatprep.subr.mxu0 0.0
    %482 = vmatpush1.msra.mxu0 0.0
    %483 = vmatprep.subr.mxu0 0.0
    %484 = vmatpush1.msra.mxu0 0.0
    %485 = vmatprep.subr.mxu0 0.0
    %486 = vmatpush1.msra.mxu0 0.0
    %487 = vmatprep.subr.mxu0 0.0
    %488 = vmatpush1.msra.mxu0 0.0
    %489 = vmatprep.subr.mxu0 0.0
    %490 = vmatpush1.msra.mxu0 0.0
    %491 = vmatprep.subr.mxu0 0.0
    %492 = vmatpush1.msra.mxu0 0.0
    %493 = vmatprep.subr.mxu0 0.0
    %494 = vmatpush1.msra.mxu0 0.0
    %495 = vmatprep.subr.mxu0 0.0
    %496 = vmatpush1.msra.mxu0 0.0
    %497 = vmatprep.subr.mxu0 0.0
    %498 = vmatpush1.msra.mxu0 0.0
    %499 = vmatprep.subr.mxu0 0.0
    %500 = vmatpush1.msra.mxu0 0.0
    %501 = vmatprep.subr.mxu0 0.0
    %502 = vmatpush1.msra.mxu0 0.0
    %503 = vmatprep.subr.mxu0 0.0
    %504 = vmatpush1.msra.mxu0 0.0
    %505 = vmatprep.mubr.f32.mxu0 0.0
    %506 = vmatmul.mubr.f32.gmra.mrb[0].mxu0 %v420
    %v507 = vpop.f32.mrb[0].mxu0
    %v508 = vadd.f32 %v440, %v507
    %v509 = vpop.f32.mrb[0].mxu0
    %510 = vdwg.mxu0
    %v511 = vmax.f32 %v508, 0.0
    %s512 = scalar_lea.vmem [#allocation9], 32
    %513 = vst [vmem:[%s512] sm:$0xff] %v511
    %v514 = vld [vmem:[#allocation8] sm:$0xff]
    %v515 = vld [vmem:[#allocation8 + $0x8] sm:$0xff]
    %v516 = vld [vmem:[#allocation8 + $0x10] sm:$0xff]
    %v517 = vld [vmem:[#allocation8 + $0x18] sm:$0xff]
    %v518 = vld [vmem:[#allocation8 + $0x20] sm:$0xff]
    %v519 = vld [vmem:[#allocation8 + $0x28] sm:$0xff]
    %v520 = vld [vmem:[#allocation8 + $0x30] sm:$0xff]
    %v521 = vld [vmem:[#allocation8 + $0x38] sm:$0xff]
    %v522 = vld [vmem:[#allocation8 + $0x40] sm:$0xff]
    %v523 = vld [vmem:[#allocation8 + $0x48] sm:$0xff]
    %v524 = vld [vmem:[#allocation8 + $0x50] sm:$0xff]
    %v525 = vld [vmem:[#allocation8 + $0x58] sm:$0xff]
    %v526 = vld [vmem:[#allocation8 + $0x60] sm:$0xff]
    %v527 = vld [vmem:[#allocation8 + $0x68] sm:$0xff]
    %v528 = vld [vmem:[#allocation8 + $0x70] sm:$0xff]
    %v529 = vld [vmem:[#allocation8 + $0x78] sm:$0xff]
    %s530 = scalar_lea.vmem [#allocation6], 40
    %v531 = vld [vmem:[%s530] sm:$0xff]
    %532 = vmatprep.subr.mxu0 0.0
    %533 = vmatpush1.msra.mxu0 %v514
    %534 = vmatprep.subr.mxu0 0.0
    %535 = vmatpush1.msra.mxu0 %v515
    %536 = vmatprep.subr.mxu0 0.0
    %537 = vmatpush1.msra.mxu0 %v516
    %538 = vmatprep.subr.mxu0 0.0
    %539 = vmatpush1.msra.mxu0 %v517
    %540 = vmatprep.subr.mxu0 0.0
    %541 = vmatpush1.msra.mxu0 %v518
    %542 = vmatprep.subr.mxu0 0.0
    %543 = vmatpush1.msra.mxu0 %v519
    %544 = vmatprep.subr.mxu0 0.0
    %545 = vmatpush1.msra.mxu0 %v520
    %546 = vmatprep.subr.mxu0 0.0
    %547 = vmatpush1.msra.mxu0 %v521
    %548 = vmatprep.subr.mxu0 0.0
    %549 = vmatpush1.msra.mxu0 %v522
    %550 = vmatprep.subr.mxu0 0.0
    %551 = vmatpush1.msra.mxu0 %v523
    %552 = vmatprep.subr.mxu0 0.0
    %553 = vmatpush1.msra.mxu0 %v524
    %554 = vmatprep.subr.mxu0 0.0
    %555 = vmatpush1.msra.mxu0 %v525
    %556 = vmatprep.subr.mxu0 0.0
    %557 = vmatpush1.msra.mxu0 %v526
    %558 = vmatprep.subr.mxu0 0.0
    %559 = vmatpush1.msra.mxu0 %v527
    %560 = vmatprep.subr.mxu0 0.0
    %561 = vmatpush1.msra.mxu0 %v528
    %562 = vmatprep.subr.mxu0 0.0
    %563 = vmatpush1.msra.mxu0 %v529
    %564 = vmatprep.subr.mxu0 0.0
    %565 = vmatpush1.msra.mxu0 0.0
    %566 = vmatprep.subr.mxu0 0.0
    %567 = vmatpush1.msra.mxu0 0.0
    %568 = vmatprep.subr.mxu0 0.0
    %569 = vmatpush1.msra.mxu0 0.0
    %570 = vmatprep.subr.mxu0 0.0
    %571 = vmatpush1.msra.mxu0 0.0
    %572 = vmatprep.subr.mxu0 0.0
    %573 = vmatpush1.msra.mxu0 0.0
    %574 = vmatprep.subr.mxu0 0.0
    %575 = vmatpush1.msra.mxu0 0.0
    %576 = vmatprep.subr.mxu0 0.0
    %577 = vmatpush1.msra.mxu0 0.0
    %578 = vmatprep.subr.mxu0 0.0
    %579 = vmatpush1.msra.mxu0 0.0
    %580 = vmatprep.subr.mxu0 0.0
    %581 = vmatpush1.msra.mxu0 0.0
    %582 = vmatprep.subr.mxu0 0.0
    %583 = vmatpush1.msra.mxu0 0.0
    %584 = vmatprep.subr.mxu0 0.0
    %585 = vmatpush1.msra.mxu0 0.0
    %586 = vmatprep.subr.mxu0 0.0
    %587 = vmatpush1.msra.mxu0 0.0
    %588 = vmatprep.subr.mxu0 0.0
    %589 = vmatpush1.msra.mxu0 0.0
    %590 = vmatprep.subr.mxu0 0.0
    %591 = vmatpush1.msra.mxu0 0.0
    %592 = vmatprep.subr.mxu0 0.0
    %593 = vmatpush1.msra.mxu0 0.0
    %594 = vmatprep.subr.mxu0 0.0
    %595 = vmatpush1.msra.mxu0 0.0
    %596 = vmatprep.mubr.f32.mxu0 0.0
    %597 = vmatmul.mubr.f32.gmra.mrb[0].mxu0 %v511
    %v598 = vpop.f32.mrb[0].mxu0
    %v599 = vadd.f32 %v531, %v598
    %v600 = vpop.f32.mrb[0].mxu0
    %601 = vdwg.mxu0
    %v602 = vmax.f32 %v599, 0.0
    %s603 = scalar_lea.vmem [#allocation9], 40
    %604 = vst [vmem:[%s603] sm:$0xff] %v602
    %v605 = vld [vmem:[#allocation8] sm:$0xff]
    %v606 = vld [vmem:[#allocation8 + $0x8] sm:$0xff]
    %v607 = vld [vmem:[#allocation8 + $0x10] sm:$0xff]
    %v608 = vld [vmem:[#allocation8 + $0x18] sm:$0xff]
    %v609 = vld [vmem:[#allocation8 + $0x20] sm:$0xff]
    %v610 = vld [vmem:[#allocation8 + $0x28] sm:$0xff]
    %v611 = vld [vmem:[#allocation8 + $0x30] sm:$0xff]
    %v612 = vld [vmem:[#allocation8 + $0x38] sm:$0xff]
    %v613 = vld [vmem:[#allocation8 + $0x40] sm:$0xff]
    %v614 = vld [vmem:[#allocation8 + $0x48] sm:$0xff]
    %v615 = vld [vmem:[#allocation8 + $0x50] sm:$0xff]
    %v616 = vld [vmem:[#allocation8 + $0x58] sm:$0xff]
    %v617 = vld [vmem:[#allocation8 + $0x60] sm:$0xff]
    %v618 = vld [vmem:[#allocation8 + $0x68] sm:$0xff]
    %v619 = vld [vmem:[#allocation8 + $0x70] sm:$0xff]
    %v620 = vld [vmem:[#allocation8 + $0x78] sm:$0xff]
    %s621 = scalar_lea.vmem [#allocation6], 48
    %v622 = vld [vmem:[%s621] sm:$0xff]
    %623 = vmatprep.subr.mxu0 0.0
    %624 = vmatpush1.msra.mxu0 %v605
    %625 = vmatprep.subr.mxu0 0.0
    %626 = vmatpush1.msra.mxu0 %v606
    %627 = vmatprep.subr.mxu0 0.0
    %628 = vmatpush1.msra.mxu0 %v607
    %629 = vmatprep.subr.mxu0 0.0
    %630 = vmatpush1.msra.mxu0 %v608
    %631 = vmatprep.subr.mxu0 0.0
    %632 = vmatpush1.msra.mxu0 %v609
    %633 = vmatprep.subr.mxu0 0.0
    %634 = vmatpush1.msra.mxu0 %v610
    %635 = vmatprep.subr.mxu0 0.0
    %636 = vmatpush1.msra.mxu0 %v611
    %637 = vmatprep.subr.mxu0 0.0
    %638 = vmatpush1.msra.mxu0 %v612
    %639 = vmatprep.subr.mxu0 0.0
    %640 = vmatpush1.msra.mxu0 %v613
    %641 = vmatprep.subr.mxu0 0.0
    %642 = vmatpush1.msra.mxu0 %v614
    %643 = vmatprep.subr.mxu0 0.0
    %644 = vmatpush1.msra.mxu0 %v615
    %645 = vmatprep.subr.mxu0 0.0
    %646 = vmatpush1.msra.mxu0 %v616
    %647 = vmatprep.subr.mxu0 0.0
    %648 = vmatpush1.msra.mxu0 %v617
    %649 = vmatprep.subr.mxu0 0.0
    %650 = vmatpush1.msra.mxu0 %v618
    %651 = vmatprep.subr.mxu0 0.0
    %652 = vmatpush1.msra.mxu0 %v619
    %653 = vmatprep.subr.mxu0 0.0
    %654 = vmatpush1.msra.mxu0 %v620
    %655 = vmatprep.subr.mxu0 0.0
    %656 = vmatpush1.msra.mxu0 0.0
    %657 = vmatprep.subr.mxu0 0.0
    %658 = vmatpush1.msra.mxu0 0.0
    %659 = vmatprep.subr.mxu0 0.0
    %660 = vmatpush1.msra.mxu0 0.0
    %661 = vmatprep.subr.mxu0 0.0
    %662 = vmatpush1.msra.mxu0 0.0
    %663 = vmatprep.subr.mxu0 0.0
    %664 = vmatpush1.msra.mxu0 0.0
    %665 = vmatprep.subr.mxu0 0.0
    %666 = vmatpush1.msra.mxu0 0.0
    %667 = vmatprep.subr.mxu0 0.0
    %668 = vmatpush1.msra.mxu0 0.0
    %669 = vmatprep.subr.mxu0 0.0
    %670 = vmatpush1.msra.mxu0 0.0
    %671 = vmatprep.subr.mxu0 0.0
    %672 = vmatpush1.msra.mxu0 0.0
    %673 = vmatprep.subr.mxu0 0.0
    %674 = vmatpush1.msra.mxu0 0.0
    %675 = vmatprep.subr.mxu0 0.0
    %676 = vmatpush1.msra.mxu0 0.0
    %677 = vmatprep.subr.mxu0 0.0
    %678 = vmatpush1.msra.mxu0 0.0
    %679 = vmatprep.subr.mxu0 0.0
    %680 = vmatpush1.msra.mxu0 0.0
    %681 = vmatprep.subr.mxu0 0.0
    %682 = vmatpush1.msra.mxu0 0.0
    %683 = vmatprep.subr.mxu0 0.0
    %684 = vmatpush1.msra.mxu0 0.0
    %685 = vmatprep.subr.mxu0 0.0
    %686 = vmatpush1.msra.mxu0 0.0
    %687 = vmatprep.mubr.f32.mxu0 0.0
    %688 = vmatmul.mubr.f32.gmra.mrb[0].mxu0 %v602
    %v689 = vpop.f32.mrb[0].mxu0
    %v690 = vadd.f32 %v622, %v689
    %v691 = vpop.f32.mrb[0].mxu0
    %692 = vdwg.mxu0
    %v693 = vmax.f32 %v690, 0.0
    %s694 = scalar_lea.vmem [#allocation9], 48
    %695 = vst [vmem:[%s694] sm:$0xff] %v693
    %v696 = vld [vmem:[#allocation8] sm:$0xff]
    %v697 = vld [vmem:[#allocation8 + $0x8] sm:$0xff]
    %v698 = vld [vmem:[#allocation8 + $0x10] sm:$0xff]
    %v699 = vld [vmem:[#allocation8 + $0x18] sm:$0xff]
    %v700 = vld [vmem:[#allocation8 + $0x20] sm:$0xff]
    %v701 = vld [vmem:[#allocation8 + $0x28] sm:$0xff]
    %v702 = vld [vmem:[#allocation8 + $0x30] sm:$0xff]
    %v703 = vld [vmem:[#allocation8 + $0x38] sm:$0xff]
    %v704 = vld [vmem:[#allocation8 + $0x40] sm:$0xff]
    %v705 = vld [vmem:[#allocation8 + $0x48] sm:$0xff]
    %v706 = vld [vmem:[#allocation8 + $0x50] sm:$0xff]
    %v707 = vld [vmem:[#allocation8 + $0x58] sm:$0xff]
    %v708 = vld [vmem:[#allocation8 + $0x60] sm:$0xff]
    %v709 = vld [vmem:[#allocation8 + $0x68] sm:$0xff]
    %v710 = vld [vmem:[#allocation8 + $0x70] sm:$0xff]
    %v711 = vld [vmem:[#allocation8 + $0x78] sm:$0xff]
    %s712 = scalar_lea.vmem [#allocation6], 56
    %v713 = vld [vmem:[%s712] sm:$0xff]
    %714 = vmatprep.subr.mxu0 0.0
    %715 = vmatpush1.msra.mxu0 %v696
    %716 = vmatprep.subr.mxu0 0.0
    %717 = vmatpush1.msra.mxu0 %v697
    %718 = vmatprep.subr.mxu0 0.0
    %719 = vmatpush1.msra.mxu0 %v698
    %720 = vmatprep.subr.mxu0 0.0
    %721 = vmatpush1.msra.mxu0 %v699
    %722 = vmatprep.subr.mxu0 0.0
    %723 = vmatpush1.msra.mxu0 %v700
    %724 = vmatprep.subr.mxu0 0.0
    %725 = vmatpush1.msra.mxu0 %v701
    %726 = vmatprep.subr.mxu0 0.0
    %727 = vmatpush1.msra.mxu0 %v702
    %728 = vmatprep.subr.mxu0 0.0
    %729 = vmatpush1.msra.mxu0 %v703
    %730 = vmatprep.subr.mxu0 0.0
    %731 = vmatpush1.msra.mxu0 %v704
    %732 = vmatprep.subr.mxu0 0.0
    %733 = vmatpush1.msra.mxu0 %v705
    %734 = vmatprep.subr.mxu0 0.0
    %735 = vmatpush1.msra.mxu0 %v706
    %736 = vmatprep.subr.mxu0 0.0
    %737 = vmatpush1.msra.mxu0 %v707
    %738 = vmatprep.subr.mxu0 0.0
    %739 = vmatpush1.msra.mxu0 %v708
    %740 = vmatprep.subr.mxu0 0.0
    %741 = vmatpush1.msra.mxu0 %v709
    %742 = vmatprep.subr.mxu0 0.0
    %743 = vmatpush1.msra.mxu0 %v710
    %744 = vmatprep.subr.mxu0 0.0
    %745 = vmatpush1.msra.mxu0 %v711
    %746 = vmatprep.subr.mxu0 0.0
    %747 = vmatpush1.msra.mxu0 0.0
    %748 = vmatprep.subr.mxu0 0.0
    %749 = vmatpush1.msra.mxu0 0.0
    %750 = vmatprep.subr.mxu0 0.0
    %751 = vmatpush1.msra.mxu0 0.0
    %752 = vmatprep.subr.mxu0 0.0
    %753 = vmatpush1.msra.mxu0 0.0
    %754 = vmatprep.subr.mxu0 0.0
    %755 = vmatpush1.msra.mxu0 0.0
    %756 = vmatprep.subr.mxu0 0.0
    %757 = vmatpush1.msra.mxu0 0.0
    %758 = vmatprep.subr.mxu0 0.0
    %759 = vmatpush1.msra.mxu0 0.0
    %760 = vmatprep.subr.mxu0 0.0
    %761 = vmatpush1.msra.mxu0 0.0
    %762 = vmatprep.subr.mxu0 0.0
    %763 = vmatpush1.msra.mxu0 0.0
    %764 = vmatprep.subr.mxu0 0.0
    %765 = vmatpush1.msra.mxu0 0.0
    %766 = vmatprep.subr.mxu0 0.0
    %767 = vmatpush1.msra.mxu0 0.0
    %768 = vmatprep.subr.mxu0 0.0
    %769 = vmatpush1.msra.mxu0 0.0
    %770 = vmatprep.subr.mxu0 0.0
    %771 = vmatpush1.msra.mxu0 0.0
    %772 = vmatprep.subr.mxu0 0.0
    %773 = vmatpush1.msra.mxu0 0.0
    %774 = vmatprep.subr.mxu0 0.0
    %775 = vmatpush1.msra.mxu0 0.0
    %776 = vmatprep.subr.mxu0 0.0
    %777 = vmatpush1.msra.mxu0 0.0
    %778 = vmatprep.mubr.f32.mxu0 0.0
    %779 = vmatmul.mubr.f32.gmra.mrb[0].mxu0 %v693
    %v780 = vpop.f32.mrb[0].mxu0
    %v781 = vadd.f32 %v713, %v780
    %v782 = vpop.f32.mrb[0].mxu0
    %783 = vdwg.mxu0
    %v784 = vmax.f32 %v781, 0.0
    %s785 = scalar_lea.vmem [#allocation9], 56
    %786 = vst [vmem:[%s785] sm:$0xff] %v784
    %v787 = vld [vmem:[#allocation8] sm:$0xff]
    %v788 = vld [vmem:[#allocation8 + $0x8] sm:$0xff]
    %v789 = vld [vmem:[#allocation8 + $0x10] sm:$0xff]
    %v790 = vld [vmem:[#allocation8 + $0x18] sm:$0xff]
    %v791 = vld [vmem:[#allocation8 + $0x20] sm:$0xff]
    %v792 = vld [vmem:[#allocation8 + $0x28] sm:$0xff]
    %v793 = vld [vmem:[#allocation8 + $0x30] sm:$0xff]
    %v794 = vld [vmem:[#allocation8 + $0x38] sm:$0xff]
    %v795 = vld [vmem:[#allocation8 + $0x40] sm:$0xff]
    %v796 = vld [vmem:[#allocation8 + $0x48] sm:$0xff]
    %v797 = vld [vmem:[#allocation8 + $0x50] sm:$0xff]
    %v798 = vld [vmem:[#allocation8 + $0x58] sm:$0xff]
    %v799 = vld [vmem:[#allocation8 + $0x60] sm:$0xff]
    %v800 = vld [vmem:[#allocation8 + $0x68] sm:$0xff]
    %v801 = vld [vmem:[#allocation8 + $0x70] sm:$0xff]
    %v802 = vld [vmem:[#allocation8 + $0x78] sm:$0xff]
    %s803 = scalar_lea.vmem [#allocation6], 64
    %v804 = vld [vmem:[%s803] sm:$0xff]
    %805 = vmatprep.subr.mxu0 0.0
    %806 = vmatpush1.msra.mxu0 %v787
    %807 = vmatprep.subr.mxu0 0.0
    %808 = vmatpush1.msra.mxu0 %v788
    %809 = vmatprep.subr.mxu0 0.0
    %810 = vmatpush1.msra.mxu0 %v789
    %811 = vmatprep.subr.mxu0 0.0
    %812 = vmatpush1.msra.mxu0 %v790
    %813 = vmatprep.subr.mxu0 0.0
    %814 = vmatpush1.msra.mxu0 %v791
    %815 = vmatprep.subr.mxu0 0.0
    %816 = vmatpush1.msra.mxu0 %v792
    %817 = vmatprep.subr.mxu0 0.0
    %818 = vmatpush1.msra.mxu0 %v793
    %819 = vmatprep.subr.mxu0 0.0
    %820 = vmatpush1.msra.mxu0 %v794
    %821 = vmatprep.subr.mxu0 0.0
    %822 = vmatpush1.msra.mxu0 %v795
    %823 = vmatprep.subr.mxu0 0.0
    %824 = vmatpush1.msra.mxu0 %v796
    %825 = vmatprep.subr.mxu0 0.0
    %826 = vmatpush1.msra.mxu0 %v797
    %827 = vmatprep.subr.mxu0 0.0
    %828 = vmatpush1.msra.mxu0 %v798
    %829 = vmatprep.subr.mxu0 0.0
    %830 = vmatpush1.msra.mxu0 %v799
    %831 = vmatprep.subr.mxu0 0.0
    %832 = vmatpush1.msra.mxu0 %v800
    %833 = vmatprep.subr.mxu0 0.0
    %834 = vmatpush1.msra.mxu0 %v801
    %835 = vmatprep.subr.mxu0 0.0
    %836 = vmatpush1.msra.mxu0 %v802
    %837 = vmatprep.subr.mxu0 0.0
    %838 = vmatpush1.msra.mxu0 0.0
    %839 = vmatprep.subr.mxu0 0.0
    %840 = vmatpush1.msra.mxu0 0.0
    %841 = vmatprep.subr.mxu0 0.0
    %842 = vmatpush1.msra.mxu0 0.0
    %843 = vmatprep.subr.mxu0 0.0
    %844 = vmatpush1.msra.mxu0 0.0
    %845 = vmatprep.subr.mxu0 0.0
    %846 = vmatpush1.msra.mxu0 0.0
    %847 = vmatprep.subr.mxu0 0.0
    %848 = vmatpush1.msra.mxu0 0.0
    %849 = vmatprep.subr.mxu0 0.0
    %850 = vmatpush1.msra.mxu0 0.0
    %851 = vmatprep.subr.mxu0 0.0
    %852 = vmatpush1.msra.mxu0 0.0
    %853 = vmatprep.subr.mxu0 0.0
    %854 = vmatpush1.msra.mxu0 0.0
    %855 = vmatprep.subr.mxu0 0.0
    %856 = vmatpush1.msra.mxu0 0.0
    %857 = vmatprep.subr.mxu0 0.0
    %858 = vmatpush1.msra.mxu0 0.0
    %859 = vmatprep.subr.mxu0 0.0
    %860 = vmatpush1.msra.mxu0 0.0
    %861 = vmatprep.subr.mxu0 0.0
    %862 = vmatpush1.msra.mxu0 0.0
    %863 = vmatprep.subr.mxu0 0.0
    %864 = vmatpush1.msra.mxu0 0.0
    %865 = vmatprep.subr.mxu0 0.0
    %866 = vmatpush1.msra.mxu0 0.0
    %867 = vmatprep.subr.mxu0 0.0
    %868 = vmatpush1.msra.mxu0 0.0
    %869 = vmatprep.mubr.f32.mxu0 0.0
    %870 = vmatmul.mubr.f32.gmra.mrb[0].mxu0 %v784
    %v871 = vpop.f32.mrb[0].mxu0
    %v872 = vadd.f32 %v804, %v871
    %v873 = vpop.f32.mrb[0].mxu0
    %874 = vdwg.mxu0
    %v875 = vmax.f32 %v872, 0.0
    %s876 = scalar_lea.vmem [#allocation9], 64
    %877 = vst [vmem:[%s876] sm:$0xff] %v875
    %v878 = vld [vmem:[#allocation8] sm:$0xff]
    %v879 = vld [vmem:[#allocation8 + $0x8] sm:$0xff]
    %v880 = vld [vmem:[#allocation8 + $0x10] sm:$0xff]
    %v881 = vld [vmem:[#allocation8 + $0x18] sm:$0xff]
    %v882 = vld [vmem:[#allocation8 + $0x20] sm:$0xff]
    %v883 = vld [vmem:[#allocation8 + $0x28] sm:$0xff]
    %v884 = vld [vmem:[#allocation8 + $0x30] sm:$0xff]
    %v885 = vld [vmem:[#allocation8 + $0x38] sm:$0xff]
    %v886 = vld [vmem:[#allocation8 + $0x40] sm:$0xff]
    %v887 = vld [vmem:[#allocation8 + $0x48] sm:$0xff]
    %v888 = vld [vmem:[#allocation8 + $0x50] sm:$0xff]
    %v889 = vld [vmem:[#allocation8 + $0x58] sm:$0xff]
    %v890 = vld [vmem:[#allocation8 + $0x60] sm:$0xff]
    %v891 = vld [vmem:[#allocation8 + $0x68] sm:$0xff]
    %v892 = vld [vmem:[#allocation8 + $0x70] sm:$0xff]
    %v893 = vld [vmem:[#allocation8 + $0x78] sm:$0xff]
    %s894 = scalar_lea.vmem [#allocation6], 72
    %v895 = vld [vmem:[%s894] sm:$0xff]
    %896 = vmatprep.subr.mxu0 0.0
    %897 = vmatpush1.msra.mxu0 %v878
    %898 = vmatprep.subr.mxu0 0.0
    %899 = vmatpush1.msra.mxu0 %v879
    %900 = vmatprep.subr.mxu0 0.0
    %901 = vmatpush1.msra.mxu0 %v880
    %902 = vmatprep.subr.mxu0 0.0
    %903 = vmatpush1.msra.mxu0 %v881
    %904 = vmatprep.subr.mxu0 0.0
    %905 = vmatpush1.msra.mxu0 %v882
    %906 = vmatprep.subr.mxu0 0.0
    %907 = vmatpush1.msra.mxu0 %v883
    %908 = vmatprep.subr.mxu0 0.0
    %909 = vmatpush1.msra.mxu0 %v884
    %910 = vmatprep.subr.mxu0 0.0
    %911 = vmatpush1.msra.mxu0 %v885
    %912 = vmatprep.subr.mxu0 0.0
    %913 = vmatpush1.msra.mxu0 %v886
    %914 = vmatprep.subr.mxu0 0.0
    %915 = vmatpush1.msra.mxu0 %v887
    %916 = vmatprep.subr.mxu0 0.0
    %917 = vmatpush1.msra.mxu0 %v888
    %918 = vmatprep.subr.mxu0 0.0
    %919 = vmatpush1.msra.mxu0 %v889
    %920 = vmatprep.subr.mxu0 0.0
    %921 = vmatpush1.msra.mxu0 %v890
    %922 = vmatprep.subr.mxu0 0.0
    %923 = vmatpush1.msra.mxu0 %v891
    %924 = vmatprep.subr.mxu0 0.0
    %925 = vmatpush1.msra.mxu0 %v892
    %926 = vmatprep.subr.mxu0 0.0
    %927 = vmatpush1.msra.mxu0 %v893
    %928 = vmatprep.subr.mxu0 0.0
    %929 = vmatpush1.msra.mxu0 0.0
    %930 = vmatprep.subr.mxu0 0.0
    %931 = vmatpush1.msra.mxu0 0.0
    %932 = vmatprep.subr.mxu0 0.0
    %933 = vmatpush1.msra.mxu0 0.0
    %934 = vmatprep.subr.mxu0 0.0
    %935 = vmatpush1.msra.mxu0 0.0
    %936 = vmatprep.subr.mxu0 0.0
    %937 = vmatpush1.msra.mxu0 0.0
    %938 = vmatprep.subr.mxu0 0.0
    %939 = vmatpush1.msra.mxu0 0.0
    %940 = vmatprep.subr.mxu0 0.0
    %941 = vmatpush1.msra.mxu0 0.0
    %942 = vmatprep.subr.mxu0 0.0
    %943 = vmatpush1.msra.mxu0 0.0
    %944 = vmatprep.subr.mxu0 0.0
    %945 = vmatpush1.msra.mxu0 0.0
    %946 = vmatprep.subr.mxu0 0.0
    %947 = vmatpush1.msra.mxu0 0.0
    %948 = vmatprep.subr.mxu0 0.0
    %949 = vmatpush1.msra.mxu0 0.0
    %950 = vmatprep.subr.mxu0 0.0
    %951 = vmatpush1.msra.mxu0 0.0
    %952 = vmatprep.subr.mxu0 0.0
    %953 = vmatpush1.msra.mxu0 0.0
    %954 = vmatprep.subr.mxu0 0.0
    %955 = vmatpush1.msra.mxu0 0.0
    %956 = vmatprep.subr.mxu0 0.0
    %957 = vmatpush1.msra.mxu0 0.0
    %958 = vmatprep.subr.mxu0 0.0
    %959 = vmatpush1.msra.mxu0 0.0
    %960 = vmatprep.mubr.f32.mxu0 0.0
    %961 = vmatmul.mubr.f32.gmra.mrb[0].mxu0 %v875
    %v962 = vpop.f32.mrb[0].mxu0
    %v963 = vadd.f32 %v895, %v962
    %v964 = vpop.f32.mrb[0].mxu0
    %965 = vdwg.mxu0
    %v966 = vmax.f32 %v963, 0.0
    %s967 = scalar_lea.vmem [#allocation9], 72
    %968 = vst [vmem:[%s967] sm:$0xff] %v966
    %v969 = vld [vmem:[#allocation8] sm:$0xff]
    %v970 = vld [vmem:[#allocation8 + $0x8] sm:$0xff]
    %v971 = vld [vmem:[#allocation8 + $0x10] sm:$0xff]
    %v972 = vld [vmem:[#allocation8 + $0x18] sm:$0xff]
    %v973 = vld [vmem:[#allocation8 + $0x20] sm:$0xff]
    %v974 = vld [vmem:[#allocation8 + $0x28] sm:$0xff]
    %v975 = vld [vmem:[#allocation8 + $0x30] sm:$0xff]
    %v976 = vld [vmem:[#allocation8 + $0x38] sm:$0xff]
    %v977 = vld [vmem:[#allocation8 + $0x40] sm:$0xff]
    %v978 = vld [vmem:[#allocation8 + $0x48] sm:$0xff]
    %v979 = vld [vmem:[#allocation8 + $0x50] sm:$0xff]
    %v980 = vld [vmem:[#allocation8 + $0x58] sm:$0xff]
    %v981 = vld [vmem:[#allocation8 + $0x60] sm:$0xff]
    %v982 = vld [vmem:[#allocation8 + $0x68] sm:$0xff]
    %v983 = vld [vmem:[#allocation8 + $0x70] sm:$0xff]
    %v984 = vld [vmem:[#allocation8 + $0x78] sm:$0xff]
    %s985 = scalar_lea.vmem [#allocation6], 80
    %v986 = vld [vmem:[%s985] sm:$0xff]
    %987 = vmatprep.subr.mxu0 0.0
    %988 = vmatpush1.msra.mxu0 %v969
    %989 = vmatprep.subr.mxu0 0.0
    %990 = vmatpush1.msra.mxu0 %v970
    %991 = vmatprep.subr.mxu0 0.0
    %992 = vmatpush1.msra.mxu0 %v971
    %993 = vmatprep.subr.mxu0 0.0
    %994 = vmatpush1.msra.mxu0 %v972
    %995 = vmatprep.subr.mxu0 0.0
    %996 = vmatpush1.msra.mxu0 %v973
    %997 = vmatprep.subr.mxu0 0.0
    %998 = vmatpush1.msra.mxu0 %v974
    %999 = vmatprep.subr.mxu0 0.0
    %1000 = vmatpush1.msra.mxu0 %v975
    %1001 = vmatprep.subr.mxu0 0.0
    %1002 = vmatpush1.msra.mxu0 %v976
    %1003 = vmatprep.subr.mxu0 0.0
    %1004 = vmatpush1.msra.mxu0 %v977
    %1005 = vmatprep.subr.mxu0 0.0
    %1006 = vmatpush1.msra.mxu0 %v978
    %1007 = vmatprep.subr.mxu0 0.0
    %1008 = vmatpush1.msra.mxu0 %v979
    %1009 = vmatprep.subr.mxu0 0.0
    %1010 = vmatpush1.msra.mxu0 %v980
    %1011 = vmatprep.subr.mxu0 0.0
    %1012 = vmatpush1.msra.mxu0 %v981
    %1013 = vmatprep.subr.mxu0 0.0
    %1014 = vmatpush1.msra.mxu0 %v982
    %1015 = vmatprep.subr.mxu0 0.0
    %1016 = vmatpush1.msra.mxu0 %v983
    %1017 = vmatprep.subr.mxu0 0.0
    %1018 = vmatpush1.msra.mxu0 %v984
    %1019 = vmatprep.subr.mxu0 0.0
    %1020 = vmatpush1.msra.mxu0 0.0
    %1021 = vmatprep.subr.mxu0 0.0
    %1022 = vmatpush1.msra.mxu0 0.0
    %1023 = vmatprep.subr.mxu0 0.0
    %1024 = vmatpush1.msra.mxu0 0.0
    %1025 = vmatprep.subr.mxu0 0.0
    %1026 = vmatpush1.msra.mxu0 0.0
    %1027 = vmatprep.subr.mxu0 0.0
    %1028 = vmatpush1.msra.mxu0 0.0
    %1029 = vmatprep.subr.mxu0 0.0
    %1030 = vmatpush1.msra.mxu0 0.0
    %1031 = vmatprep.subr.mxu0 0.0
    %1032 = vmatpush1.msra.mxu0 0.0
    %1033 = vmatprep.subr.mxu0 0.0
    %1034 = vmatpush1.msra.mxu0 0.0
    %1035 = vmatprep.subr.mxu0 0.0
    %1036 = vmatpush1.msra.mxu0 0.0
    %1037 = vmatprep.subr.mxu0 0.0
    %1038 = vmatpush1.msra.mxu0 0.0
    %1039 = vmatprep.subr.mxu0 0.0
    %1040 = vmatpush1.msra.mxu0 0.0
    %1041 = vmatprep.subr.mxu0 0.0
    %1042 = vmatpush1.msra.mxu0 0.0
    %1043 = vmatprep.subr.mxu0 0.0
    %1044 = vmatpush1.msra.mxu0 0.0
    %1045 = vmatprep.subr.mxu0 0.0
    %1046 = vmatpush1.msra.mxu0 0.0
    %1047 = vmatprep.subr.mxu0 0.0
    %1048 = vmatpush1.msra.mxu0 0.0
    %1049 = vmatprep.subr.mxu0 0.0
    %1050 = vmatpush1.msra.mxu0 0.0
    %1051 = vmatprep.mubr.f32.mxu0 0.0
    %1052 = vmatmul.mubr.f32.gmra.mrb[0].mxu0 %v966
    %v1053 = vpop.f32.mrb[0].mxu0
    %v1054 = vadd.f32 %v986, %v1053
    %v1055 = vpop.f32.mrb[0].mxu0
    %1056 = vdwg.mxu0
    %v1057 = vmax.f32 %v1054, 0.0
    %s1058 = scalar_lea.vmem [#allocation9], 80
    %1059 = vst [vmem:[%s1058] sm:$0xff] %v1057
    %v1060 = vld [vmem:[#allocation8] sm:$0xff]
    %v1061 = vld [vmem:[#allocation8 + $0x8] sm:$0xff]
    %v1062 = vld [vmem:[#allocation8 + $0x10] sm:$0xff]
    %v1063 = vld [vmem:[#allocation8 + $0x18] sm:$0xff]
    %v1064 = vld [vmem:[#allocation8 + $0x20] sm:$0xff]
    %v1065 = vld [vmem:[#allocation8 + $0x28] sm:$0xff]
    %v1066 = vld [vmem:[#allocation8 + $0x30] sm:$0xff]
    %v1067 = vld [vmem:[#allocation8 + $0x38] sm:$0xff]
    %v1068 = vld [vmem:[#allocation8 + $0x40] sm:$0xff]
    %v1069 = vld [vmem:[#allocation8 + $0x48] sm:$0xff]
    %v1070 = vld [vmem:[#allocation8 + $0x50] sm:$0xff]
    %v1071 = vld [vmem:[#allocation8 + $0x58] sm:$0xff]
    %v1072 = vld [vmem:[#allocation8 + $0x60] sm:$0xff]
    %v1073 = vld [vmem:[#allocation8 + $0x68] sm:$0xff]
    %v1074 = vld [vmem:[#allocation8 + $0x70] sm:$0xff]
    %v1075 = vld [vmem:[#allocation8 + $0x78] sm:$0xff]
    %s1076 = scalar_lea.vmem [#allocation6], 88
    %v1077 = vld [vmem:[%s1076] sm:$0xff]
    %1078 = vmatprep.subr.mxu0 0.0
    %1079 = vmatpush1.msra.mxu0 %v1060
    %1080 = vmatprep.subr.mxu0 0.0
    %1081 = vmatpush1.msra.mxu0 %v1061
    %1082 = vmatprep.subr.mxu0 0.0
    %1083 = vmatpush1.msra.mxu0 %v1062
    %1084 = vmatprep.subr.mxu0 0.0
    %1085 = vmatpush1.msra.mxu0 %v1063
    %1086 = vmatprep.subr.mxu0 0.0
    %1087 = vmatpush1.msra.mxu0 %v1064
    %1088 = vmatprep.subr.mxu0 0.0
    %1089 = vmatpush1.msra.mxu0 %v1065
    %1090 = vmatprep.subr.mxu0 0.0
    %1091 = vmatpush1.msra.mxu0 %v1066
    %1092 = vmatprep.subr.mxu0 0.0
    %1093 = vmatpush1.msra.mxu0 %v1067
    %1094 = vmatprep.subr.mxu0 0.0
    %1095 = vmatpush1.msra.mxu0 %v1068
    %1096 = vmatprep.subr.mxu0 0.0
    %1097 = vmatpush1.msra.mxu0 %v1069
    %1098 = vmatprep.subr.mxu0 0.0
    %1099 = vmatpush1.msra.mxu0 %v1070
    %1100 = vmatprep.subr.mxu0 0.0
    %1101 = vmatpush1.msra.mxu0 %v1071
    %1102 = vmatprep.subr.mxu0 0.0
    %1103 = vmatpush1.msra.mxu0 %v1072
    %1104 = vmatprep.subr.mxu0 0.0
    %1105 = vmatpush1.msra.mxu0 %v1073
    %1106 = vmatprep.subr.mxu0 0.0
    %1107 = vmatpush1.msra.mxu0 %v1074
    %1108 = vmatprep.subr.mxu0 0.0
    %1109 = vmatpush1.msra.mxu0 %v1075
    %1110 = vmatprep.subr.mxu0 0.0
    %1111 = vmatpush1.msra.mxu0 0.0
    %1112 = vmatprep.subr.mxu0 0.0
    %1113 = vmatpush1.msra.mxu0 0.0
    %1114 = vmatprep.subr.mxu0 0.0
    %1115 = vmatpush1.msra.mxu0 0.0
    %1116 = vmatprep.subr.mxu0 0.0
    %1117 = vmatpush1.msra.mxu0 0.0
    %1118 = vmatprep.subr.mxu0 0.0
    %1119 = vmatpush1.msra.mxu0 0.0
    %1120 = vmatprep.subr.mxu0 0.0
    %1121 = vmatpush1.msra.mxu0 0.0
    %1122 = vmatprep.subr.mxu0 0.0
    %1123 = vmatpush1.msra.mxu0 0.0
    %1124 = vmatprep.subr.mxu0 0.0
    %1125 = vmatpush1.msra.mxu0 0.0
    %1126 = vmatprep.subr.mxu0 0.0
    %1127 = vmatpush1.msra.mxu0 0.0
    %1128 = vmatprep.subr.mxu0 0.0
    %1129 = vmatpush1.msra.mxu0 0.0
    %1130 = vmatprep.subr.mxu0 0.0
    %1131 = vmatpush1.msra.mxu0 0.0
    %1132 = vmatprep.subr.mxu0 0.0
    %1133 = vmatpush1.msra.mxu0 0.0
    %1134 = vmatprep.subr.mxu0 0.0
    %1135 = vmatpush1.msra.mxu0 0.0
    %1136 = vmatprep.subr.mxu0 0.0
    %1137 = vmatpush1.msra.mxu0 0.0
    %1138 = vmatprep.subr.mxu0 0.0
    %1139 = vmatpush1.msra.mxu0 0.0
    %1140 = vmatprep.subr.mxu0 0.0
    %1141 = vmatpush1.msra.mxu0 0.0
    %1142 = vmatprep.mubr.f32.mxu0 0.0
    %1143 = vmatmul.mubr.f32.gmra.mrb[0].mxu0 %v1057
    %v1144 = vpop.f32.mrb[0].mxu0
    %v1145 = vadd.f32 %v1077, %v1144
    %v1146 = vpop.f32.mrb[0].mxu0
    %1147 = vdwg.mxu0
    %v1148 = vmax.f32 %v1145, 0.0
    %s1149 = scalar_lea.vmem [#allocation9], 88
    %1150 = vst [vmem:[%s1149] sm:$0xff] %v1148
    %1151 = vst [vmem:[#allocation2] sm:$0xff] %v1148
    // Predicated region
    $region30: #{irnn_forward.3} parent=1 // pred_check
      _
    $region31: #{irnn_forward.3} parent=1 // pred_check_branch
      %1153 = sbr.rel (0) target = $region33
    $region32: #{irnn_forward.3} parent=1 // pred_region
      %s1155 = ssub.s32 1536, 1536
      %1156 = vsyncadd [#allocation5], %s1155
      %s1157 = sshll.u32 [#allocation9], 4
      %s1158 = int_to_ptr.vmem [resolvable:$true] %s1157
      %1163 = dma.vmem_to_hbm [thread:$0]  %s1158, 1536, %s3, [#allocation5], 128, 128, 8
    $region33: #{irnn_forward.3} parent=1 // pred_fallthru
      _
    // Predicated region
    $region34: #{irnn_forward.3} parent=1 // pred_check
      _
    $region35: #{irnn_forward.3} parent=1 // pred_check_branch
      %1165 = sbr.rel (0) target = $region37
    $region36: #{irnn_forward.3} parent=1 // pred_region
      %1166 = dma.done [#allocation5], 1536
    $region37: #{irnn_forward.3} parent=1 // pred_fallthru
      _
    %1167 = vsyncpa [#allocation4], 1
    %1168 = vsyncpa [#allocation7], 1
    %1169 = vsyncpa [#allocation5], 1

</llo_original>
